<compile_context>
chip_gen: v7x
topology: tpu7x:2x2x1
jax: 0.10.0
libtpu: 0.0.40
codegen_flags: <defaults>
</compile_context>

<pallas_src>
import functools

import jax
import jax.numpy as jnp
from jax import lax
from jax.experimental import pallas as pl
from jax.experimental.pallas import tpu as pltpu

K = 7            # kernel_size
PAD = 3          # padding for kernel_size 7


def _spatial_attention_kernel(C, H, W, w_ref, x_ref, o_ref,
                              sum_s, max_s, pad_s, shift_s):
    # w_ref   : SMEM (2*K*K,) f32       conv1 weights, [in_ch, kh, kw] flattened
    # x_ref   : VMEM (1, tc, H*W) f32   lane-dense channel slab (one n, one c-tile)
    # o_ref   : VMEM (1, 1, H, W) f32   attention map for this batch element
    # sum_s   : VMEM (1, H*W) f32       running channel sum
    # max_s   : VMEM (1, H*W) f32       running channel max
    # pad_s   : VMEM (2, H+6, W+6) f32  zero-padded avg / max maps
    # shift_s : VMEM (2, K, H+6, W) f32 dw-shifted copies of the padded maps
    ct = pl.program_id(1)
    n_ct = pl.num_programs(1)

    # ---------------- running channel reduction (lane-dense) ----------------
    @pl.when(ct == 0)
    def _():
        sum_s[...] = jnp.zeros(sum_s.shape, sum_s.dtype)
        max_s[...] = jnp.full(max_s.shape, -jnp.inf, max_s.dtype)

    x = x_ref[0]                                                  # (tc, H*W)
    sum_s[...] += jnp.sum(x, axis=0, keepdims=True)
    max_s[...] = jnp.maximum(max_s[...], jnp.max(x, axis=0, keepdims=True))

    # ------------- finalize: 7x7 conv over [avg, max] + sigmoid -------------
    @pl.when(ct == n_ct - 1)
    def _():
        avg = sum_s[...] * (1.0 / C)                              # (1, H*W)
        mx = max_s[...]                                           # (1, H*W)

        # Zero-pad the two reduced maps into 2-D VMEM scratch. Equivalent to
        # the reference conv's zero padding (bias-free conv only).
        pad_s[...] = jnp.zeros(pad_s.shape, pad_s.dtype)
        for h in range(H):
            pad_s[0, PAD + h:PAD + h + 1, PAD:PAD + W] = avg[:, h * W:(h + 1) * W]
            pad_s[1, PAD + h:PAD + h + 1, PAD:PAD + W] = mx[:, h * W:(h + 1) * W]

        # Hoist the dw lane-shifts out of the tap loop: 2*K shifted copies
        # instead of 2*K*K unaligned slices.
        for m in range(2):
            for dw in range(K):
                shift_s[m, dw] = pad_s[m, :, dw:dw + W]           # (H+6, W)

        # 98-tap FMA loop: taps are now lane-aligned, sublane-offset loads.
        # Four independent accumulators recover ILP on the VPU.
        accs = [jnp.zeros((H, W), jnp.float32) for _ in range(4)]
        t = 0
        for m in range(2):
            for dw in range(K):
                for dh in range(K):
                    wgt = w_ref[m * K * K + dh * K + dw]          # SMEM scalar
                    tap = shift_s[m, dw, dh:dh + H, :]            # (H, W)
                    accs[t % 4] = accs[t % 4] + wgt * tap
                    t += 1
        acc = (accs[0] + accs[1]) + (accs[2] + accs[3])

        o_ref[0, 0] = jax.nn.sigmoid(acc)


def _pick_channel_block(C, max_tc=512):
    """Largest channel tile <= max_tc that divides C and keeps the block's
    second-to-last dim legal (multiple of 8, or the full C)."""
    if C <= max_tc:
        return C
    for tc in range(max_tc, 7, -1):
        if C % tc == 0 and tc % 8 == 0:
            return tc
    return C


def spatial_attention(x, conv_weight):
    """x: (N, C, H, W) f32; conv_weight: (1, 2, K, K) f32 -> (N, 1, H, W) f32."""
    N, C, H, W = x.shape
    HW = H * W
    Hp, Wp = H + 2 * PAD, W + 2 * PAD

    # Metadata-only reshape (contiguous NCHW -> (N, C, H*W)): no HBM copy.
    x_flat = x.reshape(N, C, HW).astype(jnp.float32)
    w_flat = conv_weight.reshape(-1).astype(jnp.float32)          # (2*K*K,)

    tc = _pick_channel_block(C)
    n_ct = C // tc

    kernel = functools.partial(_spatial_attention_kernel, C, H, W)

    return pl.pallas_call(
        kernel,
        out_shape=jax.ShapeDtypeStruct((N, 1, H, W), jnp.float32),
        grid_spec=pltpu.PrefetchScalarGridSpec(
            num_scalar_prefetch=0,
            grid=(N, n_ct),
            in_specs=[
                pl.BlockSpec(memory_space=pltpu.MemorySpace.SMEM),  # weights
                pl.BlockSpec((1, tc, HW), lambda n, c: (n, c, 0)),  # x slab
            ],
            out_specs=pl.BlockSpec((1, 1, H, W), lambda n, c: (n, 0, 0, 0)),
            scratch_shapes=[
                pltpu.VMEM((1, HW), jnp.float32),         # running sum
                pltpu.VMEM((1, HW), jnp.float32),         # running max
                pltpu.VMEM((2, Hp, Wp), jnp.float32),     # padded avg/max maps
                pltpu.VMEM((2, K, Hp, W), jnp.float32),   # dw-shifted maps
            ],
        ),
        compiler_params=pltpu.CompilerParams(
            dimension_semantics=("parallel", "arbitrary"),
            vmem_limit_bytes=64 * 1024 * 1024,
        ),
    )(w_flat, x_flat)


def _reference(x, conv_weight):
    avg = jnp.mean(x, axis=1, keepdims=True)
    mx = jnp.max(x, axis=1, keepdims=True)
    cat = jnp.concatenate([avg, mx], axis=1)
    y = lax.conv_general_dilated(
        cat, conv_weight,
        window_strides=(1, 1),
        padding=((PAD, PAD), (PAD, PAD)),
        dimension_numbers=("NCHW", "OIHW", "NCHW"),
    )
    return jax.nn.sigmoid(y)


if __name__ == "__main__":
    key = jax.random.PRNGKey(0)
    kx, kw = jax.random.split(key)

    N, C, H, W = 2, 4, 16, 16
    x = jax.random.normal(kx, (N, C, H, W), dtype=jnp.float32)

    # Deterministic Conv2d(2, 1, 7, bias=False) init (Kaiming-uniform style):
    fan_in = 2 * K * K
    bound = 1.0 / (fan_in ** 0.5)
    conv_weight = jax.random.uniform(
        kw, (1, 2, K, K), dtype=jnp.float32, minval=-bound, maxval=bound)

    out = jax.block_until_ready(spatial_attention(x, conv_weight))
    ref = jax.block_until_ready(_reference(x, conv_weight))

    assert out.shape == (N, 1, H, W)
    assert jnp.allclose(out, ref, atol=1e-5, rtol=1e-5), "mismatch vs reference"

    print("KERNEL_OK")
</pallas_src>

<mosaic_0001>
module attributes {stable_mosaic.version = 11 : i64} {
  func.func @_spatial_attention_kernel(%arg0: i32, %arg1: i32, %arg2: memref<98xf32, #tpu.memory_space<smem>>, %arg3: memref<1x4x256xf32, #tpu.memory_space<vmem>>, %arg4: memref<1x1x16x16xf32, #tpu.memory_space<vmem>>, %arg5: memref<1x256xf32, #tpu.memory_space<vmem>>, %arg6: memref<1x256xf32, #tpu.memory_space<vmem>>, %arg7: memref<2x22x22xf32, #tpu.memory_space<vmem>>, %arg8: memref<2x7x22x16xf32, #tpu.memory_space<vmem>>) attributes {dimension_semantics = [#tpu.dimension_semantics<parallel>, #tpu.dimension_semantics<arbitrary>], iteration_bounds = array<i64: 2, 1>, scalar_prefetch = 0 : i64, scratch_operands = 4 : i64, tpu.core_type = #tpu.core_type<tc>, window_params = [{transform_indices = @transform_0, window_bounds = array<i64: 98>}, {transform_indices = @transform_1, window_bounds = array<i64: 1, 4, 256>}, {transform_indices = @transform_2, window_bounds = array<i64: 1, 1, 16, 16>}]} {
    %c0_i32 = arith.constant 0 : i32
    %0 = arith.cmpi eq, %arg1, %c0_i32 : i32
    %1 = arith.extui %0 : i1 to i32
    %c0_i32_0 = arith.constant 0 : i32
    %2 = arith.cmpi ne, %1, %c0_i32_0 : i32
    scf.if %2 {
      %cst_14 = arith.constant 0.000000e+00 : f32
      %18 = vector.broadcast %cst_14 : f32 to vector<1x256xf32>
      %c0_15 = arith.constant 0 : index
      %c0_16 = arith.constant 0 : index
      %19 = vector.load %arg5[%c0_15, %c0_16] : memref<1x256xf32, #tpu.memory_space<vmem>>, vector<1x256xf32>
      tpu.vector_store %arg5[%c0_15, %c0_16], %18 {strides = array<i32>} : memref<1x256xf32, #tpu.memory_space<vmem>>, vector<1x256xf32>,
      %cst_17 = arith.constant 0xFF800000 : f32
      %20 = vector.broadcast %cst_17 : f32 to vector<1x256xf32>
      %c0_18 = arith.constant 0 : index
      %c0_19 = arith.constant 0 : index
      %21 = vector.load %arg6[%c0_18, %c0_19] : memref<1x256xf32, #tpu.memory_space<vmem>>, vector<1x256xf32>
      tpu.vector_store %arg6[%c0_18, %c0_19], %20 {strides = array<i32>} : memref<1x256xf32, #tpu.memory_space<vmem>>, vector<1x256xf32>,
    } else {
    }
    %c0 = arith.constant 0 : index
    %c0_1 = arith.constant 0 : index
    %c0_2 = arith.constant 0 : index
    %3 = vector.load %arg3[%c0, %c0_1, %c0_2] : memref<1x4x256xf32, #tpu.memory_space<vmem>>, vector<1x4x256xf32>
    %4 = vector.shape_cast %3 : vector<1x4x256xf32> to vector<4x256xf32>
    %c0_3 = arith.constant 0 : index
    %c0_4 = arith.constant 0 : index
    %5 = vector.load %arg5[%c0_3, %c0_4] : memref<1x256xf32, #tpu.memory_space<vmem>>, vector<1x256xf32>
    %cst = arith.constant dense<0.000000e+00> : vector<256xf32>
    %6 = vector.multi_reduction <add>, %4, %cst [0] : vector<4x256xf32> to vector<256xf32>
    %7 = vector.shape_cast %6 : vector<256xf32> to vector<1x256xf32>
    %8 = arith.addf %5, %7 : vector<1x256xf32>
    %c0_5 = arith.constant 0 : index
    %c0_6 = arith.constant 0 : index
    %9 = vector.load %arg5[%c0_5, %c0_6] : memref<1x256xf32, #tpu.memory_space<vmem>>, vector<1x256xf32>
    tpu.vector_store %arg5[%c0_5, %c0_6], %8 {strides = array<i32>} : memref<1x256xf32, #tpu.memory_space<vmem>>, vector<1x256xf32>,
    %c0_7 = arith.constant 0 : index
    %c0_8 = arith.constant 0 : index
    %10 = vector.load %arg6[%c0_7, %c0_8] : memref<1x256xf32, #tpu.memory_space<vmem>>, vector<1x256xf32>
    %cst_9 = arith.constant dense<0xFF800000> : vector<256xf32>
    %11 = vector.multi_reduction <maximumf>, %4, %cst_9 [0] : vector<4x256xf32> to vector<256xf32>
    %12 = vector.shape_cast %11 : vector<256xf32> to vector<1x256xf32>
    %13 = arith.maximumf %10, %12 : vector<1x256xf32>
    %c0_10 = arith.constant 0 : index
    %c0_11 = arith.constant 0 : index
    %14 = vector.load %arg6[%c0_10, %c0_11] : memref<1x256xf32, #tpu.memory_space<vmem>>, vector<1x256xf32>
    tpu.vector_store %arg6[%c0_10, %c0_11], %13 {strides = array<i32>} : memref<1x256xf32, #tpu.memory_space<vmem>>, vector<1x256xf32>,
    %c0_i32_12 = arith.constant 0 : i32
    %15 = arith.cmpi eq, %arg1, %c0_i32_12 : i32
    %16 = arith.extui %15 : i1 to i32
    %c0_i32_13 = arith.constant 0 : i32
    %17 = arith.cmpi ne, %16, %c0_i32_13 : i32
    scf.if %17 {
      %c0_14 = arith.constant 0 : index
      %c0_15 = arith.constant 0 : index
      %18 = vector.load %arg5[%c0_14, %c0_15] : memref<1x256xf32, #tpu.memory_space<vmem>>, vector<1x256xf32>
      %cst_16 = arith.constant 2.500000e-01 : f32
      %19 = vector.broadcast %cst_16 : f32 to vector<1x256xf32>
      %20 = arith.mulf %18, %19 : vector<1x256xf32>
      %c0_17 = arith.constant 0 : index
      %c0_18 = arith.constant 0 : index
      %21 = vector.load %arg6[%c0_17, %c0_18] : memref<1x256xf32, #tpu.memory_space<vmem>>, vector<1x256xf32>
      %cst_19 = arith.constant 0.000000e+00 : f32
      %22 = vector.broadcast %cst_19 : f32 to vector<2x22x22xf32>
      %c0_20 = arith.constant 0 : index
      %c0_21 = arith.constant 0 : index
      %c0_22 = arith.constant 0 : index
      %23 = vector.load %arg7[%c0_20, %c0_21, %c0_22] : memref<2x22x22xf32, #tpu.memory_space<vmem>>, vector<2x22x22xf32>
      tpu.vector_store %arg7[%c0_20, %c0_21, %c0_22], %22 {strides = array<i32>} : memref<2x22x22xf32, #tpu.memory_space<vmem>>, vector<2x22x22xf32>,
      %24 = vector.extract_strided_slice %20 {offsets = [0, 0], sizes = [1, 16], strides = [1, 1]} : vector<1x256xf32> to vector<1x16xf32>
      %c0_23 = arith.constant 0 : index
      %c3 = arith.constant 3 : index
      %c3_24 = arith.constant 3 : index
      %25 = vector.load %arg7[%c0_23, %c3, %c3_24] : memref<2x22x22xf32, #tpu.memory_space<vmem>>, vector<1x1x16xf32>
      %26 = vector.shape_cast %25 : vector<1x1x16xf32> to vector<1x16xf32>
      %27 = vector.shape_cast %24 : vector<1x16xf32> to vector<1x1x16xf32>
      tpu.vector_store %arg7[%c0_23, %c3, %c3_24], %27 {strides = array<i32>} : memref<2x22x22xf32, #tpu.memory_space<vmem>>, vector<1x1x16xf32>,
      %28 = vector.extract_strided_slice %21 {offsets = [0, 0], sizes = [1, 16], strides = [1, 1]} : vector<1x256xf32> to vector<1x16xf32>
      %c1 = arith.constant 1 : index
      %c3_25 = arith.constant 3 : index
      %c3_26 = arith.constant 3 : index
      %29 = vector.load %arg7[%c1, %c3_25, %c3_26] : memref<2x22x22xf32, #tpu.memory_space<vmem>>, vector<1x1x16xf32>
      %30 = vector.shape_cast %29 : vector<1x1x16xf32> to vector<1x16xf32>
      %31 = vector.shape_cast %28 : vector<1x16xf32> to vector<1x1x16xf32>
      tpu.vector_store %arg7[%c1, %c3_25, %c3_26], %31 {strides = array<i32>} : memref<2x22x22xf32, #tpu.memory_space<vmem>>, vector<1x1x16xf32>,
      %32 = vector.extract_strided_slice %20 {offsets = [0, 16], sizes = [1, 16], strides = [1, 1]} : vector<1x256xf32> to vector<1x16xf32>
      %c0_27 = arith.constant 0 : index
      %c4 = arith.constant 4 : index
      %c3_28 = arith.constant 3 : index
      %33 = vector.load %arg7[%c0_27, %c4, %c3_28] : memref<2x22x22xf32, #tpu.memory_space<vmem>>, vector<1x1x16xf32>
      %34 = vector.shape_cast %33 : vector<1x1x16xf32> to vector<1x16xf32>
      %35 = vector.shape_cast %32 : vector<1x16xf32> to vector<1x1x16xf32>
      tpu.vector_store %arg7[%c0_27, %c4, %c3_28], %35 {strides = array<i32>} : memref<2x22x22xf32, #tpu.memory_space<vmem>>, vector<1x1x16xf32>,
      %36 = vector.extract_strided_slice %21 {offsets = [0, 16], sizes = [1, 16], strides = [1, 1]} : vector<1x256xf32> to vector<1x16xf32>
      %c1_29 = arith.constant 1 : index
      %c4_30 = arith.constant 4 : index
      %c3_31 = arith.constant 3 : index
      %37 = vector.load %arg7[%c1_29, %c4_30, %c3_31] : memref<2x22x22xf32, #tpu.memory_space<vmem>>, vector<1x1x16xf32>
      %38 = vector.shape_cast %37 : vector<1x1x16xf32> to vector<1x16xf32>
      %39 = vector.shape_cast %36 : vector<1x16xf32> to vector<1x1x16xf32>
      tpu.vector_store %arg7[%c1_29, %c4_30, %c3_31], %39 {strides = array<i32>} : memref<2x22x22xf32, #tpu.memory_space<vmem>>, vector<1x1x16xf32>,
      %40 = vector.extract_strided_slice %20 {offsets = [0, 32], sizes = [1, 16], strides = [1, 1]} : vector<1x256xf32> to vector<1x16xf32>
      %c0_32 = arith.constant 0 : index
      %c5 = arith.constant 5 : index
      %c3_33 = arith.constant 3 : index
      %41 = vector.load %arg7[%c0_32, %c5, %c3_33] : memref<2x22x22xf32, #tpu.memory_space<vmem>>, vector<1x1x16xf32>
      %42 = vector.shape_cast %41 : vector<1x1x16xf32> to vector<1x16xf32>
      %43 = vector.shape_cast %40 : vector<1x16xf32> to vector<1x1x16xf32>
      tpu.vector_store %arg7[%c0_32, %c5, %c3_33], %43 {strides = array<i32>} : memref<2x22x22xf32, #tpu.memory_space<vmem>>, vector<1x1x16xf32>,
      %44 = vector.extract_strided_slice %21 {offsets = [0, 32], sizes = [1, 16], strides = [1, 1]} : vector<1x256xf32> to vector<1x16xf32>
      %c1_34 = arith.constant 1 : index
      %c5_35 = arith.constant 5 : index
      %c3_36 = arith.constant 3 : index
      %45 = vector.load %arg7[%c1_34, %c5_35, %c3_36] : memref<2x22x22xf32, #tpu.memory_space<vmem>>, vector<1x1x16xf32>
      %46 = vector.shape_cast %45 : vector<1x1x16xf32> to vector<1x16xf32>
      %47 = vector.shape_cast %44 : vector<1x16xf32> to vector<1x1x16xf32>
      tpu.vector_store %arg7[%c1_34, %c5_35, %c3_36], %47 {strides = array<i32>} : memref<2x22x22xf32, #tpu.memory_space<vmem>>, vector<1x1x16xf32>,
      %48 = vector.extract_strided_slice %20 {offsets = [0, 48], sizes = [1, 16], strides = [1, 1]} : vector<1x256xf32> to vector<1x16xf32>
      %c0_37 = arith.constant 0 : index
      %c6 = arith.constant 6 : index
      %c3_38 = arith.constant 3 : index
      %49 = vector.load %arg7[%c0_37, %c6, %c3_38] : memref<2x22x22xf32, #tpu.memory_space<vmem>>, vector<1x1x16xf32>
      %50 = vector.shape_cast %49 : vector<1x1x16xf32> to vector<1x16xf32>
      %51 = vector.shape_cast %48 : vector<1x16xf32> to vector<1x1x16xf32>
      tpu.vector_store %arg7[%c0_37, %c6, %c3_38], %51 {strides = array<i32>} : memref<2x22x22xf32, #tpu.memory_space<vmem>>, vector<1x1x16xf32>,
      %52 = vector.extract_strided_slice %21 {offsets = [0, 48], sizes = [1, 16], strides = [1, 1]} : vector<1x256xf32> to vector<1x16xf32>
      %c1_39 = arith.constant 1 : index
      %c6_40 = arith.constant 6 : index
      %c3_41 = arith.constant 3 : index
      %53 = vector.load %arg7[%c1_39, %c6_40, %c3_41] : memref<2x22x22xf32, #tpu.memory_space<vmem>>, vector<1x1x16xf32>
      %54 = vector.shape_cast %53 : vector<1x1x16xf32> to vector<1x16xf32>
      %55 = vector.shape_cast %52 : vector<1x16xf32> to vector<1x1x16xf32>
      tpu.vector_store %arg7[%c1_39, %c6_40, %c3_41], %55 {strides = array<i32>} : memref<2x22x22xf32, #tpu.memory_space<vmem>>, vector<1x1x16xf32>,
      %56 = vector.extract_strided_slice %20 {offsets = [0, 64], sizes = [1, 16], strides = [1, 1]} : vector<1x256xf32> to vector<1x16xf32>
      %c0_42 = arith.constant 0 : index
      %c7 = arith.constant 7 : index
      %c3_43 = arith.constant 3 : index
      %57 = vector.load %arg7[%c0_42, %c7, %c3_43] : memref<2x22x22xf32, #tpu.memory_space<vmem>>, vector<1x1x16xf32>
      %58 = vector.shape_cast %57 : vector<1x1x16xf32> to vector<1x16xf32>
      %59 = vector.shape_cast %56 : vector<1x16xf32> to vector<1x1x16xf32>
      tpu.vector_store %arg7[%c0_42, %c7, %c3_43], %59 {strides = array<i32>} : memref<2x22x22xf32, #tpu.memory_space<vmem>>, vector<1x1x16xf32>,
      %60 = vector.extract_strided_slice %21 {offsets = [0, 64], sizes = [1, 16], strides = [1, 1]} : vector<1x256xf32> to vector<1x16xf32>
      %c1_44 = arith.constant 1 : index
      %c7_45 = arith.constant 7 : index
      %c3_46 = arith.constant 3 : index
      %61 = vector.load %arg7[%c1_44, %c7_45, %c3_46] : memref<2x22x22xf32, #tpu.memory_space<vmem>>, vector<1x1x16xf32>
      %62 = vector.shape_cast %61 : vector<1x1x16xf32> to vector<1x16xf32>
      %63 = vector.shape_cast %60 : vector<1x16xf32> to vector<1x1x16xf32>
      tpu.vector_store %arg7[%c1_44, %c7_45, %c3_46], %63 {strides = array<i32>} : memref<2x22x22xf32, #tpu.memory_space<vmem>>, vector<1x1x16xf32>,
      %64 = vector.extract_strided_slice %20 {offsets = [0, 80], sizes = [1, 16], strides = [1, 1]} : vector<1x256xf32> to vector<1x16xf32>
      %c0_47 = arith.constant 0 : index
      %c8 = arith.constant 8 : index
      %c3_48 = arith.constant 3 : index
      %65 = vector.load %arg7[%c0_47, %c8, %c3_48] : memref<2x22x22xf32, #tpu.memory_space<vmem>>, vector<1x1x16xf32>
      %66 = vector.shape_cast %65 : vector<1x1x16xf32> to vector<1x16xf32>
      %67 = vector.shape_cast %64 : vector<1x16xf32> to vector<1x1x16xf32>
      tpu.vector_store %arg7[%c0_47, %c8, %c3_48], %67 {strides = array<i32>} : memref<2x22x22xf32, #tpu.memory_space<vmem>>, vector<1x1x16xf32>,
      %68 = vector.extract_strided_slice %21 {offsets = [0, 80], sizes = [1, 16], strides = [1, 1]} : vector<1x256xf32> to vector<1x16xf32>
      %c1_49 = arith.constant 1 : index
      %c8_50 = arith.constant 8 : index
      %c3_51 = arith.constant 3 : index
      %69 = vector.load %arg7[%c1_49, %c8_50, %c3_51] : memref<2x22x22xf32, #tpu.memory_space<vmem>>, vector<1x1x16xf32>
      %70 = vector.shape_cast %69 : vector<1x1x16xf32> to vector<1x16xf32>
      %71 = vector.shape_cast %68 : vector<1x16xf32> to vector<1x1x16xf32>
      tpu.vector_store %arg7[%c1_49, %c8_50, %c3_51], %71 {strides = array<i32>} : memref<2x22x22xf32, #tpu.memory_space<vmem>>, vector<1x1x16xf32>,
      %72 = vector.extract_strided_slice %20 {offsets = [0, 96], sizes = [1, 16], strides = [1, 1]} : vector<1x256xf32> to vector<1x16xf32>
      %c0_52 = arith.constant 0 : index
      %c9 = arith.constant 9 : index
      %c3_53 = arith.constant 3 : index
      %73 = vector.load %arg7[%c0_52, %c9, %c3_53] : memref<2x22x22xf32, #tpu.memory_space<vmem>>, vector<1x1x16xf32>
      %74 = vector.shape_cast %73 : vector<1x1x16xf32> to vector<1x16xf32>
      %75 = vector.shape_cast %72 : vector<1x16xf32> to vector<1x1x16xf32>
      tpu.vector_store %arg7[%c0_52, %c9, %c3_53], %75 {strides = array<i32>} : memref<2x22x22xf32, #tpu.memory_space<vmem>>, vector<1x1x16xf32>,
      %76 = vector.extract_strided_slice %21 {offsets = [0, 96], sizes = [1, 16], strides = [1, 1]} : vector<1x256xf32> to vector<1x16xf32>
      %c1_54 = arith.constant 1 : index
      %c9_55 = arith.constant 9 : index
      %c3_56 = arith.constant 3 : index
      %77 = vector.load %arg7[%c1_54, %c9_55, %c3_56] : memref<2x22x22xf32, #tpu.memory_space<vmem>>, vector<1x1x16xf32>
      %78 = vector.shape_cast %77 : vector<1x1x16xf32> to vector<1x16xf32>
      %79 = vector.shape_cast %76 : vector<1x16xf32> to vector<1x1x16xf32>
      tpu.vector_store %arg7[%c1_54, %c9_55, %c3_56], %79 {strides = array<i32>} : memref<2x22x22xf32, #tpu.memory_space<vmem>>, vector<1x1x16xf32>,
      %80 = vector.extract_strided_slice %20 {offsets = [0, 112], sizes = [1, 16], strides = [1, 1]} : vector<1x256xf32> to vector<1x16xf32>
      %c0_57 = arith.constant 0 : index
      %c10 = arith.constant 10 : index
      %c3_58 = arith.constant 3 : index
      %81 = vector.load %arg7[%c0_57, %c10, %c3_58] : memref<2x22x22xf32, #tpu.memory_space<vmem>>, vector<1x1x16xf32>
      %82 = vector.shape_cast %81 : vector<1x1x16xf32> to vector<1x16xf32>
      %83 = vector.shape_cast %80 : vector<1x16xf32> to vector<1x1x16xf32>
      tpu.vector_store %arg7[%c0_57, %c10, %c3_58], %83 {strides = array<i32>} : memref<2x22x22xf32, #tpu.memory_space<vmem>>, vector<1x1x16xf32>,
      %84 = vector.extract_strided_slice %21 {offsets = [0, 112], sizes = [1, 16], strides = [1, 1]} : vector<1x256xf32> to vector<1x16xf32>
      %c1_59 = arith.constant 1 : index
      %c10_60 = arith.constant 10 : index
      %c3_61 = arith.constant 3 : index
      %85 = vector.load %arg7[%c1_59, %c10_60, %c3_61] : memref<2x22x22xf32, #tpu.memory_space<vmem>>, vector<1x1x16xf32>
      %86 = vector.shape_cast %85 : vector<1x1x16xf32> to vector<1x16xf32>
      %87 = vector.shape_cast %84 : vector<1x16xf32> to vector<1x1x16xf32>
      tpu.vector_store %arg7[%c1_59, %c10_60, %c3_61], %87 {strides = array<i32>} : memref<2x22x22xf32, #tpu.memory_space<vmem>>, vector<1x1x16xf32>,
      %88 = vector.extract_strided_slice %20 {offsets = [0, 128], sizes = [1, 16], strides = [1, 1]} : vector<1x256xf32> to vector<1x16xf32>
      %c0_62 = arith.constant 0 : index
      %c11 = arith.constant 11 : index
      %c3_63 = arith.constant 3 : index
      %89 = vector.load %arg7[%c0_62, %c11, %c3_63] : memref<2x22x22xf32, #tpu.memory_space<vmem>>, vector<1x1x16xf32>
      %90 = vector.shape_cast %89 : vector<1x1x16xf32> to vector<1x16xf32>
      %91 = vector.shape_cast %88 : vector<1x16xf32> to vector<1x1x16xf32>
      tpu.vector_store %arg7[%c0_62, %c11, %c3_63], %91 {strides = array<i32>} : memref<2x22x22xf32, #tpu.memory_space<vmem>>, vector<1x1x16xf32>,
      %92 = vector.extract_strided_slice %21 {offsets = [0, 128], sizes = [1, 16], strides = [1, 1]} : vector<1x256xf32> to vector<1x16xf32>
      %c1_64 = arith.constant 1 : index
      %c11_65 = arith.constant 11 : index
      %c3_66 = arith.constant 3 : index
      %93 = vector.load %arg7[%c1_64, %c11_65, %c3_66] : memref<2x22x22xf32, #tpu.memory_space<vmem>>, vector<1x1x16xf32>
      %94 = vector.shape_cast %93 : vector<1x1x16xf32> to vector<1x16xf32>
      %95 = vector.shape_cast %92 : vector<1x16xf32> to vector<1x1x16xf32>
      tpu.vector_store %arg7[%c1_64, %c11_65, %c3_66], %95 {strides = array<i32>} : memref<2x22x22xf32, #tpu.memory_space<vmem>>, vector<1x1x16xf32>,
      %96 = vector.extract_strided_slice %20 {offsets = [0, 144], sizes = [1, 16], strides = [1, 1]} : vector<1x256xf32> to vector<1x16xf32>
      %c0_67 = arith.constant 0 : index
      %c12 = arith.constant 12 : index
      %c3_68 = arith.constant 3 : index
      %97 = vector.load %arg7[%c0_67, %c12, %c3_68] : memref<2x22x22xf32, #tpu.memory_space<vmem>>, vector<1x1x16xf32>
      %98 = vector.shape_cast %97 : vector<1x1x16xf32> to vector<1x16xf32>
      %99 = vector.shape_cast %96 : vector<1x16xf32> to vector<1x1x16xf32>
      tpu.vector_store %arg7[%c0_67, %c12, %c3_68], %99 {strides = array<i32>} : memref<2x22x22xf32, #tpu.memory_space<vmem>>, vector<1x1x16xf32>,
      %100 = vector.extract_strided_slice %21 {offsets = [0, 144], sizes = [1, 16], strides = [1, 1]} : vector<1x256xf32> to vector<1x16xf32>
      %c1_69 = arith.constant 1 : index
      %c12_70 = arith.constant 12 : index
      %c3_71 = arith.constant 3 : index
      %101 = vector.load %arg7[%c1_69, %c12_70, %c3_71] : memref<2x22x22xf32, #tpu.memory_space<vmem>>, vector<1x1x16xf32>
      %102 = vector.shape_cast %101 : vector<1x1x16xf32> to vector<1x16xf32>
      %103 = vector.shape_cast %100 : vector<1x16xf32> to vector<1x1x16xf32>
      tpu.vector_store %arg7[%c1_69, %c12_70, %c3_71], %103 {strides = array<i32>} : memref<2x22x22xf32, #tpu.memory_space<vmem>>, vector<1x1x16xf32>,
      %104 = vector.extract_strided_slice %20 {offsets = [0, 160], sizes = [1, 16], strides = [1, 1]} : vector<1x256xf32> to vector<1x16xf32>
      %c0_72 = arith.constant 0 : index
      %c13 = arith.constant 13 : index
      %c3_73 = arith.constant 3 : index
      %105 = vector.load %arg7[%c0_72, %c13, %c3_73] : memref<2x22x22xf32, #tpu.memory_space<vmem>>, vector<1x1x16xf32>
      %106 = vector.shape_cast %105 : vector<1x1x16xf32> to vector<1x16xf32>
      %107 = vector.shape_cast %104 : vector<1x16xf32> to vector<1x1x16xf32>
      tpu.vector_store %arg7[%c0_72, %c13, %c3_73], %107 {strides = array<i32>} : memref<2x22x22xf32, #tpu.memory_space<vmem>>, vector<1x1x16xf32>,
      %108 = vector.extract_strided_slice %21 {offsets = [0, 160], sizes = [1, 16], strides = [1, 1]} : vector<1x256xf32> to vector<1x16xf32>
      %c1_74 = arith.constant 1 : index
      %c13_75 = arith.constant 13 : index
      %c3_76 = arith.constant 3 : index
      %109 = vector.load %arg7[%c1_74, %c13_75, %c3_76] : memref<2x22x22xf32, #tpu.memory_space<vmem>>, vector<1x1x16xf32>
      %110 = vector.shape_cast %109 : vector<1x1x16xf32> to vector<1x16xf32>
      %111 = vector.shape_cast %108 : vector<1x16xf32> to vector<1x1x16xf32>
      tpu.vector_store %arg7[%c1_74, %c13_75, %c3_76], %111 {strides = array<i32>} : memref<2x22x22xf32, #tpu.memory_space<vmem>>, vector<1x1x16xf32>,
      %112 = vector.extract_strided_slice %20 {offsets = [0, 176], sizes = [1, 16], strides = [1, 1]} : vector<1x256xf32> to vector<1x16xf32>
      %c0_77 = arith.constant 0 : index
      %c14 = arith.constant 14 : index
      %c3_78 = arith.constant 3 : index
      %113 = vector.load %arg7[%c0_77, %c14, %c3_78] : memref<2x22x22xf32, #tpu.memory_space<vmem>>, vector<1x1x16xf32>
      %114 = vector.shape_cast %113 : vector<1x1x16xf32> to vector<1x16xf32>
      %115 = vector.shape_cast %112 : vector<1x16xf32> to vector<1x1x16xf32>
      tpu.vector_store %arg7[%c0_77, %c14, %c3_78], %115 {strides = array<i32>} : memref<2x22x22xf32, #tpu.memory_space<vmem>>, vector<1x1x16xf32>,
      %116 = vector.extract_strided_slice %21 {offsets = [0, 176], sizes = [1, 16], strides = [1, 1]} : vector<1x256xf32> to vector<1x16xf32>
      %c1_79 = arith.constant 1 : index
      %c14_80 = arith.constant 14 : index
      %c3_81 = arith.constant 3 : index
      %117 = vector.load %arg7[%c1_79, %c14_80, %c3_81] : memref<2x22x22xf32, #tpu.memory_space<vmem>>, vector<1x1x16xf32>
      %118 = vector.shape_cast %117 : vector<1x1x16xf32> to vector<1x16xf32>
      %119 = vector.shape_cast %116 : vector<1x16xf32> to vector<1x1x16xf32>
      tpu.vector_store %arg7[%c1_79, %c14_80, %c3_81], %119 {strides = array<i32>} : memref<2x22x22xf32, #tpu.memory_space<vmem>>, vector<1x1x16xf32>,
      %120 = vector.extract_strided_slice %20 {offsets = [0, 192], sizes = [1, 16], strides = [1, 1]} : vector<1x256xf32> to vector<1x16xf32>
      %c0_82 = arith.constant 0 : index
      %c15 = arith.constant 15 : index
      %c3_83 = arith.constant 3 : index
      %121 = vector.load %arg7[%c0_82, %c15, %c3_83] : memref<2x22x22xf32, #tpu.memory_space<vmem>>, vector<1x1x16xf32>
      %122 = vector.shape_cast %121 : vector<1x1x16xf32> to vector<1x16xf32>
      %123 = vector.shape_cast %120 : vector<1x16xf32> to vector<1x1x16xf32>
      tpu.vector_store %arg7[%c0_82, %c15, %c3_83], %123 {strides = array<i32>} : memref<2x22x22xf32, #tpu.memory_space<vmem>>, vector<1x1x16xf32>,
      %124 = vector.extract_strided_slice %21 {offsets = [0, 192], sizes = [1, 16], strides = [1, 1]} : vector<1x256xf32> to vector<1x16xf32>
      %c1_84 = arith.constant 1 : index
      %c15_85 = arith.constant 15 : index
      %c3_86 = arith.constant 3 : index
      %125 = vector.load %arg7[%c1_84, %c15_85, %c3_86] : memref<2x22x22xf32, #tpu.memory_space<vmem>>, vector<1x1x16xf32>
      %126 = vector.shape_cast %125 : vector<1x1x16xf32> to vector<1x16xf32>
      %127 = vector.shape_cast %124 : vector<1x16xf32> to vector<1x1x16xf32>
      tpu.vector_store %arg7[%c1_84, %c15_85, %c3_86], %127 {strides = array<i32>} : memref<2x22x22xf32, #tpu.memory_space<vmem>>, vector<1x1x16xf32>,
      %128 = vector.extract_strided_slice %20 {offsets = [0, 208], sizes = [1, 16], strides = [1, 1]} : vector<1x256xf32> to vector<1x16xf32>
      %c0_87 = arith.constant 0 : index
      %c16 = arith.constant 16 : index
      %c3_88 = arith.constant 3 : index
      %129 = vector.load %arg7[%c0_87, %c16, %c3_88] : memref<2x22x22xf32, #tpu.memory_space<vmem>>, vector<1x1x16xf32>
      %130 = vector.shape_cast %129 : vector<1x1x16xf32> to vector<1x16xf32>
      %131 = vector.shape_cast %128 : vector<1x16xf32> to vector<1x1x16xf32>
      tpu.vector_store %arg7[%c0_87, %c16, %c3_88], %131 {strides = array<i32>} : memref<2x22x22xf32, #tpu.memory_space<vmem>>, vector<1x1x16xf32>,
      %132 = vector.extract_strided_slice %21 {offsets = [0, 208], sizes = [1, 16], strides = [1, 1]} : vector<1x256xf32> to vector<1x16xf32>
      %c1_89 = arith.constant 1 : index
      %c16_90 = arith.constant 16 : index
      %c3_91 = arith.constant 3 : index
      %133 = vector.load %arg7[%c1_89, %c16_90, %c3_91] : memref<2x22x22xf32, #tpu.memory_space<vmem>>, vector<1x1x16xf32>
      %134 = vector.shape_cast %133 : vector<1x1x16xf32> to vector<1x16xf32>
      %135 = vector.shape_cast %132 : vector<1x16xf32> to vector<1x1x16xf32>
      tpu.vector_store %arg7[%c1_89, %c16_90, %c3_91], %135 {strides = array<i32>} : memref<2x22x22xf32, #tpu.memory_space<vmem>>, vector<1x1x16xf32>,
      %136 = vector.extract_strided_slice %20 {offsets = [0, 224], sizes = [1, 16], strides = [1, 1]} : vector<1x256xf32> to vector<1x16xf32>
      %c0_92 = arith.constant 0 : index
      %c17 = arith.constant 17 : index
      %c3_93 = arith.constant 3 : index
      %137 = vector.load %arg7[%c0_92, %c17, %c3_93] : memref<2x22x22xf32, #tpu.memory_space<vmem>>, vector<1x1x16xf32>
      %138 = vector.shape_cast %137 : vector<1x1x16xf32> to vector<1x16xf32>
      %139 = vector.shape_cast %136 : vector<1x16xf32> to vector<1x1x16xf32>
      tpu.vector_store %arg7[%c0_92, %c17, %c3_93], %139 {strides = array<i32>} : memref<2x22x22xf32, #tpu.memory_space<vmem>>, vector<1x1x16xf32>,
      %140 = vector.extract_strided_slice %21 {offsets = [0, 224], sizes = [1, 16], strides = [1, 1]} : vector<1x256xf32> to vector<1x16xf32>
      %c1_94 = arith.constant 1 : index
      %c17_95 = arith.constant 17 : index
      %c3_96 = arith.constant 3 : index
      %141 = vector.load %arg7[%c1_94, %c17_95, %c3_96] : memref<2x22x22xf32, #tpu.memory_space<vmem>>, vector<1x1x16xf32>
      %142 = vector.shape_cast %141 : vector<1x1x16xf32> to vector<1x16xf32>
      %143 = vector.shape_cast %140 : vector<1x16xf32> to vector<1x1x16xf32>
      tpu.vector_store %arg7[%c1_94, %c17_95, %c3_96], %143 {strides = array<i32>} : memref<2x22x22xf32, #tpu.memory_space<vmem>>, vector<1x1x16xf32>,
      %144 = vector.extract_strided_slice %20 {offsets = [0, 240], sizes = [1, 16], strides = [1, 1]} : vector<1x256xf32> to vector<1x16xf32>
      %c0_97 = arith.constant 0 : index
      %c18 = arith.constant 18 : index
      %c3_98 = arith.constant 3 : index
      %145 = vector.load %arg7[%c0_97, %c18, %c3_98] : memref<2x22x22xf32, #tpu.memory_space<vmem>>, vector<1x1x16xf32>
      %146 = vector.shape_cast %145 : vector<1x1x16xf32> to vector<1x16xf32>
      %147 = vector.shape_cast %144 : vector<1x16xf32> to vector<1x1x16xf32>
      tpu.vector_store %arg7[%c0_97, %c18, %c3_98], %147 {strides = array<i32>} : memref<2x22x22xf32, #tpu.memory_space<vmem>>, vector<1x1x16xf32>,
      %148 = vector.extract_strided_slice %21 {offsets = [0, 240], sizes = [1, 16], strides = [1, 1]} : vector<1x256xf32> to vector<1x16xf32>
      %c1_99 = arith.constant 1 : index
      %c18_100 = arith.constant 18 : index
      %c3_101 = arith.constant 3 : index
      %149 = vector.load %arg7[%c1_99, %c18_100, %c3_101] : memref<2x22x22xf32, #tpu.memory_space<vmem>>, vector<1x1x16xf32>
      %150 = vector.shape_cast %149 : vector<1x1x16xf32> to vector<1x16xf32>
      %151 = vector.shape_cast %148 : vector<1x16xf32> to vector<1x1x16xf32>
      tpu.vector_store %arg7[%c1_99, %c18_100, %c3_101], %151 {strides = array<i32>} : memref<2x22x22xf32, #tpu.memory_space<vmem>>, vector<1x1x16xf32>,
      %c0_102 = arith.constant 0 : index
      %c0_103 = arith.constant 0 : index
      %c0_104 = arith.constant 0 : index
      %152 = vector.load %arg7[%c0_102, %c0_103, %c0_104] : memref<2x22x22xf32, #tpu.memory_space<vmem>>, vector<1x22x16xf32>
      %153 = vector.shape_cast %152 : vector<1x22x16xf32> to vector<22x16xf32>
      %c0_105 = arith.constant 0 : index
      %c0_106 = arith.constant 0 : index
      %c0_107 = arith.constant 0 : index
      %c0_108 = arith.constant 0 : index
      %154 = vector.load %arg8[%c0_105, %c0_106, %c0_107, %c0_108] : memref<2x7x22x16xf32, #tpu.memory_space<vmem>>, vector<1x1x22x16xf32>
      %155 = vector.shape_cast %154 : vector<1x1x22x16xf32> to vector<22x16xf32>
      %156 = vector.shape_cast %153 : vector<22x16xf32> to vector<1x1x22x16xf32>
      tpu.vector_store %arg8[%c0_105, %c0_106, %c0_107, %c0_108], %156 {strides = array<i32>} : memref<2x7x22x16xf32, #tpu.memory_space<vmem>>, vector<1x1x22x16xf32>,
      %c0_109 = arith.constant 0 : index
      %c0_110 = arith.constant 0 : index
      %c1_111 = arith.constant 1 : index
      %157 = vector.load %arg7[%c0_109, %c0_110, %c1_111] : memref<2x22x22xf32, #tpu.memory_space<vmem>>, vector<1x22x16xf32>
      %158 = vector.shape_cast %157 : vector<1x22x16xf32> to vector<22x16xf32>
      %c0_112 = arith.constant 0 : index
      %c1_113 = arith.constant 1 : index
      %c0_114 = arith.constant 0 : index
      %c0_115 = arith.constant 0 : index
      %159 = vector.load %arg8[%c0_112, %c1_113, %c0_114, %c0_115] : memref<2x7x22x16xf32, #tpu.memory_space<vmem>>, vector<1x1x22x16xf32>
      %160 = vector.shape_cast %159 : vector<1x1x22x16xf32> to vector<22x16xf32>
      %161 = vector.shape_cast %158 : vector<22x16xf32> to vector<1x1x22x16xf32>
      tpu.vector_store %arg8[%c0_112, %c1_113, %c0_114, %c0_115], %161 {strides = array<i32>} : memref<2x7x22x16xf32, #tpu.memory_space<vmem>>, vector<1x1x22x16xf32>,
      %c0_116 = arith.constant 0 : index
      %c0_117 = arith.constant 0 : index
      %c2 = arith.constant 2 : index
      %162 = vector.load %arg7[%c0_116, %c0_117, %c2] : memref<2x22x22xf32, #tpu.memory_space<vmem>>, vector<1x22x16xf32>
      %163 = vector.shape_cast %162 : vector<1x22x16xf32> to vector<22x16xf32>
      %c0_118 = arith.constant 0 : index
      %c2_119 = arith.constant 2 : index
      %c0_120 = arith.constant 0 : index
      %c0_121 = arith.constant 0 : index
      %164 = vector.load %arg8[%c0_118, %c2_119, %c0_120, %c0_121] : memref<2x7x22x16xf32, #tpu.memory_space<vmem>>, vector<1x1x22x16xf32>
      %165 = vector.shape_cast %164 : vector<1x1x22x16xf32> to vector<22x16xf32>
      %166 = vector.shape_cast %163 : vector<22x16xf32> to vector<1x1x22x16xf32>
      tpu.vector_store %arg8[%c0_118, %c2_119, %c0_120, %c0_121], %166 {strides = array<i32>} : memref<2x7x22x16xf32, #tpu.memory_space<vmem>>, vector<1x1x22x16xf32>,
      %c0_122 = arith.constant 0 : index
      %c0_123 = arith.constant 0 : index
      %c3_124 = arith.constant 3 : index
      %167 = vector.load %arg7[%c0_122, %c0_123, %c3_124] : memref<2x22x22xf32, #tpu.memory_space<vmem>>, vector<1x22x16xf32>
      %168 = vector.shape_cast %167 : vector<1x22x16xf32> to vector<22x16xf32>
      %c0_125 = arith.constant 0 : index
      %c3_126 = arith.constant 3 : index
      %c0_127 = arith.constant 0 : index
      %c0_128 = arith.constant 0 : index
      %169 = vector.load %arg8[%c0_125, %c3_126, %c0_127, %c0_128] : memref<2x7x22x16xf32, #tpu.memory_space<vmem>>, vector<1x1x22x16xf32>
      %170 = vector.shape_cast %169 : vector<1x1x22x16xf32> to vector<22x16xf32>
      %171 = vector.shape_cast %168 : vector<22x16xf32> to vector<1x1x22x16xf32>
      tpu.vector_store %arg8[%c0_125, %c3_126, %c0_127, %c0_128], %171 {strides = array<i32>} : memref<2x7x22x16xf32, #tpu.memory_space<vmem>>, vector<1x1x22x16xf32>,
      %c0_129 = arith.constant 0 : index
      %c0_130 = arith.constant 0 : index
      %c4_131 = arith.constant 4 : index
      %172 = vector.load %arg7[%c0_129, %c0_130, %c4_131] : memref<2x22x22xf32, #tpu.memory_space<vmem>>, vector<1x22x16xf32>
      %173 = vector.shape_cast %172 : vector<1x22x16xf32> to vector<22x16xf32>
      %c0_132 = arith.constant 0 : index
      %c4_133 = arith.constant 4 : index
      %c0_134 = arith.constant 0 : index
      %c0_135 = arith.constant 0 : index
      %174 = vector.load %arg8[%c0_132, %c4_133, %c0_134, %c0_135] : memref<2x7x22x16xf32, #tpu.memory_space<vmem>>, vector<1x1x22x16xf32>
      %175 = vector.shape_cast %174 : vector<1x1x22x16xf32> to vector<22x16xf32>
      %176 = vector.shape_cast %173 : vector<22x16xf32> to vector<1x1x22x16xf32>
      tpu.vector_store %arg8[%c0_132, %c4_133, %c0_134, %c0_135], %176 {strides = array<i32>} : memref<2x7x22x16xf32, #tpu.memory_space<vmem>>, vector<1x1x22x16xf32>,
      %c0_136 = arith.constant 0 : index
      %c0_137 = arith.constant 0 : index
      %c5_138 = arith.constant 5 : index
      %177 = vector.load %arg7[%c0_136, %c0_137, %c5_138] : memref<2x22x22xf32, #tpu.memory_space<vmem>>, vector<1x22x16xf32>
      %178 = vector.shape_cast %177 : vector<1x22x16xf32> to vector<22x16xf32>
      %c0_139 = arith.constant 0 : index
      %c5_140 = arith.constant 5 : index
      %c0_141 = arith.constant 0 : index
      %c0_142 = arith.constant 0 : index
      %179 = vector.load %arg8[%c0_139, %c5_140, %c0_141, %c0_142] : memref<2x7x22x16xf32, #tpu.memory_space<vmem>>, vector<1x1x22x16xf32>
      %180 = vector.shape_cast %179 : vector<1x1x22x16xf32> to vector<22x16xf32>
      %181 = vector.shape_cast %178 : vector<22x16xf32> to vector<1x1x22x16xf32>
      tpu.vector_store %arg8[%c0_139, %c5_140, %c0_141, %c0_142], %181 {strides = array<i32>} : memref<2x7x22x16xf32, #tpu.memory_space<vmem>>, vector<1x1x22x16xf32>,
      %c0_143 = arith.constant 0 : index
      %c0_144 = arith.constant 0 : index
      %c6_145 = arith.constant 6 : index
      %182 = vector.load %arg7[%c0_143, %c0_144, %c6_145] : memref<2x22x22xf32, #tpu.memory_space<vmem>>, vector<1x22x16xf32>
      %183 = vector.shape_cast %182 : vector<1x22x16xf32> to vector<22x16xf32>
      %c0_146 = arith.constant 0 : index
      %c6_147 = arith.constant 6 : index
      %c0_148 = arith.constant 0 : index
      %c0_149 = arith.constant 0 : index
      %184 = vector.load %arg8[%c0_146, %c6_147, %c0_148, %c0_149] : memref<2x7x22x16xf32, #tpu.memory_space<vmem>>, vector<1x1x22x16xf32>
      %185 = vector.shape_cast %184 : vector<1x1x22x16xf32> to vector<22x16xf32>
      %186 = vector.shape_cast %183 : vector<22x16xf32> to vector<1x1x22x16xf32>
      tpu.vector_store %arg8[%c0_146, %c6_147, %c0_148, %c0_149], %186 {strides = array<i32>} : memref<2x7x22x16xf32, #tpu.memory_space<vmem>>, vector<1x1x22x16xf32>,
      %c1_150 = arith.constant 1 : index
      %c0_151 = arith.constant 0 : index
      %c0_152 = arith.constant 0 : index
      %187 = vector.load %arg7[%c1_150, %c0_151, %c0_152] : memref<2x22x22xf32, #tpu.memory_space<vmem>>, vector<1x22x16xf32>
      %188 = vector.shape_cast %187 : vector<1x22x16xf32> to vector<22x16xf32>
      %c1_153 = arith.constant 1 : index
      %c0_154 = arith.constant 0 : index
      %c0_155 = arith.constant 0 : index
      %c0_156 = arith.constant 0 : index
      %189 = vector.load %arg8[%c1_153, %c0_154, %c0_155, %c0_156] : memref<2x7x22x16xf32, #tpu.memory_space<vmem>>, vector<1x1x22x16xf32>
      %190 = vector.shape_cast %189 : vector<1x1x22x16xf32> to vector<22x16xf32>
      %191 = vector.shape_cast %188 : vector<22x16xf32> to vector<1x1x22x16xf32>
      tpu.vector_store %arg8[%c1_153, %c0_154, %c0_155, %c0_156], %191 {strides = array<i32>} : memref<2x7x22x16xf32, #tpu.memory_space<vmem>>, vector<1x1x22x16xf32>,
      %c1_157 = arith.constant 1 : index
      %c0_158 = arith.constant 0 : index
      %c1_159 = arith.constant 1 : index
      %192 = vector.load %arg7[%c1_157, %c0_158, %c1_159] : memref<2x22x22xf32, #tpu.memory_space<vmem>>, vector<1x22x16xf32>
      %193 = vector.shape_cast %192 : vector<1x22x16xf32> to vector<22x16xf32>
      %c1_160 = arith.constant 1 : index
      %c1_161 = arith.constant 1 : index
      %c0_162 = arith.constant 0 : index
      %c0_163 = arith.constant 0 : index
      %194 = vector.load %arg8[%c1_160, %c1_161, %c0_162, %c0_163] : memref<2x7x22x16xf32, #tpu.memory_space<vmem>>, vector<1x1x22x16xf32>
      %195 = vector.shape_cast %194 : vector<1x1x22x16xf32> to vector<22x16xf32>
      %196 = vector.shape_cast %193 : vector<22x16xf32> to vector<1x1x22x16xf32>
      tpu.vector_store %arg8[%c1_160, %c1_161, %c0_162, %c0_163], %196 {strides = array<i32>} : memref<2x7x22x16xf32, #tpu.memory_space<vmem>>, vector<1x1x22x16xf32>,
      %c1_164 = arith.constant 1 : index
      %c0_165 = arith.constant 0 : index
      %c2_166 = arith.constant 2 : index
      %197 = vector.load %arg7[%c1_164, %c0_165, %c2_166] : memref<2x22x22xf32, #tpu.memory_space<vmem>>, vector<1x22x16xf32>
      %198 = vector.shape_cast %197 : vector<1x22x16xf32> to vector<22x16xf32>
      %c1_167 = arith.constant 1 : index
      %c2_168 = arith.constant 2 : index
      %c0_169 = arith.constant 0 : index
      %c0_170 = arith.constant 0 : index
      %199 = vector.load %arg8[%c1_167, %c2_168, %c0_169, %c0_170] : memref<2x7x22x16xf32, #tpu.memory_space<vmem>>, vector<1x1x22x16xf32>
      %200 = vector.shape_cast %199 : vector<1x1x22x16xf32> to vector<22x16xf32>
      %201 = vector.shape_cast %198 : vector<22x16xf32> to vector<1x1x22x16xf32>
      tpu.vector_store %arg8[%c1_167, %c2_168, %c0_169, %c0_170], %201 {strides = array<i32>} : memref<2x7x22x16xf32, #tpu.memory_space<vmem>>, vector<1x1x22x16xf32>,
      %c1_171 = arith.constant 1 : index
      %c0_172 = arith.constant 0 : index
      %c3_173 = arith.constant 3 : index
      %202 = vector.load %arg7[%c1_171, %c0_172, %c3_173] : memref<2x22x22xf32, #tpu.memory_space<vmem>>, vector<1x22x16xf32>
      %203 = vector.shape_cast %202 : vector<1x22x16xf32> to vector<22x16xf32>
      %c1_174 = arith.constant 1 : index
      %c3_175 = arith.constant 3 : index
      %c0_176 = arith.constant 0 : index
      %c0_177 = arith.constant 0 : index
      %204 = vector.load %arg8[%c1_174, %c3_175, %c0_176, %c0_177] : memref<2x7x22x16xf32, #tpu.memory_space<vmem>>, vector<1x1x22x16xf32>
      %205 = vector.shape_cast %204 : vector<1x1x22x16xf32> to vector<22x16xf32>
      %206 = vector.shape_cast %203 : vector<22x16xf32> to vector<1x1x22x16xf32>
      tpu.vector_store %arg8[%c1_174, %c3_175, %c0_176, %c0_177], %206 {strides = array<i32>} : memref<2x7x22x16xf32, #tpu.memory_space<vmem>>, vector<1x1x22x16xf32>,
      %c1_178 = arith.constant 1 : index
      %c0_179 = arith.constant 0 : index
      %c4_180 = arith.constant 4 : index
      %207 = vector.load %arg7[%c1_178, %c0_179, %c4_180] : memref<2x22x22xf32, #tpu.memory_space<vmem>>, vector<1x22x16xf32>
      %208 = vector.shape_cast %207 : vector<1x22x16xf32> to vector<22x16xf32>
      %c1_181 = arith.constant 1 : index
      %c4_182 = arith.constant 4 : index
      %c0_183 = arith.constant 0 : index
      %c0_184 = arith.constant 0 : index
      %209 = vector.load %arg8[%c1_181, %c4_182, %c0_183, %c0_184] : memref<2x7x22x16xf32, #tpu.memory_space<vmem>>, vector<1x1x22x16xf32>
      %210 = vector.shape_cast %209 : vector<1x1x22x16xf32> to vector<22x16xf32>
      %211 = vector.shape_cast %208 : vector<22x16xf32> to vector<1x1x22x16xf32>
      tpu.vector_store %arg8[%c1_181, %c4_182, %c0_183, %c0_184], %211 {strides = array<i32>} : memref<2x7x22x16xf32, #tpu.memory_space<vmem>>, vector<1x1x22x16xf32>,
      %c1_185 = arith.constant 1 : index
      %c0_186 = arith.constant 0 : index
      %c5_187 = arith.constant 5 : index
      %212 = vector.load %arg7[%c1_185, %c0_186, %c5_187] : memref<2x22x22xf32, #tpu.memory_space<vmem>>, vector<1x22x16xf32>
      %213 = vector.shape_cast %212 : vector<1x22x16xf32> to vector<22x16xf32>
      %c1_188 = arith.constant 1 : index
      %c5_189 = arith.constant 5 : index
      %c0_190 = arith.constant 0 : index
      %c0_191 = arith.constant 0 : index
      %214 = vector.load %arg8[%c1_188, %c5_189, %c0_190, %c0_191] : memref<2x7x22x16xf32, #tpu.memory_space<vmem>>, vector<1x1x22x16xf32>
      %215 = vector.shape_cast %214 : vector<1x1x22x16xf32> to vector<22x16xf32>
      %216 = vector.shape_cast %213 : vector<22x16xf32> to vector<1x1x22x16xf32>
      tpu.vector_store %arg8[%c1_188, %c5_189, %c0_190, %c0_191], %216 {strides = array<i32>} : memref<2x7x22x16xf32, #tpu.memory_space<vmem>>, vector<1x1x22x16xf32>,
      %c1_192 = arith.constant 1 : index
      %c0_193 = arith.constant 0 : index
      %c6_194 = arith.constant 6 : index
      %217 = vector.load %arg7[%c1_192, %c0_193, %c6_194] : memref<2x22x22xf32, #tpu.memory_space<vmem>>, vector<1x22x16xf32>
      %218 = vector.shape_cast %217 : vector<1x22x16xf32> to vector<22x16xf32>
      %c1_195 = arith.constant 1 : index
      %c6_196 = arith.constant 6 : index
      %c0_197 = arith.constant 0 : index
      %c0_198 = arith.constant 0 : index
      %219 = vector.load %arg8[%c1_195, %c6_196, %c0_197, %c0_198] : memref<2x7x22x16xf32, #tpu.memory_space<vmem>>, vector<1x1x22x16xf32>
      %220 = vector.shape_cast %219 : vector<1x1x22x16xf32> to vector<22x16xf32>
      %221 = vector.shape_cast %218 : vector<22x16xf32> to vector<1x1x22x16xf32>
      tpu.vector_store %arg8[%c1_195, %c6_196, %c0_197, %c0_198], %221 {strides = array<i32>} : memref<2x7x22x16xf32, #tpu.memory_space<vmem>>, vector<1x1x22x16xf32>,
      %cst_199 = arith.constant 0.000000e+00 : f32
      %222 = vector.broadcast %cst_199 : f32 to vector<16x16xf32>
      %cst_200 = arith.constant 0.000000e+00 : f32
      %223 = vector.broadcast %cst_200 : f32 to vector<16x16xf32>
      %cst_201 = arith.constant 0.000000e+00 : f32
      %224 = vector.broadcast %cst_201 : f32 to vector<16x16xf32>
      %cst_202 = arith.constant 0.000000e+00 : f32
      %225 = vector.broadcast %cst_202 : f32 to vector<16x16xf32>
      %c0_203 = arith.constant 0 : index
      %226 = memref.load %arg2[%c0_203] : memref<98xf32, #tpu.memory_space<smem>>
      %c0_204 = arith.constant 0 : index
      %c0_205 = arith.constant 0 : index
      %c0_206 = arith.constant 0 : index
      %c0_207 = arith.constant 0 : index
      %227 = vector.load %arg8[%c0_204, %c0_205, %c0_206, %c0_207] : memref<2x7x22x16xf32, #tpu.memory_space<vmem>>, vector<1x1x16x16xf32>
      %228 = vector.shape_cast %227 : vector<1x1x16x16xf32> to vector<16x16xf32>
      %229 = vector.broadcast %226 : f32 to vector<16x16xf32>
      %230 = arith.mulf %229, %228 : vector<16x16xf32>
      %231 = arith.addf %222, %230 : vector<16x16xf32>
      %c7_208 = arith.constant 7 : index
      %232 = memref.load %arg2[%c7_208] : memref<98xf32, #tpu.memory_space<smem>>
      %c0_209 = arith.constant 0 : index
      %c0_210 = arith.constant 0 : index
      %c1_211 = arith.constant 1 : index
      %c0_212 = arith.constant 0 : index
      %233 = vector.load %arg8[%c0_209, %c0_210, %c1_211, %c0_212] : memref<2x7x22x16xf32, #tpu.memory_space<vmem>>, vector<1x1x16x16xf32>
      %234 = vector.shape_cast %233 : vector<1x1x16x16xf32> to vector<16x16xf32>
      %235 = vector.broadcast %232 : f32 to vector<16x16xf32>
      %236 = arith.mulf %235, %234 : vector<16x16xf32>
      %237 = arith.addf %223, %236 : vector<16x16xf32>
      %c14_213 = arith.constant 14 : index
      %238 = memref.load %arg2[%c14_213] : memref<98xf32, #tpu.memory_space<smem>>
      %c0_214 = arith.constant 0 : index
      %c0_215 = arith.constant 0 : index
      %c2_216 = arith.constant 2 : index
      %c0_217 = arith.constant 0 : index
      %239 = vector.load %arg8[%c0_214, %c0_215, %c2_216, %c0_217] : memref<2x7x22x16xf32, #tpu.memory_space<vmem>>, vector<1x1x16x16xf32>
      %240 = vector.shape_cast %239 : vector<1x1x16x16xf32> to vector<16x16xf32>
      %241 = vector.broadcast %238 : f32 to vector<16x16xf32>
      %242 = arith.mulf %241, %240 : vector<16x16xf32>
      %243 = arith.addf %224, %242 : vector<16x16xf32>
      %c21 = arith.constant 21 : index
      %244 = memref.load %arg2[%c21] : memref<98xf32, #tpu.memory_space<smem>>
      %c0_218 = arith.constant 0 : index
      %c0_219 = arith.constant 0 : index
      %c3_220 = arith.constant 3 : index
      %c0_221 = arith.constant 0 : index
      %245 = vector.load %arg8[%c0_218, %c0_219, %c3_220, %c0_221] : memref<2x7x22x16xf32, #tpu.memory_space<vmem>>, vector<1x1x16x16xf32>
      %246 = vector.shape_cast %245 : vector<1x1x16x16xf32> to vector<16x16xf32>
      %247 = vector.broadcast %244 : f32 to vector<16x16xf32>
      %248 = arith.mulf %247, %246 : vector<16x16xf32>
      %249 = arith.addf %225, %248 : vector<16x16xf32>
      %c28 = arith.constant 28 : index
      %250 = memref.load %arg2[%c28] : memref<98xf32, #tpu.memory_space<smem>>
      %c0_222 = arith.constant 0 : index
      %c0_223 = arith.constant 0 : index
      %c4_224 = arith.constant 4 : index
      %c0_225 = arith.constant 0 : index
      %251 = vector.load %arg8[%c0_222, %c0_223, %c4_224, %c0_225] : memref<2x7x22x16xf32, #tpu.memory_space<vmem>>, vector<1x1x16x16xf32>
      %252 = vector.shape_cast %251 : vector<1x1x16x16xf32> to vector<16x16xf32>
      %253 = vector.broadcast %250 : f32 to vector<16x16xf32>
      %254 = arith.mulf %253, %252 : vector<16x16xf32>
      %255 = arith.addf %231, %254 : vector<16x16xf32>
      %c35 = arith.constant 35 : index
      %256 = memref.load %arg2[%c35] : memref<98xf32, #tpu.memory_space<smem>>
      %c0_226 = arith.constant 0 : index
      %c0_227 = arith.constant 0 : index
      %c5_228 = arith.constant 5 : index
      %c0_229 = arith.constant 0 : index
      %257 = vector.load %arg8[%c0_226, %c0_227, %c5_228, %c0_229] : memref<2x7x22x16xf32, #tpu.memory_space<vmem>>, vector<1x1x16x16xf32>
      %258 = vector.shape_cast %257 : vector<1x1x16x16xf32> to vector<16x16xf32>
      %259 = vector.broadcast %256 : f32 to vector<16x16xf32>
      %260 = arith.mulf %259, %258 : vector<16x16xf32>
      %261 = arith.addf %237, %260 : vector<16x16xf32>
      %c42 = arith.constant 42 : index
      %262 = memref.load %arg2[%c42] : memref<98xf32, #tpu.memory_space<smem>>
      %c0_230 = arith.constant 0 : index
      %c0_231 = arith.constant 0 : index
      %c6_232 = arith.constant 6 : index
      %c0_233 = arith.constant 0 : index
      %263 = vector.load %arg8[%c0_230, %c0_231, %c6_232, %c0_233] : memref<2x7x22x16xf32, #tpu.memory_space<vmem>>, vector<1x1x16x16xf32>
      %264 = vector.shape_cast %263 : vector<1x1x16x16xf32> to vector<16x16xf32>
      %265 = vector.broadcast %262 : f32 to vector<16x16xf32>
      %266 = arith.mulf %265, %264 : vector<16x16xf32>
      %267 = arith.addf %243, %266 : vector<16x16xf32>
      %c1_234 = arith.constant 1 : index
      %268 = memref.load %arg2[%c1_234] : memref<98xf32, #tpu.memory_space<smem>>
      %c0_235 = arith.constant 0 : index
      %c1_236 = arith.constant 1 : index
      %c0_237 = arith.constant 0 : index
      %c0_238 = arith.constant 0 : index
      %269 = vector.load %arg8[%c0_235, %c1_236, %c0_237, %c0_238] : memref<2x7x22x16xf32, #tpu.memory_space<vmem>>, vector<1x1x16x16xf32>
      %270 = vector.shape_cast %269 : vector<1x1x16x16xf32> to vector<16x16xf32>
      %271 = vector.broadcast %268 : f32 to vector<16x16xf32>
      %272 = arith.mulf %271, %270 : vector<16x16xf32>
      %273 = arith.addf %249, %272 : vector<16x16xf32>
      %c8_239 = arith.constant 8 : index
      %274 = memref.load %arg2[%c8_239] : memref<98xf32, #tpu.memory_space<smem>>
      %c0_240 = arith.constant 0 : index
      %c1_241 = arith.constant 1 : index
      %c1_242 = arith.constant 1 : index
      %c0_243 = arith.constant 0 : index
      %275 = vector.load %arg8[%c0_240, %c1_241, %c1_242, %c0_243] : memref<2x7x22x16xf32, #tpu.memory_space<vmem>>, vector<1x1x16x16xf32>
      %276 = vector.shape_cast %275 : vector<1x1x16x16xf32> to vector<16x16xf32>
      %277 = vector.broadcast %274 : f32 to vector<16x16xf32>
      %278 = arith.mulf %277, %276 : vector<16x16xf32>
      %279 = arith.addf %255, %278 : vector<16x16xf32>
      %c15_244 = arith.constant 15 : index
      %280 = memref.load %arg2[%c15_244] : memref<98xf32, #tpu.memory_space<smem>>
      %c0_245 = arith.constant 0 : index
      %c1_246 = arith.constant 1 : index
      %c2_247 = arith.constant 2 : index
      %c0_248 = arith.constant 0 : index
      %281 = vector.load %arg8[%c0_245, %c1_246, %c2_247, %c0_248] : memref<2x7x22x16xf32, #tpu.memory_space<vmem>>, vector<1x1x16x16xf32>
      %282 = vector.shape_cast %281 : vector<1x1x16x16xf32> to vector<16x16xf32>
      %283 = vector.broadcast %280 : f32 to vector<16x16xf32>
      %284 = arith.mulf %283, %282 : vector<16x16xf32>
      %285 = arith.addf %261, %284 : vector<16x16xf32>
      %c22 = arith.constant 22 : index
      %286 = memref.load %arg2[%c22] : memref<98xf32, #tpu.memory_space<smem>>
      %c0_249 = arith.constant 0 : index
      %c1_250 = arith.constant 1 : index
      %c3_251 = arith.constant 3 : index
      %c0_252 = arith.constant 0 : index
      %287 = vector.load %arg8[%c0_249, %c1_250, %c3_251, %c0_252] : memref<2x7x22x16xf32, #tpu.memory_space<vmem>>, vector<1x1x16x16xf32>
      %288 = vector.shape_cast %287 : vector<1x1x16x16xf32> to vector<16x16xf32>
      %289 = vector.broadcast %286 : f32 to vector<16x16xf32>
      %290 = arith.mulf %289, %288 : vector<16x16xf32>
      %291 = arith.addf %267, %290 : vector<16x16xf32>
      %c29 = arith.constant 29 : index
      %292 = memref.load %arg2[%c29] : memref<98xf32, #tpu.memory_space<smem>>
      %c0_253 = arith.constant 0 : index
      %c1_254 = arith.constant 1 : index
      %c4_255 = arith.constant 4 : index
      %c0_256 = arith.constant 0 : index
      %293 = vector.load %arg8[%c0_253, %c1_254, %c4_255, %c0_256] : memref<2x7x22x16xf32, #tpu.memory_space<vmem>>, vector<1x1x16x16xf32>
      %294 = vector.shape_cast %293 : vector<1x1x16x16xf32> to vector<16x16xf32>
      %295 = vector.broadcast %292 : f32 to vector<16x16xf32>
      %296 = arith.mulf %295, %294 : vector<16x16xf32>
      %297 = arith.addf %273, %296 : vector<16x16xf32>
      %c36 = arith.constant 36 : index
      %298 = memref.load %arg2[%c36] : memref<98xf32, #tpu.memory_space<smem>>
      %c0_257 = arith.constant 0 : index
      %c1_258 = arith.constant 1 : index
      %c5_259 = arith.constant 5 : index
      %c0_260 = arith.constant 0 : index
      %299 = vector.load %arg8[%c0_257, %c1_258, %c5_259, %c0_260] : memref<2x7x22x16xf32, #tpu.memory_space<vmem>>, vector<1x1x16x16xf32>
      %300 = vector.shape_cast %299 : vector<1x1x16x16xf32> to vector<16x16xf32>
      %301 = vector.broadcast %298 : f32 to vector<16x16xf32>
      %302 = arith.mulf %301, %300 : vector<16x16xf32>
      %303 = arith.addf %279, %302 : vector<16x16xf32>
      %c43 = arith.constant 43 : index
      %304 = memref.load %arg2[%c43] : memref<98xf32, #tpu.memory_space<smem>>
      %c0_261 = arith.constant 0 : index
      %c1_262 = arith.constant 1 : index
      %c6_263 = arith.constant 6 : index
      %c0_264 = arith.constant 0 : index
      %305 = vector.load %arg8[%c0_261, %c1_262, %c6_263, %c0_264] : memref<2x7x22x16xf32, #tpu.memory_space<vmem>>, vector<1x1x16x16xf32>
      %306 = vector.shape_cast %305 : vector<1x1x16x16xf32> to vector<16x16xf32>
      %307 = vector.broadcast %304 : f32 to vector<16x16xf32>
      %308 = arith.mulf %307, %306 : vector<16x16xf32>
      %309 = arith.addf %285, %308 : vector<16x16xf32>
      %c2_265 = arith.constant 2 : index
      %310 = memref.load %arg2[%c2_265] : memref<98xf32, #tpu.memory_space<smem>>
      %c0_266 = arith.constant 0 : index
      %c2_267 = arith.constant 2 : index
      %c0_268 = arith.constant 0 : index
      %c0_269 = arith.constant 0 : index
      %311 = vector.load %arg8[%c0_266, %c2_267, %c0_268, %c0_269] : memref<2x7x22x16xf32, #tpu.memory_space<vmem>>, vector<1x1x16x16xf32>
      %312 = vector.shape_cast %311 : vector<1x1x16x16xf32> to vector<16x16xf32>
      %313 = vector.broadcast %310 : f32 to vector<16x16xf32>
      %314 = arith.mulf %313, %312 : vector<16x16xf32>
      %315 = arith.addf %291, %314 : vector<16x16xf32>
      %c9_270 = arith.constant 9 : index
      %316 = memref.load %arg2[%c9_270] : memref<98xf32, #tpu.memory_space<smem>>
      %c0_271 = arith.constant 0 : index
      %c2_272 = arith.constant 2 : index
      %c1_273 = arith.constant 1 : index
      %c0_274 = arith.constant 0 : index
      %317 = vector.load %arg8[%c0_271, %c2_272, %c1_273, %c0_274] : memref<2x7x22x16xf32, #tpu.memory_space<vmem>>, vector<1x1x16x16xf32>
      %318 = vector.shape_cast %317 : vector<1x1x16x16xf32> to vector<16x16xf32>
      %319 = vector.broadcast %316 : f32 to vector<16x16xf32>
      %320 = arith.mulf %319, %318 : vector<16x16xf32>
      %321 = arith.addf %297, %320 : vector<16x16xf32>
      %c16_275 = arith.constant 16 : index
      %322 = memref.load %arg2[%c16_275] : memref<98xf32, #tpu.memory_space<smem>>
      %c0_276 = arith.constant 0 : index
      %c2_277 = arith.constant 2 : index
      %c2_278 = arith.constant 2 : index
      %c0_279 = arith.constant 0 : index
      %323 = vector.load %arg8[%c0_276, %c2_277, %c2_278, %c0_279] : memref<2x7x22x16xf32, #tpu.memory_space<vmem>>, vector<1x1x16x16xf32>
      %324 = vector.shape_cast %323 : vector<1x1x16x16xf32> to vector<16x16xf32>
      %325 = vector.broadcast %322 : f32 to vector<16x16xf32>
      %326 = arith.mulf %325, %324 : vector<16x16xf32>
      %327 = arith.addf %303, %326 : vector<16x16xf32>
      %c23 = arith.constant 23 : index
      %328 = memref.load %arg2[%c23] : memref<98xf32, #tpu.memory_space<smem>>
      %c0_280 = arith.constant 0 : index
      %c2_281 = arith.constant 2 : index
      %c3_282 = arith.constant 3 : index
      %c0_283 = arith.constant 0 : index
      %329 = vector.load %arg8[%c0_280, %c2_281, %c3_282, %c0_283] : memref<2x7x22x16xf32, #tpu.memory_space<vmem>>, vector<1x1x16x16xf32>
      %330 = vector.shape_cast %329 : vector<1x1x16x16xf32> to vector<16x16xf32>
      %331 = vector.broadcast %328 : f32 to vector<16x16xf32>
      %332 = arith.mulf %331, %330 : vector<16x16xf32>
      %333 = arith.addf %309, %332 : vector<16x16xf32>
      %c30 = arith.constant 30 : index
      %334 = memref.load %arg2[%c30] : memref<98xf32, #tpu.memory_space<smem>>
      %c0_284 = arith.constant 0 : index
      %c2_285 = arith.constant 2 : index
      %c4_286 = arith.constant 4 : index
      %c0_287 = arith.constant 0 : index
      %335 = vector.load %arg8[%c0_284, %c2_285, %c4_286, %c0_287] : memref<2x7x22x16xf32, #tpu.memory_space<vmem>>, vector<1x1x16x16xf32>
      %336 = vector.shape_cast %335 : vector<1x1x16x16xf32> to vector<16x16xf32>
      %337 = vector.broadcast %334 : f32 to vector<16x16xf32>
      %338 = arith.mulf %337, %336 : vector<16x16xf32>
      %339 = arith.addf %315, %338 : vector<16x16xf32>
      %c37 = arith.constant 37 : index
      %340 = memref.load %arg2[%c37] : memref<98xf32, #tpu.memory_space<smem>>
      %c0_288 = arith.constant 0 : index
      %c2_289 = arith.constant 2 : index
      %c5_290 = arith.constant 5 : index
      %c0_291 = arith.constant 0 : index
      %341 = vector.load %arg8[%c0_288, %c2_289, %c5_290, %c0_291] : memref<2x7x22x16xf32, #tpu.memory_space<vmem>>, vector<1x1x16x16xf32>
      %342 = vector.shape_cast %341 : vector<1x1x16x16xf32> to vector<16x16xf32>
      %343 = vector.broadcast %340 : f32 to vector<16x16xf32>
      %344 = arith.mulf %343, %342 : vector<16x16xf32>
      %345 = arith.addf %321, %344 : vector<16x16xf32>
      %c44 = arith.constant 44 : index
      %346 = memref.load %arg2[%c44] : memref<98xf32, #tpu.memory_space<smem>>
      %c0_292 = arith.constant 0 : index
      %c2_293 = arith.constant 2 : index
      %c6_294 = arith.constant 6 : index
      %c0_295 = arith.constant 0 : index
      %347 = vector.load %arg8[%c0_292, %c2_293, %c6_294, %c0_295] : memref<2x7x22x16xf32, #tpu.memory_space<vmem>>, vector<1x1x16x16xf32>
      %348 = vector.shape_cast %347 : vector<1x1x16x16xf32> to vector<16x16xf32>
      %349 = vector.broadcast %346 : f32 to vector<16x16xf32>
      %350 = arith.mulf %349, %348 : vector<16x16xf32>
      %351 = arith.addf %327, %350 : vector<16x16xf32>
      %c3_296 = arith.constant 3 : index
      %352 = memref.load %arg2[%c3_296] : memref<98xf32, #tpu.memory_space<smem>>
      %c0_297 = arith.constant 0 : index
      %c3_298 = arith.constant 3 : index
      %c0_299 = arith.constant 0 : index
      %c0_300 = arith.constant 0 : index
      %353 = vector.load %arg8[%c0_297, %c3_298, %c0_299, %c0_300] : memref<2x7x22x16xf32, #tpu.memory_space<vmem>>, vector<1x1x16x16xf32>
      %354 = vector.shape_cast %353 : vector<1x1x16x16xf32> to vector<16x16xf32>
      %355 = vector.broadcast %352 : f32 to vector<16x16xf32>
      %356 = arith.mulf %355, %354 : vector<16x16xf32>
      %357 = arith.addf %333, %356 : vector<16x16xf32>
      %c10_301 = arith.constant 10 : index
      %358 = memref.load %arg2[%c10_301] : memref<98xf32, #tpu.memory_space<smem>>
      %c0_302 = arith.constant 0 : index
      %c3_303 = arith.constant 3 : index
      %c1_304 = arith.constant 1 : index
      %c0_305 = arith.constant 0 : index
      %359 = vector.load %arg8[%c0_302, %c3_303, %c1_304, %c0_305] : memref<2x7x22x16xf32, #tpu.memory_space<vmem>>, vector<1x1x16x16xf32>
      %360 = vector.shape_cast %359 : vector<1x1x16x16xf32> to vector<16x16xf32>
      %361 = vector.broadcast %358 : f32 to vector<16x16xf32>
      %362 = arith.mulf %361, %360 : vector<16x16xf32>
      %363 = arith.addf %339, %362 : vector<16x16xf32>
      %c17_306 = arith.constant 17 : index
      %364 = memref.load %arg2[%c17_306] : memref<98xf32, #tpu.memory_space<smem>>
      %c0_307 = arith.constant 0 : index
      %c3_308 = arith.constant 3 : index
      %c2_309 = arith.constant 2 : index
      %c0_310 = arith.constant 0 : index
      %365 = vector.load %arg8[%c0_307, %c3_308, %c2_309, %c0_310] : memref<2x7x22x16xf32, #tpu.memory_space<vmem>>, vector<1x1x16x16xf32>
      %366 = vector.shape_cast %365 : vector<1x1x16x16xf32> to vector<16x16xf32>
      %367 = vector.broadcast %364 : f32 to vector<16x16xf32>
      %368 = arith.mulf %367, %366 : vector<16x16xf32>
      %369 = arith.addf %345, %368 : vector<16x16xf32>
      %c24 = arith.constant 24 : index
      %370 = memref.load %arg2[%c24] : memref<98xf32, #tpu.memory_space<smem>>
      %c0_311 = arith.constant 0 : index
      %c3_312 = arith.constant 3 : index
      %c3_313 = arith.constant 3 : index
      %c0_314 = arith.constant 0 : index
      %371 = vector.load %arg8[%c0_311, %c3_312, %c3_313, %c0_314] : memref<2x7x22x16xf32, #tpu.memory_space<vmem>>, vector<1x1x16x16xf32>
      %372 = vector.shape_cast %371 : vector<1x1x16x16xf32> to vector<16x16xf32>
      %373 = vector.broadcast %370 : f32 to vector<16x16xf32>
      %374 = arith.mulf %373, %372 : vector<16x16xf32>
      %375 = arith.addf %351, %374 : vector<16x16xf32>
      %c31 = arith.constant 31 : index
      %376 = memref.load %arg2[%c31] : memref<98xf32, #tpu.memory_space<smem>>
      %c0_315 = arith.constant 0 : index
      %c3_316 = arith.constant 3 : index
      %c4_317 = arith.constant 4 : index
      %c0_318 = arith.constant 0 : index
      %377 = vector.load %arg8[%c0_315, %c3_316, %c4_317, %c0_318] : memref<2x7x22x16xf32, #tpu.memory_space<vmem>>, vector<1x1x16x16xf32>
      %378 = vector.shape_cast %377 : vector<1x1x16x16xf32> to vector<16x16xf32>
      %379 = vector.broadcast %376 : f32 to vector<16x16xf32>
      %380 = arith.mulf %379, %378 : vector<16x16xf32>
      %381 = arith.addf %357, %380 : vector<16x16xf32>
      %c38 = arith.constant 38 : index
      %382 = memref.load %arg2[%c38] : memref<98xf32, #tpu.memory_space<smem>>
      %c0_319 = arith.constant 0 : index
      %c3_320 = arith.constant 3 : index
      %c5_321 = arith.constant 5 : index
      %c0_322 = arith.constant 0 : index
      %383 = vector.load %arg8[%c0_319, %c3_320, %c5_321, %c0_322] : memref<2x7x22x16xf32, #tpu.memory_space<vmem>>, vector<1x1x16x16xf32>
      %384 = vector.shape_cast %383 : vector<1x1x16x16xf32> to vector<16x16xf32>
      %385 = vector.broadcast %382 : f32 to vector<16x16xf32>
      %386 = arith.mulf %385, %384 : vector<16x16xf32>
      %387 = arith.addf %363, %386 : vector<16x16xf32>
      %c45 = arith.constant 45 : index
      %388 = memref.load %arg2[%c45] : memref<98xf32, #tpu.memory_space<smem>>
      %c0_323 = arith.constant 0 : index
      %c3_324 = arith.constant 3 : index
      %c6_325 = arith.constant 6 : index
      %c0_326 = arith.constant 0 : index
      %389 = vector.load %arg8[%c0_323, %c3_324, %c6_325, %c0_326] : memref<2x7x22x16xf32, #tpu.memory_space<vmem>>, vector<1x1x16x16xf32>
      %390 = vector.shape_cast %389 : vector<1x1x16x16xf32> to vector<16x16xf32>
      %391 = vector.broadcast %388 : f32 to vector<16x16xf32>
      %392 = arith.mulf %391, %390 : vector<16x16xf32>
      %393 = arith.addf %369, %392 : vector<16x16xf32>
      %c4_327 = arith.constant 4 : index
      %394 = memref.load %arg2[%c4_327] : memref<98xf32, #tpu.memory_space<smem>>
      %c0_328 = arith.constant 0 : index
      %c4_329 = arith.constant 4 : index
      %c0_330 = arith.constant 0 : index
      %c0_331 = arith.constant 0 : index
      %395 = vector.load %arg8[%c0_328, %c4_329, %c0_330, %c0_331] : memref<2x7x22x16xf32, #tpu.memory_space<vmem>>, vector<1x1x16x16xf32>
      %396 = vector.shape_cast %395 : vector<1x1x16x16xf32> to vector<16x16xf32>
      %397 = vector.broadcast %394 : f32 to vector<16x16xf32>
      %398 = arith.mulf %397, %396 : vector<16x16xf32>
      %399 = arith.addf %375, %398 : vector<16x16xf32>
      %c11_332 = arith.constant 11 : index
      %400 = memref.load %arg2[%c11_332] : memref<98xf32, #tpu.memory_space<smem>>
      %c0_333 = arith.constant 0 : index
      %c4_334 = arith.constant 4 : index
      %c1_335 = arith.constant 1 : index
      %c0_336 = arith.constant 0 : index
      %401 = vector.load %arg8[%c0_333, %c4_334, %c1_335, %c0_336] : memref<2x7x22x16xf32, #tpu.memory_space<vmem>>, vector<1x1x16x16xf32>
      %402 = vector.shape_cast %401 : vector<1x1x16x16xf32> to vector<16x16xf32>
      %403 = vector.broadcast %400 : f32 to vector<16x16xf32>
      %404 = arith.mulf %403, %402 : vector<16x16xf32>
      %405 = arith.addf %381, %404 : vector<16x16xf32>
      %c18_337 = arith.constant 18 : index
      %406 = memref.load %arg2[%c18_337] : memref<98xf32, #tpu.memory_space<smem>>
      %c0_338 = arith.constant 0 : index
      %c4_339 = arith.constant 4 : index
      %c2_340 = arith.constant 2 : index
      %c0_341 = arith.constant 0 : index
      %407 = vector.load %arg8[%c0_338, %c4_339, %c2_340, %c0_341] : memref<2x7x22x16xf32, #tpu.memory_space<vmem>>, vector<1x1x16x16xf32>
      %408 = vector.shape_cast %407 : vector<1x1x16x16xf32> to vector<16x16xf32>
      %409 = vector.broadcast %406 : f32 to vector<16x16xf32>
      %410 = arith.mulf %409, %408 : vector<16x16xf32>
      %411 = arith.addf %387, %410 : vector<16x16xf32>
      %c25 = arith.constant 25 : index
      %412 = memref.load %arg2[%c25] : memref<98xf32, #tpu.memory_space<smem>>
      %c0_342 = arith.constant 0 : index
      %c4_343 = arith.constant 4 : index
      %c3_344 = arith.constant 3 : index
      %c0_345 = arith.constant 0 : index
      %413 = vector.load %arg8[%c0_342, %c4_343, %c3_344, %c0_345] : memref<2x7x22x16xf32, #tpu.memory_space<vmem>>, vector<1x1x16x16xf32>
      %414 = vector.shape_cast %413 : vector<1x1x16x16xf32> to vector<16x16xf32>
      %415 = vector.broadcast %412 : f32 to vector<16x16xf32>
      %416 = arith.mulf %415, %414 : vector<16x16xf32>
      %417 = arith.addf %393, %416 : vector<16x16xf32>
      %c32 = arith.constant 32 : index
      %418 = memref.load %arg2[%c32] : memref<98xf32, #tpu.memory_space<smem>>
      %c0_346 = arith.constant 0 : index
      %c4_347 = arith.constant 4 : index
      %c4_348 = arith.constant 4 : index
      %c0_349 = arith.constant 0 : index
      %419 = vector.load %arg8[%c0_346, %c4_347, %c4_348, %c0_349] : memref<2x7x22x16xf32, #tpu.memory_space<vmem>>, vector<1x1x16x16xf32>
      %420 = vector.shape_cast %419 : vector<1x1x16x16xf32> to vector<16x16xf32>
      %421 = vector.broadcast %418 : f32 to vector<16x16xf32>
      %422 = arith.mulf %421, %420 : vector<16x16xf32>
      %423 = arith.addf %399, %422 : vector<16x16xf32>
      %c39 = arith.constant 39 : index
      %424 = memref.load %arg2[%c39] : memref<98xf32, #tpu.memory_space<smem>>
      %c0_350 = arith.constant 0 : index
      %c4_351 = arith.constant 4 : index
      %c5_352 = arith.constant 5 : index
      %c0_353 = arith.constant 0 : index
      %425 = vector.load %arg8[%c0_350, %c4_351, %c5_352, %c0_353] : memref<2x7x22x16xf32, #tpu.memory_space<vmem>>, vector<1x1x16x16xf32>
      %426 = vector.shape_cast %425 : vector<1x1x16x16xf32> to vector<16x16xf32>
      %427 = vector.broadcast %424 : f32 to vector<16x16xf32>
      %428 = arith.mulf %427, %426 : vector<16x16xf32>
      %429 = arith.addf %405, %428 : vector<16x16xf32>
      %c46 = arith.constant 46 : index
      %430 = memref.load %arg2[%c46] : memref<98xf32, #tpu.memory_space<smem>>
      %c0_354 = arith.constant 0 : index
      %c4_355 = arith.constant 4 : index
      %c6_356 = arith.constant 6 : index
      %c0_357 = arith.constant 0 : index
      %431 = vector.load %arg8[%c0_354, %c4_355, %c6_356, %c0_357] : memref<2x7x22x16xf32, #tpu.memory_space<vmem>>, vector<1x1x16x16xf32>
      %432 = vector.shape_cast %431 : vector<1x1x16x16xf32> to vector<16x16xf32>
      %433 = vector.broadcast %430 : f32 to vector<16x16xf32>
      %434 = arith.mulf %433, %432 : vector<16x16xf32>
      %435 = arith.addf %411, %434 : vector<16x16xf32>
      %c5_358 = arith.constant 5 : index
      %436 = memref.load %arg2[%c5_358] : memref<98xf32, #tpu.memory_space<smem>>
      %c0_359 = arith.constant 0 : index
      %c5_360 = arith.constant 5 : index
      %c0_361 = arith.constant 0 : index
      %c0_362 = arith.constant 0 : index
      %437 = vector.load %arg8[%c0_359, %c5_360, %c0_361, %c0_362] : memref<2x7x22x16xf32, #tpu.memory_space<vmem>>, vector<1x1x16x16xf32>
      %438 = vector.shape_cast %437 : vector<1x1x16x16xf32> to vector<16x16xf32>
      %439 = vector.broadcast %436 : f32 to vector<16x16xf32>
      %440 = arith.mulf %439, %438 : vector<16x16xf32>
      %441 = arith.addf %417, %440 : vector<16x16xf32>
      %c12_363 = arith.constant 12 : index
      %442 = memref.load %arg2[%c12_363] : memref<98xf32, #tpu.memory_space<smem>>
      %c0_364 = arith.constant 0 : index
      %c5_365 = arith.constant 5 : index
      %c1_366 = arith.constant 1 : index
      %c0_367 = arith.constant 0 : index
      %443 = vector.load %arg8[%c0_364, %c5_365, %c1_366, %c0_367] : memref<2x7x22x16xf32, #tpu.memory_space<vmem>>, vector<1x1x16x16xf32>
      %444 = vector.shape_cast %443 : vector<1x1x16x16xf32> to vector<16x16xf32>
      %445 = vector.broadcast %442 : f32 to vector<16x16xf32>
      %446 = arith.mulf %445, %444 : vector<16x16xf32>
      %447 = arith.addf %423, %446 : vector<16x16xf32>
      %c19 = arith.constant 19 : index
      %448 = memref.load %arg2[%c19] : memref<98xf32, #tpu.memory_space<smem>>
      %c0_368 = arith.constant 0 : index
      %c5_369 = arith.constant 5 : index
      %c2_370 = arith.constant 2 : index
      %c0_371 = arith.constant 0 : index
      %449 = vector.load %arg8[%c0_368, %c5_369, %c2_370, %c0_371] : memref<2x7x22x16xf32, #tpu.memory_space<vmem>>, vector<1x1x16x16xf32>
      %450 = vector.shape_cast %449 : vector<1x1x16x16xf32> to vector<16x16xf32>
      %451 = vector.broadcast %448 : f32 to vector<16x16xf32>
      %452 = arith.mulf %451, %450 : vector<16x16xf32>
      %453 = arith.addf %429, %452 : vector<16x16xf32>
      %c26 = arith.constant 26 : index
      %454 = memref.load %arg2[%c26] : memref<98xf32, #tpu.memory_space<smem>>
      %c0_372 = arith.constant 0 : index
      %c5_373 = arith.constant 5 : index
      %c3_374 = arith.constant 3 : index
      %c0_375 = arith.constant 0 : index
      %455 = vector.load %arg8[%c0_372, %c5_373, %c3_374, %c0_375] : memref<2x7x22x16xf32, #tpu.memory_space<vmem>>, vector<1x1x16x16xf32>
      %456 = vector.shape_cast %455 : vector<1x1x16x16xf32> to vector<16x16xf32>
      %457 = vector.broadcast %454 : f32 to vector<16x16xf32>
      %458 = arith.mulf %457, %456 : vector<16x16xf32>
      %459 = arith.addf %435, %458 : vector<16x16xf32>
      %c33 = arith.constant 33 : index
      %460 = memref.load %arg2[%c33] : memref<98xf32, #tpu.memory_space<smem>>
      %c0_376 = arith.constant 0 : index
      %c5_377 = arith.constant 5 : index
      %c4_378 = arith.constant 4 : index
      %c0_379 = arith.constant 0 : index
      %461 = vector.load %arg8[%c0_376, %c5_377, %c4_378, %c0_379] : memref<2x7x22x16xf32, #tpu.memory_space<vmem>>, vector<1x1x16x16xf32>
      %462 = vector.shape_cast %461 : vector<1x1x16x16xf32> to vector<16x16xf32>
      %463 = vector.broadcast %460 : f32 to vector<16x16xf32>
      %464 = arith.mulf %463, %462 : vector<16x16xf32>
      %465 = arith.addf %441, %464 : vector<16x16xf32>
      %c40 = arith.constant 40 : index
      %466 = memref.load %arg2[%c40] : memref<98xf32, #tpu.memory_space<smem>>
      %c0_380 = arith.constant 0 : index
      %c5_381 = arith.constant 5 : index
      %c5_382 = arith.constant 5 : index
      %c0_383 = arith.constant 0 : index
      %467 = vector.load %arg8[%c0_380, %c5_381, %c5_382, %c0_383] : memref<2x7x22x16xf32, #tpu.memory_space<vmem>>, vector<1x1x16x16xf32>
      %468 = vector.shape_cast %467 : vector<1x1x16x16xf32> to vector<16x16xf32>
      %469 = vector.broadcast %466 : f32 to vector<16x16xf32>
      %470 = arith.mulf %469, %468 : vector<16x16xf32>
      %471 = arith.addf %447, %470 : vector<16x16xf32>
      %c47 = arith.constant 47 : index
      %472 = memref.load %arg2[%c47] : memref<98xf32, #tpu.memory_space<smem>>
      %c0_384 = arith.constant 0 : index
      %c5_385 = arith.constant 5 : index
      %c6_386 = arith.constant 6 : index
      %c0_387 = arith.constant 0 : index
      %473 = vector.load %arg8[%c0_384, %c5_385, %c6_386, %c0_387] : memref<2x7x22x16xf32, #tpu.memory_space<vmem>>, vector<1x1x16x16xf32>
      %474 = vector.shape_cast %473 : vector<1x1x16x16xf32> to vector<16x16xf32>
      %475 = vector.broadcast %472 : f32 to vector<16x16xf32>
      %476 = arith.mulf %475, %474 : vector<16x16xf32>
      %477 = arith.addf %453, %476 : vector<16x16xf32>
      %c6_388 = arith.constant 6 : index
      %478 = memref.load %arg2[%c6_388] : memref<98xf32, #tpu.memory_space<smem>>
      %c0_389 = arith.constant 0 : index
      %c6_390 = arith.constant 6 : index
      %c0_391 = arith.constant 0 : index
      %c0_392 = arith.constant 0 : index
      %479 = vector.load %arg8[%c0_389, %c6_390, %c0_391, %c0_392] : memref<2x7x22x16xf32, #tpu.memory_space<vmem>>, vector<1x1x16x16xf32>
      %480 = vector.shape_cast %479 : vector<1x1x16x16xf32> to vector<16x16xf32>
      %481 = vector.broadcast %478 : f32 to vector<16x16xf32>
      %482 = arith.mulf %481, %480 : vector<16x16xf32>
      %483 = arith.addf %459, %482 : vector<16x16xf32>
      %c13_393 = arith.constant 13 : index
      %484 = memref.load %arg2[%c13_393] : memref<98xf32, #tpu.memory_space<smem>>
      %c0_394 = arith.constant 0 : index
      %c6_395 = arith.constant 6 : index
      %c1_396 = arith.constant 1 : index
      %c0_397 = arith.constant 0 : index
      %485 = vector.load %arg8[%c0_394, %c6_395, %c1_396, %c0_397] : memref<2x7x22x16xf32, #tpu.memory_space<vmem>>, vector<1x1x16x16xf32>
      %486 = vector.shape_cast %485 : vector<1x1x16x16xf32> to vector<16x16xf32>
      %487 = vector.broadcast %484 : f32 to vector<16x16xf32>
      %488 = arith.mulf %487, %486 : vector<16x16xf32>
      %489 = arith.addf %465, %488 : vector<16x16xf32>
      %c20 = arith.constant 20 : index
      %490 = memref.load %arg2[%c20] : memref<98xf32, #tpu.memory_space<smem>>
      %c0_398 = arith.constant 0 : index
      %c6_399 = arith.constant 6 : index
      %c2_400 = arith.constant 2 : index
      %c0_401 = arith.constant 0 : index
      %491 = vector.load %arg8[%c0_398, %c6_399, %c2_400, %c0_401] : memref<2x7x22x16xf32, #tpu.memory_space<vmem>>, vector<1x1x16x16xf32>
      %492 = vector.shape_cast %491 : vector<1x1x16x16xf32> to vector<16x16xf32>
      %493 = vector.broadcast %490 : f32 to vector<16x16xf32>
      %494 = arith.mulf %493, %492 : vector<16x16xf32>
      %495 = arith.addf %471, %494 : vector<16x16xf32>
      %c27 = arith.constant 27 : index
      %496 = memref.load %arg2[%c27] : memref<98xf32, #tpu.memory_space<smem>>
      %c0_402 = arith.constant 0 : index
      %c6_403 = arith.constant 6 : index
      %c3_404 = arith.constant 3 : index
      %c0_405 = arith.constant 0 : index
      %497 = vector.load %arg8[%c0_402, %c6_403, %c3_404, %c0_405] : memref<2x7x22x16xf32, #tpu.memory_space<vmem>>, vector<1x1x16x16xf32>
      %498 = vector.shape_cast %497 : vector<1x1x16x16xf32> to vector<16x16xf32>
      %499 = vector.broadcast %496 : f32 to vector<16x16xf32>
      %500 = arith.mulf %499, %498 : vector<16x16xf32>
      %501 = arith.addf %477, %500 : vector<16x16xf32>
      %c34 = arith.constant 34 : index
      %502 = memref.load %arg2[%c34] : memref<98xf32, #tpu.memory_space<smem>>
      %c0_406 = arith.constant 0 : index
      %c6_407 = arith.constant 6 : index
      %c4_408 = arith.constant 4 : index
      %c0_409 = arith.constant 0 : index
      %503 = vector.load %arg8[%c0_406, %c6_407, %c4_408, %c0_409] : memref<2x7x22x16xf32, #tpu.memory_space<vmem>>, vector<1x1x16x16xf32>
      %504 = vector.shape_cast %503 : vector<1x1x16x16xf32> to vector<16x16xf32>
      %505 = vector.broadcast %502 : f32 to vector<16x16xf32>
      %506 = arith.mulf %505, %504 : vector<16x16xf32>
      %507 = arith.addf %483, %506 : vector<16x16xf32>
      %c41 = arith.constant 41 : index
      %508 = memref.load %arg2[%c41] : memref<98xf32, #tpu.memory_space<smem>>
      %c0_410 = arith.constant 0 : index
      %c6_411 = arith.constant 6 : index
      %c5_412 = arith.constant 5 : index
      %c0_413 = arith.constant 0 : index
      %509 = vector.load %arg8[%c0_410, %c6_411, %c5_412, %c0_413] : memref<2x7x22x16xf32, #tpu.memory_space<vmem>>, vector<1x1x16x16xf32>
      %510 = vector.shape_cast %509 : vector<1x1x16x16xf32> to vector<16x16xf32>
      %511 = vector.broadcast %508 : f32 to vector<16x16xf32>
      %512 = arith.mulf %511, %510 : vector<16x16xf32>
      %513 = arith.addf %489, %512 : vector<16x16xf32>
      %c48 = arith.constant 48 : index
      %514 = memref.load %arg2[%c48] : memref<98xf32, #tpu.memory_space<smem>>
      %c0_414 = arith.constant 0 : index
      %c6_415 = arith.constant 6 : index
      %c6_416 = arith.constant 6 : index
      %c0_417 = arith.constant 0 : index
      %515 = vector.load %arg8[%c0_414, %c6_415, %c6_416, %c0_417] : memref<2x7x22x16xf32, #tpu.memory_space<vmem>>, vector<1x1x16x16xf32>
      %516 = vector.shape_cast %515 : vector<1x1x16x16xf32> to vector<16x16xf32>
      %517 = vector.broadcast %514 : f32 to vector<16x16xf32>
      %518 = arith.mulf %517, %516 : vector<16x16xf32>
      %519 = arith.addf %495, %518 : vector<16x16xf32>
      %c49 = arith.constant 49 : index
      %520 = memref.load %arg2[%c49] : memref<98xf32, #tpu.memory_space<smem>>
      %c1_418 = arith.constant 1 : index
      %c0_419 = arith.constant 0 : index
      %c0_420 = arith.constant 0 : index
      %c0_421 = arith.constant 0 : index
      %521 = vector.load %arg8[%c1_418, %c0_419, %c0_420, %c0_421] : memref<2x7x22x16xf32, #tpu.memory_space<vmem>>, vector<1x1x16x16xf32>
      %522 = vector.shape_cast %521 : vector<1x1x16x16xf32> to vector<16x16xf32>
      %523 = vector.broadcast %520 : f32 to vector<16x16xf32>
      %524 = arith.mulf %523, %522 : vector<16x16xf32>
      %525 = arith.addf %501, %524 : vector<16x16xf32>
      %c56 = arith.constant 56 : index
      %526 = memref.load %arg2[%c56] : memref<98xf32, #tpu.memory_space<smem>>
      %c1_422 = arith.constant 1 : index
      %c0_423 = arith.constant 0 : index
      %c1_424 = arith.constant 1 : index
      %c0_425 = arith.constant 0 : index
      %527 = vector.load %arg8[%c1_422, %c0_423, %c1_424, %c0_425] : memref<2x7x22x16xf32, #tpu.memory_space<vmem>>, vector<1x1x16x16xf32>
      %528 = vector.shape_cast %527 : vector<1x1x16x16xf32> to vector<16x16xf32>
      %529 = vector.broadcast %526 : f32 to vector<16x16xf32>
      %530 = arith.mulf %529, %528 : vector<16x16xf32>
      %531 = arith.addf %507, %530 : vector<16x16xf32>
      %c63 = arith.constant 63 : index
      %532 = memref.load %arg2[%c63] : memref<98xf32, #tpu.memory_space<smem>>
      %c1_426 = arith.constant 1 : index
      %c0_427 = arith.constant 0 : index
      %c2_428 = arith.constant 2 : index
      %c0_429 = arith.constant 0 : index
      %533 = vector.load %arg8[%c1_426, %c0_427, %c2_428, %c0_429] : memref<2x7x22x16xf32, #tpu.memory_space<vmem>>, vector<1x1x16x16xf32>
      %534 = vector.shape_cast %533 : vector<1x1x16x16xf32> to vector<16x16xf32>
      %535 = vector.broadcast %532 : f32 to vector<16x16xf32>
      %536 = arith.mulf %535, %534 : vector<16x16xf32>
      %537 = arith.addf %513, %536 : vector<16x16xf32>
      %c70 = arith.constant 70 : index
      %538 = memref.load %arg2[%c70] : memref<98xf32, #tpu.memory_space<smem>>
      %c1_430 = arith.constant 1 : index
      %c0_431 = arith.constant 0 : index
      %c3_432 = arith.constant 3 : index
      %c0_433 = arith.constant 0 : index
      %539 = vector.load %arg8[%c1_430, %c0_431, %c3_432, %c0_433] : memref<2x7x22x16xf32, #tpu.memory_space<vmem>>, vector<1x1x16x16xf32>
      %540 = vector.shape_cast %539 : vector<1x1x16x16xf32> to vector<16x16xf32>
      %541 = vector.broadcast %538 : f32 to vector<16x16xf32>
      %542 = arith.mulf %541, %540 : vector<16x16xf32>
      %543 = arith.addf %519, %542 : vector<16x16xf32>
      %c77 = arith.constant 77 : index
      %544 = memref.load %arg2[%c77] : memref<98xf32, #tpu.memory_space<smem>>
      %c1_434 = arith.constant 1 : index
      %c0_435 = arith.constant 0 : index
      %c4_436 = arith.constant 4 : index
      %c0_437 = arith.constant 0 : index
      %545 = vector.load %arg8[%c1_434, %c0_435, %c4_436, %c0_437] : memref<2x7x22x16xf32, #tpu.memory_space<vmem>>, vector<1x1x16x16xf32>
      %546 = vector.shape_cast %545 : vector<1x1x16x16xf32> to vector<16x16xf32>
      %547 = vector.broadcast %544 : f32 to vector<16x16xf32>
      %548 = arith.mulf %547, %546 : vector<16x16xf32>
      %549 = arith.addf %525, %548 : vector<16x16xf32>
      %c84 = arith.constant 84 : index
      %550 = memref.load %arg2[%c84] : memref<98xf32, #tpu.memory_space<smem>>
      %c1_438 = arith.constant 1 : index
      %c0_439 = arith.constant 0 : index
      %c5_440 = arith.constant 5 : index
      %c0_441 = arith.constant 0 : index
      %551 = vector.load %arg8[%c1_438, %c0_439, %c5_440, %c0_441] : memref<2x7x22x16xf32, #tpu.memory_space<vmem>>, vector<1x1x16x16xf32>
      %552 = vector.shape_cast %551 : vector<1x1x16x16xf32> to vector<16x16xf32>
      %553 = vector.broadcast %550 : f32 to vector<16x16xf32>
      %554 = arith.mulf %553, %552 : vector<16x16xf32>
      %555 = arith.addf %531, %554 : vector<16x16xf32>
      %c91 = arith.constant 91 : index
      %556 = memref.load %arg2[%c91] : memref<98xf32, #tpu.memory_space<smem>>
      %c1_442 = arith.constant 1 : index
      %c0_443 = arith.constant 0 : index
      %c6_444 = arith.constant 6 : index
      %c0_445 = arith.constant 0 : index
      %557 = vector.load %arg8[%c1_442, %c0_443, %c6_444, %c0_445] : memref<2x7x22x16xf32, #tpu.memory_space<vmem>>, vector<1x1x16x16xf32>
      %558 = vector.shape_cast %557 : vector<1x1x16x16xf32> to vector<16x16xf32>
      %559 = vector.broadcast %556 : f32 to vector<16x16xf32>
      %560 = arith.mulf %559, %558 : vector<16x16xf32>
      %561 = arith.addf %537, %560 : vector<16x16xf32>
      %c50 = arith.constant 50 : index
      %562 = memref.load %arg2[%c50] : memref<98xf32, #tpu.memory_space<smem>>
      %c1_446 = arith.constant 1 : index
      %c1_447 = arith.constant 1 : index
      %c0_448 = arith.constant 0 : index
      %c0_449 = arith.constant 0 : index
      %563 = vector.load %arg8[%c1_446, %c1_447, %c0_448, %c0_449] : memref<2x7x22x16xf32, #tpu.memory_space<vmem>>, vector<1x1x16x16xf32>
      %564 = vector.shape_cast %563 : vector<1x1x16x16xf32> to vector<16x16xf32>
      %565 = vector.broadcast %562 : f32 to vector<16x16xf32>
      %566 = arith.mulf %565, %564 : vector<16x16xf32>
      %567 = arith.addf %543, %566 : vector<16x16xf32>
      %c57 = arith.constant 57 : index
      %568 = memref.load %arg2[%c57] : memref<98xf32, #tpu.memory_space<smem>>
      %c1_450 = arith.constant 1 : index
      %c1_451 = arith.constant 1 : index
      %c1_452 = arith.constant 1 : index
      %c0_453 = arith.constant 0 : index
      %569 = vector.load %arg8[%c1_450, %c1_451, %c1_452, %c0_453] : memref<2x7x22x16xf32, #tpu.memory_space<vmem>>, vector<1x1x16x16xf32>
      %570 = vector.shape_cast %569 : vector<1x1x16x16xf32> to vector<16x16xf32>
      %571 = vector.broadcast %568 : f32 to vector<16x16xf32>
      %572 = arith.mulf %571, %570 : vector<16x16xf32>
      %573 = arith.addf %549, %572 : vector<16x16xf32>
      %c64 = arith.constant 64 : index
      %574 = memref.load %arg2[%c64] : memref<98xf32, #tpu.memory_space<smem>>
      %c1_454 = arith.constant 1 : index
      %c1_455 = arith.constant 1 : index
      %c2_456 = arith.constant 2 : index
      %c0_457 = arith.constant 0 : index
      %575 = vector.load %arg8[%c1_454, %c1_455, %c2_456, %c0_457] : memref<2x7x22x16xf32, #tpu.memory_space<vmem>>, vector<1x1x16x16xf32>
      %576 = vector.shape_cast %575 : vector<1x1x16x16xf32> to vector<16x16xf32>
      %577 = vector.broadcast %574 : f32 to vector<16x16xf32>
      %578 = arith.mulf %577, %576 : vector<16x16xf32>
      %579 = arith.addf %555, %578 : vector<16x16xf32>
      %c71 = arith.constant 71 : index
      %580 = memref.load %arg2[%c71] : memref<98xf32, #tpu.memory_space<smem>>
      %c1_458 = arith.constant 1 : index
      %c1_459 = arith.constant 1 : index
      %c3_460 = arith.constant 3 : index
      %c0_461 = arith.constant 0 : index
      %581 = vector.load %arg8[%c1_458, %c1_459, %c3_460, %c0_461] : memref<2x7x22x16xf32, #tpu.memory_space<vmem>>, vector<1x1x16x16xf32>
      %582 = vector.shape_cast %581 : vector<1x1x16x16xf32> to vector<16x16xf32>
      %583 = vector.broadcast %580 : f32 to vector<16x16xf32>
      %584 = arith.mulf %583, %582 : vector<16x16xf32>
      %585 = arith.addf %561, %584 : vector<16x16xf32>
      %c78 = arith.constant 78 : index
      %586 = memref.load %arg2[%c78] : memref<98xf32, #tpu.memory_space<smem>>
      %c1_462 = arith.constant 1 : index
      %c1_463 = arith.constant 1 : index
      %c4_464 = arith.constant 4 : index
      %c0_465 = arith.constant 0 : index
      %587 = vector.load %arg8[%c1_462, %c1_463, %c4_464, %c0_465] : memref<2x7x22x16xf32, #tpu.memory_space<vmem>>, vector<1x1x16x16xf32>
      %588 = vector.shape_cast %587 : vector<1x1x16x16xf32> to vector<16x16xf32>
      %589 = vector.broadcast %586 : f32 to vector<16x16xf32>
      %590 = arith.mulf %589, %588 : vector<16x16xf32>
      %591 = arith.addf %567, %590 : vector<16x16xf32>
      %c85 = arith.constant 85 : index
      %592 = memref.load %arg2[%c85] : memref<98xf32, #tpu.memory_space<smem>>
      %c1_466 = arith.constant 1 : index
      %c1_467 = arith.constant 1 : index
      %c5_468 = arith.constant 5 : index
      %c0_469 = arith.constant 0 : index
      %593 = vector.load %arg8[%c1_466, %c1_467, %c5_468, %c0_469] : memref<2x7x22x16xf32, #tpu.memory_space<vmem>>, vector<1x1x16x16xf32>
      %594 = vector.shape_cast %593 : vector<1x1x16x16xf32> to vector<16x16xf32>
      %595 = vector.broadcast %592 : f32 to vector<16x16xf32>
      %596 = arith.mulf %595, %594 : vector<16x16xf32>
      %597 = arith.addf %573, %596 : vector<16x16xf32>
      %c92 = arith.constant 92 : index
      %598 = memref.load %arg2[%c92] : memref<98xf32, #tpu.memory_space<smem>>
      %c1_470 = arith.constant 1 : index
      %c1_471 = arith.constant 1 : index
      %c6_472 = arith.constant 6 : index
      %c0_473 = arith.constant 0 : index
      %599 = vector.load %arg8[%c1_470, %c1_471, %c6_472, %c0_473] : memref<2x7x22x16xf32, #tpu.memory_space<vmem>>, vector<1x1x16x16xf32>
      %600 = vector.shape_cast %599 : vector<1x1x16x16xf32> to vector<16x16xf32>
      %601 = vector.broadcast %598 : f32 to vector<16x16xf32>
      %602 = arith.mulf %601, %600 : vector<16x16xf32>
      %603 = arith.addf %579, %602 : vector<16x16xf32>
      %c51 = arith.constant 51 : index
      %604 = memref.load %arg2[%c51] : memref<98xf32, #tpu.memory_space<smem>>
      %c1_474 = arith.constant 1 : index
      %c2_475 = arith.constant 2 : index
      %c0_476 = arith.constant 0 : index
      %c0_477 = arith.constant 0 : index
      %605 = vector.load %arg8[%c1_474, %c2_475, %c0_476, %c0_477] : memref<2x7x22x16xf32, #tpu.memory_space<vmem>>, vector<1x1x16x16xf32>
      %606 = vector.shape_cast %605 : vector<1x1x16x16xf32> to vector<16x16xf32>
      %607 = vector.broadcast %604 : f32 to vector<16x16xf32>
      %608 = arith.mulf %607, %606 : vector<16x16xf32>
      %609 = arith.addf %585, %608 : vector<16x16xf32>
      %c58 = arith.constant 58 : index
      %610 = memref.load %arg2[%c58] : memref<98xf32, #tpu.memory_space<smem>>
      %c1_478 = arith.constant 1 : index
      %c2_479 = arith.constant 2 : index
      %c1_480 = arith.constant 1 : index
      %c0_481 = arith.constant 0 : index
      %611 = vector.load %arg8[%c1_478, %c2_479, %c1_480, %c0_481] : memref<2x7x22x16xf32, #tpu.memory_space<vmem>>, vector<1x1x16x16xf32>
      %612 = vector.shape_cast %611 : vector<1x1x16x16xf32> to vector<16x16xf32>
      %613 = vector.broadcast %610 : f32 to vector<16x16xf32>
      %614 = arith.mulf %613, %612 : vector<16x16xf32>
      %615 = arith.addf %591, %614 : vector<16x16xf32>
      %c65 = arith.constant 65 : index
      %616 = memref.load %arg2[%c65] : memref<98xf32, #tpu.memory_space<smem>>
      %c1_482 = arith.constant 1 : index
      %c2_483 = arith.constant 2 : index
      %c2_484 = arith.constant 2 : index
      %c0_485 = arith.constant 0 : index
      %617 = vector.load %arg8[%c1_482, %c2_483, %c2_484, %c0_485] : memref<2x7x22x16xf32, #tpu.memory_space<vmem>>, vector<1x1x16x16xf32>
      %618 = vector.shape_cast %617 : vector<1x1x16x16xf32> to vector<16x16xf32>
      %619 = vector.broadcast %616 : f32 to vector<16x16xf32>
      %620 = arith.mulf %619, %618 : vector<16x16xf32>
      %621 = arith.addf %597, %620 : vector<16x16xf32>
      %c72 = arith.constant 72 : index
      %622 = memref.load %arg2[%c72] : memref<98xf32, #tpu.memory_space<smem>>
      %c1_486 = arith.constant 1 : index
      %c2_487 = arith.constant 2 : index
      %c3_488 = arith.constant 3 : index
      %c0_489 = arith.constant 0 : index
      %623 = vector.load %arg8[%c1_486, %c2_487, %c3_488, %c0_489] : memref<2x7x22x16xf32, #tpu.memory_space<vmem>>, vector<1x1x16x16xf32>
      %624 = vector.shape_cast %623 : vector<1x1x16x16xf32> to vector<16x16xf32>
      %625 = vector.broadcast %622 : f32 to vector<16x16xf32>
      %626 = arith.mulf %625, %624 : vector<16x16xf32>
      %627 = arith.addf %603, %626 : vector<16x16xf32>
      %c79 = arith.constant 79 : index
      %628 = memref.load %arg2[%c79] : memref<98xf32, #tpu.memory_space<smem>>
      %c1_490 = arith.constant 1 : index
      %c2_491 = arith.constant 2 : index
      %c4_492 = arith.constant 4 : index
      %c0_493 = arith.constant 0 : index
      %629 = vector.load %arg8[%c1_490, %c2_491, %c4_492, %c0_493] : memref<2x7x22x16xf32, #tpu.memory_space<vmem>>, vector<1x1x16x16xf32>
      %630 = vector.shape_cast %629 : vector<1x1x16x16xf32> to vector<16x16xf32>
      %631 = vector.broadcast %628 : f32 to vector<16x16xf32>
      %632 = arith.mulf %631, %630 : vector<16x16xf32>
      %633 = arith.addf %609, %632 : vector<16x16xf32>
      %c86 = arith.constant 86 : index
      %634 = memref.load %arg2[%c86] : memref<98xf32, #tpu.memory_space<smem>>
      %c1_494 = arith.constant 1 : index
      %c2_495 = arith.constant 2 : index
      %c5_496 = arith.constant 5 : index
      %c0_497 = arith.constant 0 : index
      %635 = vector.load %arg8[%c1_494, %c2_495, %c5_496, %c0_497] : memref<2x7x22x16xf32, #tpu.memory_space<vmem>>, vector<1x1x16x16xf32>
      %636 = vector.shape_cast %635 : vector<1x1x16x16xf32> to vector<16x16xf32>
      %637 = vector.broadcast %634 : f32 to vector<16x16xf32>
      %638 = arith.mulf %637, %636 : vector<16x16xf32>
      %639 = arith.addf %615, %638 : vector<16x16xf32>
      %c93 = arith.constant 93 : index
      %640 = memref.load %arg2[%c93] : memref<98xf32, #tpu.memory_space<smem>>
      %c1_498 = arith.constant 1 : index
      %c2_499 = arith.constant 2 : index
      %c6_500 = arith.constant 6 : index
      %c0_501 = arith.constant 0 : index
      %641 = vector.load %arg8[%c1_498, %c2_499, %c6_500, %c0_501] : memref<2x7x22x16xf32, #tpu.memory_space<vmem>>, vector<1x1x16x16xf32>
      %642 = vector.shape_cast %641 : vector<1x1x16x16xf32> to vector<16x16xf32>
      %643 = vector.broadcast %640 : f32 to vector<16x16xf32>
      %644 = arith.mulf %643, %642 : vector<16x16xf32>
      %645 = arith.addf %621, %644 : vector<16x16xf32>
      %c52 = arith.constant 52 : index
      %646 = memref.load %arg2[%c52] : memref<98xf32, #tpu.memory_space<smem>>
      %c1_502 = arith.constant 1 : index
      %c3_503 = arith.constant 3 : index
      %c0_504 = arith.constant 0 : index
      %c0_505 = arith.constant 0 : index
      %647 = vector.load %arg8[%c1_502, %c3_503, %c0_504, %c0_505] : memref<2x7x22x16xf32, #tpu.memory_space<vmem>>, vector<1x1x16x16xf32>
      %648 = vector.shape_cast %647 : vector<1x1x16x16xf32> to vector<16x16xf32>
      %649 = vector.broadcast %646 : f32 to vector<16x16xf32>
      %650 = arith.mulf %649, %648 : vector<16x16xf32>
      %651 = arith.addf %627, %650 : vector<16x16xf32>
      %c59 = arith.constant 59 : index
      %652 = memref.load %arg2[%c59] : memref<98xf32, #tpu.memory_space<smem>>
      %c1_506 = arith.constant 1 : index
      %c3_507 = arith.constant 3 : index
      %c1_508 = arith.constant 1 : index
      %c0_509 = arith.constant 0 : index
      %653 = vector.load %arg8[%c1_506, %c3_507, %c1_508, %c0_509] : memref<2x7x22x16xf32, #tpu.memory_space<vmem>>, vector<1x1x16x16xf32>
      %654 = vector.shape_cast %653 : vector<1x1x16x16xf32> to vector<16x16xf32>
      %655 = vector.broadcast %652 : f32 to vector<16x16xf32>
      %656 = arith.mulf %655, %654 : vector<16x16xf32>
      %657 = arith.addf %633, %656 : vector<16x16xf32>
      %c66 = arith.constant 66 : index
      %658 = memref.load %arg2[%c66] : memref<98xf32, #tpu.memory_space<smem>>
      %c1_510 = arith.constant 1 : index
      %c3_511 = arith.constant 3 : index
      %c2_512 = arith.constant 2 : index
      %c0_513 = arith.constant 0 : index
      %659 = vector.load %arg8[%c1_510, %c3_511, %c2_512, %c0_513] : memref<2x7x22x16xf32, #tpu.memory_space<vmem>>, vector<1x1x16x16xf32>
      %660 = vector.shape_cast %659 : vector<1x1x16x16xf32> to vector<16x16xf32>
      %661 = vector.broadcast %658 : f32 to vector<16x16xf32>
      %662 = arith.mulf %661, %660 : vector<16x16xf32>
      %663 = arith.addf %639, %662 : vector<16x16xf32>
      %c73 = arith.constant 73 : index
      %664 = memref.load %arg2[%c73] : memref<98xf32, #tpu.memory_space<smem>>
      %c1_514 = arith.constant 1 : index
      %c3_515 = arith.constant 3 : index
      %c3_516 = arith.constant 3 : index
      %c0_517 = arith.constant 0 : index
      %665 = vector.load %arg8[%c1_514, %c3_515, %c3_516, %c0_517] : memref<2x7x22x16xf32, #tpu.memory_space<vmem>>, vector<1x1x16x16xf32>
      %666 = vector.shape_cast %665 : vector<1x1x16x16xf32> to vector<16x16xf32>
      %667 = vector.broadcast %664 : f32 to vector<16x16xf32>
      %668 = arith.mulf %667, %666 : vector<16x16xf32>
      %669 = arith.addf %645, %668 : vector<16x16xf32>
      %c80 = arith.constant 80 : index
      %670 = memref.load %arg2[%c80] : memref<98xf32, #tpu.memory_space<smem>>
      %c1_518 = arith.constant 1 : index
      %c3_519 = arith.constant 3 : index
      %c4_520 = arith.constant 4 : index
      %c0_521 = arith.constant 0 : index
      %671 = vector.load %arg8[%c1_518, %c3_519, %c4_520, %c0_521] : memref<2x7x22x16xf32, #tpu.memory_space<vmem>>, vector<1x1x16x16xf32>
      %672 = vector.shape_cast %671 : vector<1x1x16x16xf32> to vector<16x16xf32>
      %673 = vector.broadcast %670 : f32 to vector<16x16xf32>
      %674 = arith.mulf %673, %672 : vector<16x16xf32>
      %675 = arith.addf %651, %674 : vector<16x16xf32>
      %c87 = arith.constant 87 : index
      %676 = memref.load %arg2[%c87] : memref<98xf32, #tpu.memory_space<smem>>
      %c1_522 = arith.constant 1 : index
      %c3_523 = arith.constant 3 : index
      %c5_524 = arith.constant 5 : index
      %c0_525 = arith.constant 0 : index
      %677 = vector.load %arg8[%c1_522, %c3_523, %c5_524, %c0_525] : memref<2x7x22x16xf32, #tpu.memory_space<vmem>>, vector<1x1x16x16xf32>
      %678 = vector.shape_cast %677 : vector<1x1x16x16xf32> to vector<16x16xf32>
      %679 = vector.broadcast %676 : f32 to vector<16x16xf32>
      %680 = arith.mulf %679, %678 : vector<16x16xf32>
      %681 = arith.addf %657, %680 : vector<16x16xf32>
      %c94 = arith.constant 94 : index
      %682 = memref.load %arg2[%c94] : memref<98xf32, #tpu.memory_space<smem>>
      %c1_526 = arith.constant 1 : index
      %c3_527 = arith.constant 3 : index
      %c6_528 = arith.constant 6 : index
      %c0_529 = arith.constant 0 : index
      %683 = vector.load %arg8[%c1_526, %c3_527, %c6_528, %c0_529] : memref<2x7x22x16xf32, #tpu.memory_space<vmem>>, vector<1x1x16x16xf32>
      %684 = vector.shape_cast %683 : vector<1x1x16x16xf32> to vector<16x16xf32>
      %685 = vector.broadcast %682 : f32 to vector<16x16xf32>
      %686 = arith.mulf %685, %684 : vector<16x16xf32>
      %687 = arith.addf %663, %686 : vector<16x16xf32>
      %c53 = arith.constant 53 : index
      %688 = memref.load %arg2[%c53] : memref<98xf32, #tpu.memory_space<smem>>
      %c1_530 = arith.constant 1 : index
      %c4_531 = arith.constant 4 : index
      %c0_532 = arith.constant 0 : index
      %c0_533 = arith.constant 0 : index
      %689 = vector.load %arg8[%c1_530, %c4_531, %c0_532, %c0_533] : memref<2x7x22x16xf32, #tpu.memory_space<vmem>>, vector<1x1x16x16xf32>
      %690 = vector.shape_cast %689 : vector<1x1x16x16xf32> to vector<16x16xf32>
      %691 = vector.broadcast %688 : f32 to vector<16x16xf32>
      %692 = arith.mulf %691, %690 : vector<16x16xf32>
      %693 = arith.addf %669, %692 : vector<16x16xf32>
      %c60 = arith.constant 60 : index
      %694 = memref.load %arg2[%c60] : memref<98xf32, #tpu.memory_space<smem>>
      %c1_534 = arith.constant 1 : index
      %c4_535 = arith.constant 4 : index
      %c1_536 = arith.constant 1 : index
      %c0_537 = arith.constant 0 : index
      %695 = vector.load %arg8[%c1_534, %c4_535, %c1_536, %c0_537] : memref<2x7x22x16xf32, #tpu.memory_space<vmem>>, vector<1x1x16x16xf32>
      %696 = vector.shape_cast %695 : vector<1x1x16x16xf32> to vector<16x16xf32>
      %697 = vector.broadcast %694 : f32 to vector<16x16xf32>
      %698 = arith.mulf %697, %696 : vector<16x16xf32>
      %699 = arith.addf %675, %698 : vector<16x16xf32>
      %c67 = arith.constant 67 : index
      %700 = memref.load %arg2[%c67] : memref<98xf32, #tpu.memory_space<smem>>
      %c1_538 = arith.constant 1 : index
      %c4_539 = arith.constant 4 : index
      %c2_540 = arith.constant 2 : index
      %c0_541 = arith.constant 0 : index
      %701 = vector.load %arg8[%c1_538, %c4_539, %c2_540, %c0_541] : memref<2x7x22x16xf32, #tpu.memory_space<vmem>>, vector<1x1x16x16xf32>
      %702 = vector.shape_cast %701 : vector<1x1x16x16xf32> to vector<16x16xf32>
      %703 = vector.broadcast %700 : f32 to vector<16x16xf32>
      %704 = arith.mulf %703, %702 : vector<16x16xf32>
      %705 = arith.addf %681, %704 : vector<16x16xf32>
      %c74 = arith.constant 74 : index
      %706 = memref.load %arg2[%c74] : memref<98xf32, #tpu.memory_space<smem>>
      %c1_542 = arith.constant 1 : index
      %c4_543 = arith.constant 4 : index
      %c3_544 = arith.constant 3 : index
      %c0_545 = arith.constant 0 : index
      %707 = vector.load %arg8[%c1_542, %c4_543, %c3_544, %c0_545] : memref<2x7x22x16xf32, #tpu.memory_space<vmem>>, vector<1x1x16x16xf32>
      %708 = vector.shape_cast %707 : vector<1x1x16x16xf32> to vector<16x16xf32>
      %709 = vector.broadcast %706 : f32 to vector<16x16xf32>
      %710 = arith.mulf %709, %708 : vector<16x16xf32>
      %711 = arith.addf %687, %710 : vector<16x16xf32>
      %c81 = arith.constant 81 : index
      %712 = memref.load %arg2[%c81] : memref<98xf32, #tpu.memory_space<smem>>
      %c1_546 = arith.constant 1 : index
      %c4_547 = arith.constant 4 : index
      %c4_548 = arith.constant 4 : index
      %c0_549 = arith.constant 0 : index
      %713 = vector.load %arg8[%c1_546, %c4_547, %c4_548, %c0_549] : memref<2x7x22x16xf32, #tpu.memory_space<vmem>>, vector<1x1x16x16xf32>
      %714 = vector.shape_cast %713 : vector<1x1x16x16xf32> to vector<16x16xf32>
      %715 = vector.broadcast %712 : f32 to vector<16x16xf32>
      %716 = arith.mulf %715, %714 : vector<16x16xf32>
      %717 = arith.addf %693, %716 : vector<16x16xf32>
      %c88 = arith.constant 88 : index
      %718 = memref.load %arg2[%c88] : memref<98xf32, #tpu.memory_space<smem>>
      %c1_550 = arith.constant 1 : index
      %c4_551 = arith.constant 4 : index
      %c5_552 = arith.constant 5 : index
      %c0_553 = arith.constant 0 : index
      %719 = vector.load %arg8[%c1_550, %c4_551, %c5_552, %c0_553] : memref<2x7x22x16xf32, #tpu.memory_space<vmem>>, vector<1x1x16x16xf32>
      %720 = vector.shape_cast %719 : vector<1x1x16x16xf32> to vector<16x16xf32>
      %721 = vector.broadcast %718 : f32 to vector<16x16xf32>
      %722 = arith.mulf %721, %720 : vector<16x16xf32>
      %723 = arith.addf %699, %722 : vector<16x16xf32>
      %c95 = arith.constant 95 : index
      %724 = memref.load %arg2[%c95] : memref<98xf32, #tpu.memory_space<smem>>
      %c1_554 = arith.constant 1 : index
      %c4_555 = arith.constant 4 : index
      %c6_556 = arith.constant 6 : index
      %c0_557 = arith.constant 0 : index
      %725 = vector.load %arg8[%c1_554, %c4_555, %c6_556, %c0_557] : memref<2x7x22x16xf32, #tpu.memory_space<vmem>>, vector<1x1x16x16xf32>
      %726 = vector.shape_cast %725 : vector<1x1x16x16xf32> to vector<16x16xf32>
      %727 = vector.broadcast %724 : f32 to vector<16x16xf32>
      %728 = arith.mulf %727, %726 : vector<16x16xf32>
      %729 = arith.addf %705, %728 : vector<16x16xf32>
      %c54 = arith.constant 54 : index
      %730 = memref.load %arg2[%c54] : memref<98xf32, #tpu.memory_space<smem>>
      %c1_558 = arith.constant 1 : index
      %c5_559 = arith.constant 5 : index
      %c0_560 = arith.constant 0 : index
      %c0_561 = arith.constant 0 : index
      %731 = vector.load %arg8[%c1_558, %c5_559, %c0_560, %c0_561] : memref<2x7x22x16xf32, #tpu.memory_space<vmem>>, vector<1x1x16x16xf32>
      %732 = vector.shape_cast %731 : vector<1x1x16x16xf32> to vector<16x16xf32>
      %733 = vector.broadcast %730 : f32 to vector<16x16xf32>
      %734 = arith.mulf %733, %732 : vector<16x16xf32>
      %735 = arith.addf %711, %734 : vector<16x16xf32>
      %c61 = arith.constant 61 : index
      %736 = memref.load %arg2[%c61] : memref<98xf32, #tpu.memory_space<smem>>
      %c1_562 = arith.constant 1 : index
      %c5_563 = arith.constant 5 : index
      %c1_564 = arith.constant 1 : index
      %c0_565 = arith.constant 0 : index
      %737 = vector.load %arg8[%c1_562, %c5_563, %c1_564, %c0_565] : memref<2x7x22x16xf32, #tpu.memory_space<vmem>>, vector<1x1x16x16xf32>
      %738 = vector.shape_cast %737 : vector<1x1x16x16xf32> to vector<16x16xf32>
      %739 = vector.broadcast %736 : f32 to vector<16x16xf32>
      %740 = arith.mulf %739, %738 : vector<16x16xf32>
      %741 = arith.addf %717, %740 : vector<16x16xf32>
      %c68 = arith.constant 68 : index
      %742 = memref.load %arg2[%c68] : memref<98xf32, #tpu.memory_space<smem>>
      %c1_566 = arith.constant 1 : index
      %c5_567 = arith.constant 5 : index
      %c2_568 = arith.constant 2 : index
      %c0_569 = arith.constant 0 : index
      %743 = vector.load %arg8[%c1_566, %c5_567, %c2_568, %c0_569] : memref<2x7x22x16xf32, #tpu.memory_space<vmem>>, vector<1x1x16x16xf32>
      %744 = vector.shape_cast %743 : vector<1x1x16x16xf32> to vector<16x16xf32>
      %745 = vector.broadcast %742 : f32 to vector<16x16xf32>
      %746 = arith.mulf %745, %744 : vector<16x16xf32>
      %747 = arith.addf %723, %746 : vector<16x16xf32>
      %c75 = arith.constant 75 : index
      %748 = memref.load %arg2[%c75] : memref<98xf32, #tpu.memory_space<smem>>
      %c1_570 = arith.constant 1 : index
      %c5_571 = arith.constant 5 : index
      %c3_572 = arith.constant 3 : index
      %c0_573 = arith.constant 0 : index
      %749 = vector.load %arg8[%c1_570, %c5_571, %c3_572, %c0_573] : memref<2x7x22x16xf32, #tpu.memory_space<vmem>>, vector<1x1x16x16xf32>
      %750 = vector.shape_cast %749 : vector<1x1x16x16xf32> to vector<16x16xf32>
      %751 = vector.broadcast %748 : f32 to vector<16x16xf32>
      %752 = arith.mulf %751, %750 : vector<16x16xf32>
      %753 = arith.addf %729, %752 : vector<16x16xf32>
      %c82 = arith.constant 82 : index
      %754 = memref.load %arg2[%c82] : memref<98xf32, #tpu.memory_space<smem>>
      %c1_574 = arith.constant 1 : index
      %c5_575 = arith.constant 5 : index
      %c4_576 = arith.constant 4 : index
      %c0_577 = arith.constant 0 : index
      %755 = vector.load %arg8[%c1_574, %c5_575, %c4_576, %c0_577] : memref<2x7x22x16xf32, #tpu.memory_space<vmem>>, vector<1x1x16x16xf32>
      %756 = vector.shape_cast %755 : vector<1x1x16x16xf32> to vector<16x16xf32>
      %757 = vector.broadcast %754 : f32 to vector<16x16xf32>
      %758 = arith.mulf %757, %756 : vector<16x16xf32>
      %759 = arith.addf %735, %758 : vector<16x16xf32>
      %c89 = arith.constant 89 : index
      %760 = memref.load %arg2[%c89] : memref<98xf32, #tpu.memory_space<smem>>
      %c1_578 = arith.constant 1 : index
      %c5_579 = arith.constant 5 : index
      %c5_580 = arith.constant 5 : index
      %c0_581 = arith.constant 0 : index
      %761 = vector.load %arg8[%c1_578, %c5_579, %c5_580, %c0_581] : memref<2x7x22x16xf32, #tpu.memory_space<vmem>>, vector<1x1x16x16xf32>
      %762 = vector.shape_cast %761 : vector<1x1x16x16xf32> to vector<16x16xf32>
      %763 = vector.broadcast %760 : f32 to vector<16x16xf32>
      %764 = arith.mulf %763, %762 : vector<16x16xf32>
      %765 = arith.addf %741, %764 : vector<16x16xf32>
      %c96 = arith.constant 96 : index
      %766 = memref.load %arg2[%c96] : memref<98xf32, #tpu.memory_space<smem>>
      %c1_582 = arith.constant 1 : index
      %c5_583 = arith.constant 5 : index
      %c6_584 = arith.constant 6 : index
      %c0_585 = arith.constant 0 : index
      %767 = vector.load %arg8[%c1_582, %c5_583, %c6_584, %c0_585] : memref<2x7x22x16xf32, #tpu.memory_space<vmem>>, vector<1x1x16x16xf32>
      %768 = vector.shape_cast %767 : vector<1x1x16x16xf32> to vector<16x16xf32>
      %769 = vector.broadcast %766 : f32 to vector<16x16xf32>
      %770 = arith.mulf %769, %768 : vector<16x16xf32>
      %771 = arith.addf %747, %770 : vector<16x16xf32>
      %c55 = arith.constant 55 : index
      %772 = memref.load %arg2[%c55] : memref<98xf32, #tpu.memory_space<smem>>
      %c1_586 = arith.constant 1 : index
      %c6_587 = arith.constant 6 : index
      %c0_588 = arith.constant 0 : index
      %c0_589 = arith.constant 0 : index
      %773 = vector.load %arg8[%c1_586, %c6_587, %c0_588, %c0_589] : memref<2x7x22x16xf32, #tpu.memory_space<vmem>>, vector<1x1x16x16xf32>
      %774 = vector.shape_cast %773 : vector<1x1x16x16xf32> to vector<16x16xf32>
      %775 = vector.broadcast %772 : f32 to vector<16x16xf32>
      %776 = arith.mulf %775, %774 : vector<16x16xf32>
      %777 = arith.addf %753, %776 : vector<16x16xf32>
      %c62 = arith.constant 62 : index
      %778 = memref.load %arg2[%c62] : memref<98xf32, #tpu.memory_space<smem>>
      %c1_590 = arith.constant 1 : index
      %c6_591 = arith.constant 6 : index
      %c1_592 = arith.constant 1 : index
      %c0_593 = arith.constant 0 : index
      %779 = vector.load %arg8[%c1_590, %c6_591, %c1_592, %c0_593] : memref<2x7x22x16xf32, #tpu.memory_space<vmem>>, vector<1x1x16x16xf32>
      %780 = vector.shape_cast %779 : vector<1x1x16x16xf32> to vector<16x16xf32>
      %781 = vector.broadcast %778 : f32 to vector<16x16xf32>
      %782 = arith.mulf %781, %780 : vector<16x16xf32>
      %783 = arith.addf %759, %782 : vector<16x16xf32>
      %c69 = arith.constant 69 : index
      %784 = memref.load %arg2[%c69] : memref<98xf32, #tpu.memory_space<smem>>
      %c1_594 = arith.constant 1 : index
      %c6_595 = arith.constant 6 : index
      %c2_596 = arith.constant 2 : index
      %c0_597 = arith.constant 0 : index
      %785 = vector.load %arg8[%c1_594, %c6_595, %c2_596, %c0_597] : memref<2x7x22x16xf32, #tpu.memory_space<vmem>>, vector<1x1x16x16xf32>
      %786 = vector.shape_cast %785 : vector<1x1x16x16xf32> to vector<16x16xf32>
      %787 = vector.broadcast %784 : f32 to vector<16x16xf32>
      %788 = arith.mulf %787, %786 : vector<16x16xf32>
      %789 = arith.addf %765, %788 : vector<16x16xf32>
      %c76 = arith.constant 76 : index
      %790 = memref.load %arg2[%c76] : memref<98xf32, #tpu.memory_space<smem>>
      %c1_598 = arith.constant 1 : index
      %c6_599 = arith.constant 6 : index
      %c3_600 = arith.constant 3 : index
      %c0_601 = arith.constant 0 : index
      %791 = vector.load %arg8[%c1_598, %c6_599, %c3_600, %c0_601] : memref<2x7x22x16xf32, #tpu.memory_space<vmem>>, vector<1x1x16x16xf32>
      %792 = vector.shape_cast %791 : vector<1x1x16x16xf32> to vector<16x16xf32>
      %793 = vector.broadcast %790 : f32 to vector<16x16xf32>
      %794 = arith.mulf %793, %792 : vector<16x16xf32>
      %795 = arith.addf %771, %794 : vector<16x16xf32>
      %c83 = arith.constant 83 : index
      %796 = memref.load %arg2[%c83] : memref<98xf32, #tpu.memory_space<smem>>
      %c1_602 = arith.constant 1 : index
      %c6_603 = arith.constant 6 : index
      %c4_604 = arith.constant 4 : index
      %c0_605 = arith.constant 0 : index
      %797 = vector.load %arg8[%c1_602, %c6_603, %c4_604, %c0_605] : memref<2x7x22x16xf32, #tpu.memory_space<vmem>>, vector<1x1x16x16xf32>
      %798 = vector.shape_cast %797 : vector<1x1x16x16xf32> to vector<16x16xf32>
      %799 = vector.broadcast %796 : f32 to vector<16x16xf32>
      %800 = arith.mulf %799, %798 : vector<16x16xf32>
      %801 = arith.addf %777, %800 : vector<16x16xf32>
      %c90 = arith.constant 90 : index
      %802 = memref.load %arg2[%c90] : memref<98xf32, #tpu.memory_space<smem>>
      %c1_606 = arith.constant 1 : index
      %c6_607 = arith.constant 6 : index
      %c5_608 = arith.constant 5 : index
      %c0_609 = arith.constant 0 : index
      %803 = vector.load %arg8[%c1_606, %c6_607, %c5_608, %c0_609] : memref<2x7x22x16xf32, #tpu.memory_space<vmem>>, vector<1x1x16x16xf32>
      %804 = vector.shape_cast %803 : vector<1x1x16x16xf32> to vector<16x16xf32>
      %805 = vector.broadcast %802 : f32 to vector<16x16xf32>
      %806 = arith.mulf %805, %804 : vector<16x16xf32>
      %807 = arith.addf %783, %806 : vector<16x16xf32>
      %c97 = arith.constant 97 : index
      %808 = memref.load %arg2[%c97] : memref<98xf32, #tpu.memory_space<smem>>
      %c1_610 = arith.constant 1 : index
      %c6_611 = arith.constant 6 : index
      %c6_612 = arith.constant 6 : index
      %c0_613 = arith.constant 0 : index
      %809 = vector.load %arg8[%c1_610, %c6_611, %c6_612, %c0_613] : memref<2x7x22x16xf32, #tpu.memory_space<vmem>>, vector<1x1x16x16xf32>
      %810 = vector.shape_cast %809 : vector<1x1x16x16xf32> to vector<16x16xf32>
      %811 = vector.broadcast %808 : f32 to vector<16x16xf32>
      %812 = arith.mulf %811, %810 : vector<16x16xf32>
      %813 = arith.addf %789, %812 : vector<16x16xf32>
      %814 = arith.addf %807, %813 : vector<16x16xf32>
      %815 = arith.addf %795, %801 : vector<16x16xf32>
      %816 = arith.addf %814, %815 : vector<16x16xf32>
      %817 = arith.negf %816 : vector<16x16xf32>
      %818 = math.exp %817 : vector<16x16xf32>
      %cst_614 = arith.constant 1.000000e+00 : f32
      %819 = vector.broadcast %cst_614 : f32 to vector<16x16xf32>
      %820 = arith.addf %819, %818 : vector<16x16xf32>
      %821 = arith.divf %819, %820 : vector<16x16xf32>
      %c0_615 = arith.constant 0 : index
      %c0_616 = arith.constant 0 : index
      %c0_617 = arith.constant 0 : index
      %c0_618 = arith.constant 0 : index
      %822 = vector.load %arg4[%c0_615, %c0_616, %c0_617, %c0_618] : memref<1x1x16x16xf32, #tpu.memory_space<vmem>>, vector<1x1x16x16xf32>
      %823 = vector.shape_cast %822 : vector<1x1x16x16xf32> to vector<16x16xf32>
      %824 = vector.shape_cast %821 : vector<16x16xf32> to vector<1x1x16x16xf32>
      tpu.vector_store %arg4[%c0_615, %c0_616, %c0_617, %c0_618], %824 {strides = array<i32>} : memref<1x1x16x16xf32, #tpu.memory_space<vmem>>, vector<1x1x16x16xf32>,
    } else {
    }
    return
  }
  func.func @transform_0(%arg0: i32, %arg1: i32) -> i32 {
    %c0_i32 = arith.constant 0 : i32
    %c0_i32_0 = arith.constant 0 : i32
    return %c0_i32 : i32
  }
  func.func @transform_1(%arg0: i32, %arg1: i32) -> (i32, i32, i32) {
    %c0_i32 = arith.constant 0 : i32
    %c0_i32_0 = arith.constant 0 : i32
    return %arg0, %arg1, %c0_i32 : i32, i32, i32
  }
  func.func @transform_2(%arg0: i32, %arg1: i32) -> (i32, i32, i32, i32) {
    %c0_i32 = arith.constant 0 : i32
    %c0_i32_0 = arith.constant 0 : i32
    %c0_i32_1 = arith.constant 0 : i32
    %c0_i32_2 = arith.constant 0 : i32
    return %arg0, %c0_i32, %c0_i32_0, %c0_i32_1 : i32, i32, i32, i32
  }
}

</mosaic_0001>

<llo_original>
// kernel: tpu_custom_call.1
$region0: #{tpu_custom_call.1}
  #allocation0 [shape = 'u32[]', space=smem, size = 0x4, offset = 0x4, fixed_abs, tag = 'smem constant byte address 0x4 - core index']
  #allocation1 [shape = 'u32[144,128]{1,0:T(1,128)}', space=vmem, size = 0x12000, scoped, tag = 'internal scratch']
  #allocation2 [shape = 'f32[1,256]{1,0:T(1,128)}', space=vmem, size = 0x400, scoped, tag = 'scratch operand']
  #allocation3 [shape = 'f32[1,256]{1,0:T(1,128)}', space=vmem, size = 0x400, scoped, tag = 'scratch operand']
  #allocation4 [shape = 'f32[2,22,22]{2,1,0:T(8,128)}', space=vmem, size = 0x6000, scoped, tag = 'scratch operand']
  #allocation5 [shape = 'f32[2,7,22,16]{3,2,1,0:T(8,128)}', space=vmem, size = 0x2a000, scoped, tag = 'scratch operand']
  %s0 = inlined_call_operand.hbm [shape: f32[98], index: 0, kind: input, shape index: {}]
  %s1 = inlined_call_operand.hbm [shape: f32[2,4,256], index: 1, kind: input, shape index: {}]
  %s2 = inlined_call_operand.hbm [shape: f32[2,1,16,16], index: 2, kind: output, shape index: {}]
  %s3 = sld [smem:[#allocation0]]
  $region57: #{tpu_custom_call.1} parent=0
    _
  %s5 = ssub.s32 1, %s3
  %s6 = scalar_select 0, %s5, %s3
  $region1: #{tpu_custom_call.1} parent=0
    #allocation6 [shape = 'u8[512]{0}', space=smem, size = 0x200, scoped, tag = 'input window, operand 0, single buffered']
    #allocation7 [shape = 's32[2]{0}', space=sflag, size = 0x8, scoped, tag = 'scoped memory for tpu_custom_call.1']
    #allocation8 [shape = 's32[2]{0}', space=sflag, size = 0x8, scoped, tag = 'scoped memory for tpu_custom_call.1']
    #allocation9 [shape = 's32[2]{0}', space=sflag, size = 0x8, scoped, tag = 'scoped memory for tpu_custom_call.1']
    #allocation10 [shape = 'u8[8192]{0}', space=vmem, size = 0x2000, scoped, tag = 'input window, operand 1']
    #allocation11 [shape = 'u8[16384]{0}', space=vmem, size = 0x4000, scoped, tag = 'output window, operand 0']
    %7 = vsyncpa [#allocation9], 0
    %8 = vsyncpa [#allocation7], 0
    %s9 = scalar_lea.sflag [#allocation7], 1
    %10 = vsyncpa %s9, 0
    %11 = vsyncpa [#allocation8], 0
    %s12 = scalar_lea.sflag [#allocation8], 1
    %13 = vsyncpa %s12, 0
    loop: start=0, step=1, limit=4
    $region2: #{tpu_custom_call.1} parent=1 // loop_pre_header
      _
    $region3: #{tpu_custom_call.1} parent=1 // loop_header
      %s15 = sphi 0, %s19
      %p16 = scmp.ge.s32.totalorder %s15, 4
      %s22 = sphi 0, %s34
      %s23 = sphi 0, %s30
      %s24 = sphi 0, %s22
      %s25 = sphi 0, %s23
      %s26 = sphi 0, %s24
      %s27 = sphi 0, %s25
      %s35 = sphi 0, %s35
      %s37 = sphi 0, %s35
      %s38 = sphi 0, %s37
      %s52 = sphi 0, %s38
      %s60 = sphi 0, %s62
      %s63 = sphi 0, %s60
      %s64 = sphi 0, %s63
      %s80 = sphi 0, %s64
      %s86 = sphi 0, %s88
      %s89 = sphi 0, %s86
      %s90 = sphi 0, %s89
      %s106 = sphi 0, %s90
    $region4: #{tpu_custom_call.1} parent=1 // loop_header_branch
      %18 = sbr.rel (%p16) target = $region8
    $region5: #{tpu_custom_call.1} parent=1 // loop_body
      %s20 = ssub.s32 %s15, 1
      %s21 = ssub.s32 %s15, 2
      %s28 = sadd.s32 1, %s23
      %p29 = scmp.ge.s32.totalorder %s28, 1
      %s30 = scalar_select %p29, 0, %s28
      %s31 = sadd.s32 1, %s22
      %s32 = scalar_select %p29, %s31, %s22
      %p33 = scmp.ge.s32.totalorder %s32, 2
      %s34 = scalar_select %p33, 0, %s32
      %s36 = sadd.s32 %s35, 1
      %p39 = scmp.eq.s32.totalorder %s15, 1
      %p40 = scmp.ne.s32.totalorder %s35, %s37
      %p41 = scmp.eq.s32.totalorder %s15, 0
      %p42 = por %p40, %p41
      %p43 = scmp.ne.s32.totalorder %s35, %s37
      %p44 = scmp.eq.s32.totalorder %s20, 1
      %p45 = por %p43, %p44
      %p46 = scmp.ne.s32.totalorder %s37, %s38
      %p47 = scmp.eq.s32.totalorder %s20, 0
      %p48 = por %p46, %p47
      %p49 = scmp.ne.s32.totalorder %s37, %s38
      %p50 = scmp.eq.s32.totalorder %s21, 1
      %p51 = por %p49, %p50
      %p53 = scmp.ne.s32.totalorder %s38, %s52
      %p54 = scmp.eq.s32.totalorder %s21, 0
      %p55 = por %p53, %p54
      %s56 = ssub.s32 %s22, %s34
      %s57 = ssub.s32 %s23, %s30
      %s58 = sor.u32 %s56, %s57
      %p59 = scmp.eq.s32.totalorder %s58, 0
      %s61 = sadd.s32 %s60, 1
      %s62 = scalar_select %p59, %s60, %s61
      %p65 = pneg %p59
      %p66 = scmp.eq.s32.totalorder %s15, 1
      %p67 = por %p65, %p66
      %p68 = scmp.ne.s32.totalorder %s60, %s63
      %p69 = scmp.eq.s32.totalorder %s15, 0
      %p70 = por %p68, %p69
      %p71 = scmp.ne.s32.totalorder %s60, %s63
      %p72 = scmp.eq.s32.totalorder %s20, 1
      %p73 = por %p71, %p72
      %p74 = scmp.ne.s32.totalorder %s63, %s64
      %p75 = scmp.eq.s32.totalorder %s20, 0
      %p76 = por %p74, %p75
      %p77 = scmp.ne.s32.totalorder %s63, %s64
      %p78 = scmp.eq.s32.totalorder %s21, 1
      %p79 = por %p77, %p78
      %p81 = scmp.ne.s32.totalorder %s64, %s80
      %p82 = scmp.eq.s32.totalorder %s21, 0
      %p83 = por %p81, %p82
      %s84 = ssub.s32 %s22, %s34
      %p85 = scmp.eq.s32.totalorder %s84, 0
      %s87 = sadd.s32 %s86, 1
      %s88 = scalar_select %p85, %s86, %s87
      %p91 = pneg %p85
      %p92 = scmp.eq.s32.totalorder %s15, 1
      %p93 = por %p91, %p92
      %p94 = scmp.ne.s32.totalorder %s86, %s89
      %p95 = scmp.eq.s32.totalorder %s15, 0
      %p96 = por %p94, %p95
      %p97 = scmp.ne.s32.totalorder %s86, %s89
      %p98 = scmp.eq.s32.totalorder %s20, 1
      %p99 = por %p97, %p98
      %p100 = scmp.ne.s32.totalorder %s89, %s90
      %p101 = scmp.eq.s32.totalorder %s20, 0
      %p102 = por %p100, %p101
      %p103 = scmp.ne.s32.totalorder %s89, %s90
      %p104 = scmp.eq.s32.totalorder %s21, 1
      %p105 = por %p103, %p104
      %p107 = scmp.ne.s32.totalorder %s90, %s106
      %p108 = scmp.eq.s32.totalorder %s21, 0
      %p109 = por %p107, %p108
      %p110 = scmp.le.s32.totalorder 1, %s15
      %p111 = scmp.lt.s32.totalorder %s15, 3
      %p112 = pnand %p110, %p111
      %p113 = pneg %p112
      // Predicated region
      $region9: #{tpu_custom_call.1} parent=5 // pred_check
        _
      $region10: #{tpu_custom_call.1} parent=5 // pred_check_branch
        %115 = sbr.rel (%p112) target = $region12
      $region11: #{tpu_custom_call.1} parent=5 // pred_region
        %s116 = ssub.s32 %s15, 1
        // Predicated region
        $region13: #{tpu_custom_call.1} parent=11 // pred_check
          %p117 = pneg %p48
        $region14: #{tpu_custom_call.1} parent=11 // pred_check_branch
          %119 = sbr.rel (%p117) target = $region16
        $region15: #{tpu_custom_call.1} parent=11 // pred_region
          %s121 = ssub.s32 16, 16
          %122 = vsyncadd [#allocation9], %s121
          %125 = dma.hbm_to_smem %s0, 16, [#allocation6], [#allocation9]
        $region16: #{tpu_custom_call.1} parent=11 // pred_fallthru
          _
      $region12: #{tpu_custom_call.1} parent=5 // pred_fallthru
        _
      %p126 = scmp.lt.s32.totalorder %s15, 2
      // Predicated region
      $region17: #{tpu_custom_call.1} parent=5 // pred_check
        %p127 = pneg %p126
      $region18: #{tpu_custom_call.1} parent=5 // pred_check_branch
        %129 = sbr.rel (%p127) target = $region20
      $region19: #{tpu_custom_call.1} parent=5 // pred_region
        // Predicated region
        $region21: #{tpu_custom_call.1} parent=19 // pred_check
          %p130 = pneg %p70
        $region22: #{tpu_custom_call.1} parent=19 // pred_check_branch
          %132 = sbr.rel (%p130) target = $region24
        $region23: #{tpu_custom_call.1} parent=19 // pred_region
          %s133 = sand.u32 %s60, 1
          %s134 = scalar_lea.sflag [#allocation7], %s133
          %s135 = sand.u32 %s60, 1
          %s136 = smul.addr %s135, 8
          %s137 = scalar_lea.vmem [#allocation10], %s136
          %s139 = ssub.s32 128, 128
          %140 = vsyncadd %s134, %s139
          %s141 = smul.addr %s23, 2
          %s142 = smul.addr %s22, 2
          %s143 = sadd.s32 %s141, %s142
          %s144 = smul.addr %s143, 64
          %s145 = scalar_lea.hbm %s1, %s144
          %s147 = sshll.u32 %s137, 4
          %s148 = int_to_ptr.vmem [resolvable:$true] %s147
          %150 = dma.hbm_to_vmem [thread:$0]  %s145, 128, %s148, %s134
        $region24: #{tpu_custom_call.1} parent=19 // pred_fallthru
          _
      $region20: #{tpu_custom_call.1} parent=5 // pred_fallthru
        _
      %p151 = scmp.le.s32.totalorder 1, %s15
      %p152 = scmp.lt.s32.totalorder %s15, 3
      %p153 = pnand %p151, %p152
      %p154 = pneg %p153
      // Predicated region
      $region25: #{tpu_custom_call.1} parent=5 // pred_check
        _
      $region26: #{tpu_custom_call.1} parent=5 // pred_check_branch
        %156 = sbr.rel (%p153) target = $region28
      $region27: #{tpu_custom_call.1} parent=5 // pred_region
        %s157 = ssub.s32 %s15, 1
        // Predicated region
        $region29: #{tpu_custom_call.1} parent=27 // pred_check
          %p158 = pneg %p48
        $region30: #{tpu_custom_call.1} parent=27 // pred_check_branch
          %160 = sbr.rel (%p158) target = $region32
        $region31: #{tpu_custom_call.1} parent=27 // pred_region
          %161 = dma.done [#allocation9], 16
        $region32: #{tpu_custom_call.1} parent=27 // pred_fallthru
          _
        %s162 = sand.u32 %s63, 1
        %s163 = scalar_lea.sflag [#allocation7], %s162
        %s164 = sand.u32 %s63, 1
        %s165 = smul.addr %s164, 8
        %s166 = scalar_lea.vmem [#allocation10], %s165
        // Predicated region
        $region33: #{tpu_custom_call.1} parent=27 // pred_check
          %p167 = pneg %p76
        $region34: #{tpu_custom_call.1} parent=27 // pred_check_branch
          %169 = sbr.rel (%p167) target = $region36
        $region35: #{tpu_custom_call.1} parent=27 // pred_region
          %170 = dma.done %s163, 128
        $region36: #{tpu_custom_call.1} parent=27 // pred_fallthru
          _
        %171 = sfence
        %p172 = pneg %p48
        %p173 = pneg %p45
        %s174 = sand.u32 %s63, 1
        %s175 = scalar_lea.sflag [#allocation7], %s174
        %s176 = sand.u32 %s63, 1
        %s177 = smul.addr %s176, 8
        %s178 = scalar_lea.vmem [#allocation10], %s177
        %p179 = pneg %p76
        %p180 = pneg %p73
        %p181 = pneg %p102
        %p182 = pneg %p99
        %s183 = sand.u32 %s89, 1
        %s184 = scalar_lea.sflag [#allocation8], %s183
        %s185 = sand.u32 %s89, 1
        %s186 = smul.addr %s185, 16
        %s187 = scalar_lea.vmem [#allocation11], %s186
        %p188 = scmp.eq.s32.totalorder %s25, 0
        // Predicated region
        $region37: #{tpu_custom_call.1} parent=27 // pred_check
          %p189 = pneg %p188
        $region38: #{tpu_custom_call.1} parent=27 // pred_check_branch
          %191 = sbr.rel (%p189) target = $region40
        $region39: #{tpu_custom_call.1} parent=27 // pred_region
          %v192 = vlaneseq
          %vm193 = vcmp.ge.s32.totalorder %v192, 0
          %vm194 = vcmp.lt.s32.totalorder %v192, 256
          %vm195 = vmand %vm193, %vm194
          %196 = vst.msk [vmem:[#allocation2] sm:$0x3] %vm195, 0.0
          %197 = vst.msk [vmem:[#allocation3] sm:$0x3] %vm195, -inf
        $region40: #{tpu_custom_call.1} parent=27 // pred_fallthru
          _
        %v198 = vld [vmem:[%s166] sm:$0xff]
        %v199 = vld [vmem:[#allocation2] sm:$0x3]
        %v201 = vcombine.high %v198, %v198
        %vm203 = vcmask 1043456
        %v204 = vsel %vm203, %v198, 0.0
        %v205 = vrot.slane %v204, 4
        %v206 = vadd.f32 %v204, %v205
        %v207 = vrot.slane %v206, 2
        %v208 = vadd.f32 %v206, %v207
        %v209 = vrot.slane %v208, 1
        %v210 = vadd.f32 %v208, %v209
        %v211 = vsel %vm203, %v201, 0.0
        %v212 = vrot.slane %v211, 4
        %v213 = vadd.f32 %v211, %v212
        %v214 = vrot.slane %v213, 2
        %v215 = vadd.f32 %v213, %v214
        %v216 = vrot.slane %v215, 1
        %v217 = vadd.f32 %v215, %v216
        %v220 = vcombine.low %v210, %v217
        %v222 = vunpack.c.l.s4 1966171168
        %v223 = vunpack.c.0.s8 %v222
        %v224 = vlaneseq
        %v225 = vshrl.u32 %v224, 7
        %v226 = vsub.s32 %v223, %v225
        %v227 = vrot.slane %v220, %v226
        %v229 = vunpack.c.l.s4 1966171168
        %v230 = vunpack.c.0.s8 %v229
        %v231 = vlaneseq
        %v232 = vshrl.u32 %v231, 7
        %v233 = vsub.s32 %v230, %v232
        %v234 = vrot.slane %v227, %v233
        %v236 = vadd.f32 %v199, %v234
        %v237 = vlaneseq
        %vm238 = vcmp.ge.s32.totalorder %v237, 0
        %vm239 = vcmp.lt.s32.totalorder %v237, 256
        %vm240 = vmand %vm238, %vm239
        %241 = vst.msk [vmem:[#allocation2] sm:$0x3] %vm240, %v236
        %v242 = vld [vmem:[#allocation3] sm:$0x3]
        %v243 = vsel %vm203, %v198, -inf
        %v244 = vrot.slane %v243, 4
        %v245 = vmax.f32 %v243, %v244
        %v246 = vrot.slane %v245, 2
        %v247 = vmax.f32 %v245, %v246
        %v248 = vrot.slane %v247, 1
        %v249 = vmax.f32 %v247, %v248
        %v250 = vsel %vm203, %v201, -inf
        %v251 = vrot.slane %v250, 4
        %v252 = vmax.f32 %v250, %v251
        %v253 = vrot.slane %v252, 2
        %v254 = vmax.f32 %v252, %v253
        %v255 = vrot.slane %v254, 1
        %v256 = vmax.f32 %v254, %v255
        %v259 = vcombine.low %v249, %v256
        %v261 = vunpack.c.l.s4 1966171168
        %v262 = vunpack.c.0.s8 %v261
        %v263 = vlaneseq
        %v264 = vshrl.u32 %v263, 7
        %v265 = vsub.s32 %v262, %v264
        %v266 = vrot.slane %v259, %v265
        %v268 = vunpack.c.l.s4 1966171168
        %v269 = vunpack.c.0.s8 %v268
        %v270 = vlaneseq
        %v271 = vshrl.u32 %v270, 7
        %v272 = vsub.s32 %v269, %v271
        %v273 = vrot.slane %v266, %v272
        %v275 = vmax.f32 %v242, %v273
        %276 = vst.msk [vmem:[#allocation3] sm:$0x3] %vm240, %v275
        // Predicated region
        $region41: #{tpu_custom_call.1} parent=27 // pred_check
          %p277 = pneg %p188
        $region42: #{tpu_custom_call.1} parent=27 // pred_check_branch
          %279 = sbr.rel (%p277) target = $region44
        $region43: #{tpu_custom_call.1} parent=27 // pred_region
          %v280 = vld [vmem:[#allocation2] sm:$0x3]
          %v281 = vmul.f32 %v280, 0.25
          %v282 = vld [vmem:[#allocation3] sm:$0x3]
          %vm283 = vcmask 179200
          %284 = vst.msk [vmem:[#allocation4] sm:$0xff] %vm283, 0.0
          %285 = vst.msk [vmem:[#allocation4 + $0x8] sm:$0xff] %vm283, 0.0
          %vm286 = vcmask 177152
          %287 = vst.msk [vmem:[#allocation4 + $0x10] sm:$0x3f] %vm286, 0.0
          %288 = vst.msk [vmem:[#allocation4 + $0x18] sm:$0xff] %vm283, 0.0
          %289 = vst.msk [vmem:[#allocation4 + $0x20] sm:$0xff] %vm283, 0.0
          %290 = vst.msk [vmem:[#allocation4 + $0x28] sm:$0x3f] %vm286, 0.0
          %v292 = vlaneseq
          %v293 = vshrl.u32 %v292, 7
          %v294 = vsub.s32 0, %v293
          %v295 = vrot.slane %v281, %v294
          %296 = vrot.lane.b32.xlu0 %v295, 3
          %v297 = vpop.permute.xlu0 %296
          %vm299 = vcmask 147480
          %300 = vst.msk [vmem:[#allocation4 + $0x3] sm:$0x1] %vm299, %v297
          %v302 = vlaneseq
          %v303 = vshrl.u32 %v302, 7
          %v304 = vsub.s32 0, %v303
          %v305 = vrot.slane %v282, %v304
          %306 = vrot.lane.b32.xlu0 %v305, 3
          %v307 = vpop.permute.xlu0 %306
          %s309 = scalar_lea.vmem [#allocation4], 24
          %310 = vst.msk [vmem:[%s309 + $0x3] sm:$0x1] %vm299, %v307
          %311 = vrot.lane.b32.xlu0 %v295, 115
          %v312 = vpop.permute.xlu0 %311
          %314 = vst.msk [vmem:[#allocation4 + $0x4] sm:$0x1] %vm299, %v312
          %315 = vrot.lane.b32.xlu0 %v305, 115
          %v316 = vpop.permute.xlu0 %315
          %318 = vst.msk [vmem:[%s309 + $0x4] sm:$0x1] %vm299, %v316
          %319 = vrot.lane.b32.xlu0 %v295, 99
          %v320 = vpop.permute.xlu0 %319
          %322 = vst.msk [vmem:[#allocation4 + $0x5] sm:$0x1] %vm299, %v320
          %323 = vrot.lane.b32.xlu0 %v305, 99
          %v324 = vpop.permute.xlu0 %323
          %326 = vst.msk [vmem:[%s309 + $0x5] sm:$0x1] %vm299, %v324
          %327 = vrot.lane.b32.xlu0 %v295, 83
          %v328 = vpop.permute.xlu0 %327
          %330 = vst.msk [vmem:[#allocation4 + $0x6] sm:$0x1] %vm299, %v328
          %331 = vrot.lane.b32.xlu0 %v305, 83
          %v332 = vpop.permute.xlu0 %331
          %334 = vst.msk [vmem:[%s309 + $0x6] sm:$0x1] %vm299, %v332
          %335 = vrot.lane.b32.xlu0 %v295, 67
          %v336 = vpop.permute.xlu0 %335
          %338 = vst.msk [vmem:[#allocation4 + $0x7] sm:$0x1] %vm299, %v336
          %339 = vrot.lane.b32.xlu0 %v305, 67
          %v340 = vpop.permute.xlu0 %339
          %342 = vst.msk [vmem:[%s309 + $0x7] sm:$0x1] %vm299, %v340
          %343 = vrot.lane.b32.xlu0 %v295, 51
          %v344 = vpop.permute.xlu0 %343
          %346 = vst.msk [vmem:[#allocation4 + $0x8] sm:$0x1] %vm299, %v344
          %347 = vrot.lane.b32.xlu0 %v305, 51
          %v348 = vpop.permute.xlu0 %347
          %350 = vst.msk [vmem:[%s309 + $0x8] sm:$0x1] %vm299, %v348
          %351 = vrot.lane.b32.xlu0 %v295, 35
          %v352 = vpop.permute.xlu0 %351
          %354 = vst.msk [vmem:[#allocation4 + $0x9] sm:$0x1] %vm299, %v352
          %355 = vrot.lane.b32.xlu0 %v305, 35
          %v356 = vpop.permute.xlu0 %355
          %358 = vst.msk [vmem:[%s309 + $0x9] sm:$0x1] %vm299, %v356
          %359 = vrot.lane.b32.xlu0 %v295, 19
          %v360 = vpop.permute.xlu0 %359
          %362 = vst.msk [vmem:[#allocation4 + $0xa] sm:$0x1] %vm299, %v360
          %363 = vrot.lane.b32.xlu0 %v305, 19
          %v364 = vpop.permute.xlu0 %363
          %366 = vst.msk [vmem:[%s309 + $0xa] sm:$0x1] %vm299, %v364
          %v367 = vrot.slane %v281, 1
          %v368 = vlaneseq
          %v369 = vshrl.u32 %v368, 7
          %v370 = vsub.s32 0, %v369
          %v371 = vrot.slane %v367, %v370
          %372 = vrot.lane.b32.xlu0 %v371, 3
          %v373 = vpop.permute.xlu0 %372
          %375 = vst.msk [vmem:[#allocation4 + $0xb] sm:$0x1] %vm299, %v373
          %v376 = vrot.slane %v282, 1
          %v377 = vlaneseq
          %v378 = vshrl.u32 %v377, 7
          %v379 = vsub.s32 0, %v378
          %v380 = vrot.slane %v376, %v379
          %381 = vrot.lane.b32.xlu0 %v380, 3
          %v382 = vpop.permute.xlu0 %381
          %384 = vst.msk [vmem:[%s309 + $0xb] sm:$0x1] %vm299, %v382
          %385 = vrot.lane.b32.xlu0 %v281, 112
          %v386 = vpop.permute.xlu0 %385
          %v387 = vrot.slane %v386, 1
          %v388 = vlaneseq
          %v389 = vshrl.u32 %v388, 7
          %v390 = vsub.s32 0, %v389
          %v391 = vrot.slane %v387, %v390
          %392 = vrot.lane.b32.xlu0 %v391, 3
          %v393 = vpop.permute.xlu0 %392
          %395 = vst.msk [vmem:[#allocation4 + $0xc] sm:$0x1] %vm299, %v393
          %396 = vrot.lane.b32.xlu0 %v282, 112
          %v397 = vpop.permute.xlu0 %396
          %v398 = vrot.slane %v397, 1
          %v399 = vlaneseq
          %v400 = vshrl.u32 %v399, 7
          %v401 = vsub.s32 0, %v400
          %v402 = vrot.slane %v398, %v401
          %403 = vrot.lane.b32.xlu0 %v402, 3
          %v404 = vpop.permute.xlu0 %403
          %406 = vst.msk [vmem:[%s309 + $0xc] sm:$0x1] %vm299, %v404
          %407 = vrot.lane.b32.xlu0 %v281, 96
          %v408 = vpop.permute.xlu0 %407
          %v409 = vrot.slane %v408, 1
          %v410 = vlaneseq
          %v411 = vshrl.u32 %v410, 7
          %v412 = vsub.s32 0, %v411
          %v413 = vrot.slane %v409, %v412
          %414 = vrot.lane.b32.xlu0 %v413, 3
          %v415 = vpop.permute.xlu0 %414
          %417 = vst.msk [vmem:[#allocation4 + $0xd] sm:$0x1] %vm299, %v415
          %418 = vrot.lane.b32.xlu0 %v282, 96
          %v419 = vpop.permute.xlu0 %418
          %v420 = vrot.slane %v419, 1
          %v421 = vlaneseq
          %v422 = vshrl.u32 %v421, 7
          %v423 = vsub.s32 0, %v422
          %v424 = vrot.slane %v420, %v423
          %425 = vrot.lane.b32.xlu0 %v424, 3
          %v426 = vpop.permute.xlu0 %425
          %428 = vst.msk [vmem:[%s309 + $0xd] sm:$0x1] %vm299, %v426
          %429 = vrot.lane.b32.xlu0 %v281, 80
          %v430 = vpop.permute.xlu0 %429
          %v431 = vrot.slane %v430, 1
          %v432 = vlaneseq
          %v433 = vshrl.u32 %v432, 7
          %v434 = vsub.s32 0, %v433
          %v435 = vrot.slane %v431, %v434
          %436 = vrot.lane.b32.xlu0 %v435, 3
          %v437 = vpop.permute.xlu0 %436
          %439 = vst.msk [vmem:[#allocation4 + $0xe] sm:$0x1] %vm299, %v437
          %440 = vrot.lane.b32.xlu0 %v282, 80
          %v441 = vpop.permute.xlu0 %440
          %v442 = vrot.slane %v441, 1
          %v443 = vlaneseq
          %v444 = vshrl.u32 %v443, 7
          %v445 = vsub.s32 0, %v444
          %v446 = vrot.slane %v442, %v445
          %447 = vrot.lane.b32.xlu0 %v446, 3
          %v448 = vpop.permute.xlu0 %447
          %450 = vst.msk [vmem:[%s309 + $0xe] sm:$0x1] %vm299, %v448
          %451 = vrot.lane.b32.xlu0 %v281, 64
          %v452 = vpop.permute.xlu0 %451
          %v453 = vrot.slane %v452, 1
          %v454 = vlaneseq
          %v455 = vshrl.u32 %v454, 7
          %v456 = vsub.s32 0, %v455
          %v457 = vrot.slane %v453, %v456
          %458 = vrot.lane.b32.xlu0 %v457, 3
          %v459 = vpop.permute.xlu0 %458
          %461 = vst.msk [vmem:[#allocation4 + $0xf] sm:$0x1] %vm299, %v459
          %462 = vrot.lane.b32.xlu0 %v282, 64
          %v463 = vpop.permute.xlu0 %462
          %v464 = vrot.slane %v463, 1
          %v465 = vlaneseq
          %v466 = vshrl.u32 %v465, 7
          %v467 = vsub.s32 0, %v466
          %v468 = vrot.slane %v464, %v467
          %469 = vrot.lane.b32.xlu0 %v468, 3
          %v470 = vpop.permute.xlu0 %469
          %472 = vst.msk [vmem:[%s309 + $0xf] sm:$0x1] %vm299, %v470
          %473 = vrot.lane.b32.xlu0 %v281, 48
          %v474 = vpop.permute.xlu0 %473
          %v475 = vrot.slane %v474, 1
          %v476 = vlaneseq
          %v477 = vshrl.u32 %v476, 7
          %v478 = vsub.s32 0, %v477
          %v479 = vrot.slane %v475, %v478
          %480 = vrot.lane.b32.xlu0 %v479, 3
          %v481 = vpop.permute.xlu0 %480
          %483 = vst.msk [vmem:[#allocation4 + $0x10] sm:$0x1] %vm299, %v481
          %484 = vrot.lane.b32.xlu0 %v282, 48
          %v485 = vpop.permute.xlu0 %484
          %v486 = vrot.slane %v485, 1
          %v487 = vlaneseq
          %v488 = vshrl.u32 %v487, 7
          %v489 = vsub.s32 0, %v488
          %v490 = vrot.slane %v486, %v489
          %491 = vrot.lane.b32.xlu0 %v490, 3
          %v492 = vpop.permute.xlu0 %491
          %494 = vst.msk [vmem:[%s309 + $0x10] sm:$0x1] %vm299, %v492
          %495 = vrot.lane.b32.xlu0 %v281, 32
          %v496 = vpop.permute.xlu0 %495
          %v497 = vrot.slane %v496, 1
          %v498 = vlaneseq
          %v499 = vshrl.u32 %v498, 7
          %v500 = vsub.s32 0, %v499
          %v501 = vrot.slane %v497, %v500
          %502 = vrot.lane.b32.xlu0 %v501, 3
          %v503 = vpop.permute.xlu0 %502
          %505 = vst.msk [vmem:[#allocation4 + $0x11] sm:$0x1] %vm299, %v503
          %506 = vrot.lane.b32.xlu0 %v282, 32
          %v507 = vpop.permute.xlu0 %506
          %v508 = vrot.slane %v507, 1
          %v509 = vlaneseq
          %v510 = vshrl.u32 %v509, 7
          %v511 = vsub.s32 0, %v510
          %v512 = vrot.slane %v508, %v511
          %513 = vrot.lane.b32.xlu0 %v512, 3
          %v514 = vpop.permute.xlu0 %513
          %516 = vst.msk [vmem:[%s309 + $0x11] sm:$0x1] %vm299, %v514
          %517 = vrot.lane.b32.xlu0 %v281, 16
          %v518 = vpop.permute.xlu0 %517
          %v519 = vrot.slane %v518, 1
          %v520 = vlaneseq
          %v521 = vshrl.u32 %v520, 7
          %v522 = vsub.s32 0, %v521
          %v523 = vrot.slane %v519, %v522
          %524 = vrot.lane.b32.xlu0 %v523, 3
          %v525 = vpop.permute.xlu0 %524
          %527 = vst.msk [vmem:[#allocation4 + $0x12] sm:$0x1] %vm299, %v525
          %528 = vrot.lane.b32.xlu0 %v282, 16
          %v529 = vpop.permute.xlu0 %528
          %v530 = vrot.slane %v529, 1
          %v531 = vlaneseq
          %v532 = vshrl.u32 %v531, 7
          %v533 = vsub.s32 0, %v532
          %v534 = vrot.slane %v530, %v533
          %535 = vrot.lane.b32.xlu0 %v534, 3
          %v536 = vpop.permute.xlu0 %535
          %538 = vst.msk [vmem:[%s309 + $0x12] sm:$0x1] %vm299, %v536
          %v539 = vld [vmem:[#allocation4] sm:$0xff]
          %v540 = vld [vmem:[#allocation4 + $0x8] sm:$0xff]
          %v541 = vld [vmem:[#allocation4 + $0x10] sm:$0x3f]
          %vm542 = vcmask 130048
          %543 = vst.msk [vmem:[#allocation5] sm:$0xff] %vm542, %v539
          %544 = vst.msk [vmem:[#allocation5 + $0x8] sm:$0xff] %vm542, %v540
          %vm545 = vcmask 128000
          %546 = vst.msk [vmem:[#allocation5 + $0x10] sm:$0x3f] %vm545, %v541
          %v547 = vld [vmem:[#allocation4] sm:$0xff]
          %v548 = vld [vmem:[#allocation4 + $0x8] sm:$0xff]
          %v549 = vld [vmem:[#allocation4 + $0x10] sm:$0x3f]
          %553 = vrot.lane.b32.xlu0 %v547, 127
          %v554 = vpop.permute.xlu0 %553
          %555 = vrot.lane.b32.xlu0 %v548, 127
          %v556 = vpop.permute.xlu0 %555
          %557 = vrot.lane.b32.xlu0 %v549, 127
          %v558 = vpop.permute.xlu0 %557
          %s562 = scalar_lea.vmem [#allocation5], 24
          %563 = vst.msk [vmem:[%s562] sm:$0xff] %vm542, %v554
          %564 = vst.msk [vmem:[%s562 + $0x8] sm:$0xff] %vm542, %v556
          %565 = vst.msk [vmem:[%s562 + $0x10] sm:$0x3f] %vm545, %v558
          %v566 = vld [vmem:[#allocation4] sm:$0xff]
          %v567 = vld [vmem:[#allocation4 + $0x8] sm:$0xff]
          %v568 = vld [vmem:[#allocation4 + $0x10] sm:$0x3f]
          %572 = vrot.lane.b32.xlu0 %v566, 126
          %v573 = vpop.permute.xlu0 %572
          %574 = vrot.lane.b32.xlu0 %v567, 126
          %v575 = vpop.permute.xlu0 %574
          %576 = vrot.lane.b32.xlu0 %v568, 126
          %v577 = vpop.permute.xlu0 %576
          %s581 = scalar_lea.vmem [#allocation5], 48
          %582 = vst.msk [vmem:[%s581] sm:$0xff] %vm542, %v573
          %583 = vst.msk [vmem:[%s581 + $0x8] sm:$0xff] %vm542, %v575
          %584 = vst.msk [vmem:[%s581 + $0x10] sm:$0x3f] %vm545, %v577
          %v585 = vld [vmem:[#allocation4] sm:$0xff]
          %v586 = vld [vmem:[#allocation4 + $0x8] sm:$0xff]
          %v587 = vld [vmem:[#allocation4 + $0x10] sm:$0x3f]
          %591 = vrot.lane.b32.xlu0 %v585, 125
          %v592 = vpop.permute.xlu0 %591
          %593 = vrot.lane.b32.xlu0 %v586, 125
          %v594 = vpop.permute.xlu0 %593
          %595 = vrot.lane.b32.xlu0 %v587, 125
          %v596 = vpop.permute.xlu0 %595
          %s600 = scalar_lea.vmem [#allocation5], 72
          %601 = vst.msk [vmem:[%s600] sm:$0xff] %vm542, %v592
          %602 = vst.msk [vmem:[%s600 + $0x8] sm:$0xff] %vm542, %v594
          %603 = vst.msk [vmem:[%s600 + $0x10] sm:$0x3f] %vm545, %v596
          %v604 = vld [vmem:[#allocation4] sm:$0xff]
          %v605 = vld [vmem:[#allocation4 + $0x8] sm:$0xff]
          %v606 = vld [vmem:[#allocation4 + $0x10] sm:$0x3f]
          %610 = vrot.lane.b32.xlu0 %v604, 124
          %v611 = vpop.permute.xlu0 %610
          %612 = vrot.lane.b32.xlu0 %v605, 124
          %v613 = vpop.permute.xlu0 %612
          %614 = vrot.lane.b32.xlu0 %v606, 124
          %v615 = vpop.permute.xlu0 %614
          %s619 = scalar_lea.vmem [#allocation5], 96
          %620 = vst.msk [vmem:[%s619] sm:$0xff] %vm542, %v611
          %621 = vst.msk [vmem:[%s619 + $0x8] sm:$0xff] %vm542, %v613
          %622 = vst.msk [vmem:[%s619 + $0x10] sm:$0x3f] %vm545, %v615
          %v623 = vld [vmem:[#allocation4] sm:$0xff]
          %v624 = vld [vmem:[#allocation4 + $0x8] sm:$0xff]
          %v625 = vld [vmem:[#allocation4 + $0x10] sm:$0x3f]
          %629 = vrot.lane.b32.xlu0 %v623, 123
          %v630 = vpop.permute.xlu0 %629
          %631 = vrot.lane.b32.xlu0 %v624, 123
          %v632 = vpop.permute.xlu0 %631
          %633 = vrot.lane.b32.xlu0 %v625, 123
          %v634 = vpop.permute.xlu0 %633
          %s638 = scalar_lea.vmem [#allocation5], 120
          %639 = vst.msk [vmem:[%s638] sm:$0xff] %vm542, %v630
          %640 = vst.msk [vmem:[%s638 + $0x8] sm:$0xff] %vm542, %v632
          %641 = vst.msk [vmem:[%s638 + $0x10] sm:$0x3f] %vm545, %v634
          %v642 = vld [vmem:[#allocation4] sm:$0xff]
          %v643 = vld [vmem:[#allocation4 + $0x8] sm:$0xff]
          %v644 = vld [vmem:[#allocation4 + $0x10] sm:$0x3f]
          %648 = vrot.lane.b32.xlu0 %v642, 122
          %v649 = vpop.permute.xlu0 %648
          %650 = vrot.lane.b32.xlu0 %v643, 122
          %v651 = vpop.permute.xlu0 %650
          %652 = vrot.lane.b32.xlu0 %v644, 122
          %v653 = vpop.permute.xlu0 %652
          %s657 = scalar_lea.vmem [#allocation5], 144
          %658 = vst.msk [vmem:[%s657] sm:$0xff] %vm542, %v649
          %659 = vst.msk [vmem:[%s657 + $0x8] sm:$0xff] %vm542, %v651
          %660 = vst.msk [vmem:[%s657 + $0x10] sm:$0x3f] %vm545, %v653
          %v661 = vld [vmem:[%s309] sm:$0xff]
          %v662 = vld [vmem:[%s309 + $0x8] sm:$0xff]
          %v663 = vld [vmem:[%s309 + $0x10] sm:$0x3f]
          %s664 = scalar_lea.vmem [#allocation5], 168
          %665 = vst.msk [vmem:[%s664] sm:$0xff] %vm542, %v661
          %666 = vst.msk [vmem:[%s664 + $0x8] sm:$0xff] %vm542, %v662
          %667 = vst.msk [vmem:[%s664 + $0x10] sm:$0x3f] %vm545, %v663
          %v668 = vld [vmem:[%s309] sm:$0xff]
          %v669 = vld [vmem:[%s309 + $0x8] sm:$0xff]
          %v670 = vld [vmem:[%s309 + $0x10] sm:$0x3f]
          %674 = vrot.lane.b32.xlu0 %v668, 127
          %v675 = vpop.permute.xlu0 %674
          %676 = vrot.lane.b32.xlu0 %v669, 127
          %v677 = vpop.permute.xlu0 %676
          %678 = vrot.lane.b32.xlu0 %v670, 127
          %v679 = vpop.permute.xlu0 %678
          %s683 = scalar_lea.vmem [#allocation5], 192
          %684 = vst.msk [vmem:[%s683] sm:$0xff] %vm542, %v675
          %685 = vst.msk [vmem:[%s683 + $0x8] sm:$0xff] %vm542, %v677
          %686 = vst.msk [vmem:[%s683 + $0x10] sm:$0x3f] %vm545, %v679
          %v687 = vld [vmem:[%s309] sm:$0xff]
          %v688 = vld [vmem:[%s309 + $0x8] sm:$0xff]
          %v689 = vld [vmem:[%s309 + $0x10] sm:$0x3f]
          %693 = vrot.lane.b32.xlu0 %v687, 126
          %v694 = vpop.permute.xlu0 %693
          %695 = vrot.lane.b32.xlu0 %v688, 126
          %v696 = vpop.permute.xlu0 %695
          %697 = vrot.lane.b32.xlu0 %v689, 126
          %v698 = vpop.permute.xlu0 %697
          %s702 = scalar_lea.vmem [#allocation5], 216
          %703 = vst.msk [vmem:[%s702] sm:$0xff] %vm542, %v694
          %704 = vst.msk [vmem:[%s702 + $0x8] sm:$0xff] %vm542, %v696
          %705 = vst.msk [vmem:[%s702 + $0x10] sm:$0x3f] %vm545, %v698
          %v706 = vld [vmem:[%s309] sm:$0xff]
          %v707 = vld [vmem:[%s309 + $0x8] sm:$0xff]
          %v708 = vld [vmem:[%s309 + $0x10] sm:$0x3f]
          %712 = vrot.lane.b32.xlu0 %v706, 125
          %v713 = vpop.permute.xlu0 %712
          %714 = vrot.lane.b32.xlu0 %v707, 125
          %v715 = vpop.permute.xlu0 %714
          %716 = vrot.lane.b32.xlu0 %v708, 125
          %v717 = vpop.permute.xlu0 %716
          %s721 = scalar_lea.vmem [#allocation5], 240
          %722 = vst.msk [vmem:[%s721] sm:$0xff] %vm542, %v713
          %723 = vst.msk [vmem:[%s721 + $0x8] sm:$0xff] %vm542, %v715
          %724 = vst.msk [vmem:[%s721 + $0x10] sm:$0x3f] %vm545, %v717
          %v725 = vld [vmem:[%s309] sm:$0xff]
          %v726 = vld [vmem:[%s309 + $0x8] sm:$0xff]
          %v727 = vld [vmem:[%s309 + $0x10] sm:$0x3f]
          %731 = vrot.lane.b32.xlu0 %v725, 124
          %v732 = vpop.permute.xlu0 %731
          %733 = vrot.lane.b32.xlu0 %v726, 124
          %v734 = vpop.permute.xlu0 %733
          %735 = vrot.lane.b32.xlu0 %v727, 124
          %v736 = vpop.permute.xlu0 %735
          %s740 = scalar_lea.vmem [#allocation5], 264
          %741 = vst.msk [vmem:[%s740] sm:$0xff] %vm542, %v732
          %742 = vst.msk [vmem:[%s740 + $0x8] sm:$0xff] %vm542, %v734
          %743 = vst.msk [vmem:[%s740 + $0x10] sm:$0x3f] %vm545, %v736
          %v744 = vld [vmem:[%s309] sm:$0xff]
          %v745 = vld [vmem:[%s309 + $0x8] sm:$0xff]
          %v746 = vld [vmem:[%s309 + $0x10] sm:$0x3f]
          %750 = vrot.lane.b32.xlu0 %v744, 123
          %v751 = vpop.permute.xlu0 %750
          %752 = vrot.lane.b32.xlu0 %v745, 123
          %v753 = vpop.permute.xlu0 %752
          %754 = vrot.lane.b32.xlu0 %v746, 123
          %v755 = vpop.permute.xlu0 %754
          %s759 = scalar_lea.vmem [#allocation5], 288
          %760 = vst.msk [vmem:[%s759] sm:$0xff] %vm542, %v751
          %761 = vst.msk [vmem:[%s759 + $0x8] sm:$0xff] %vm542, %v753
          %762 = vst.msk [vmem:[%s759 + $0x10] sm:$0x3f] %vm545, %v755
          %v763 = vld [vmem:[%s309] sm:$0xff]
          %v764 = vld [vmem:[%s309 + $0x8] sm:$0xff]
          %v765 = vld [vmem:[%s309 + $0x10] sm:$0x3f]
          %769 = vrot.lane.b32.xlu0 %v763, 122
          %v770 = vpop.permute.xlu0 %769
          %771 = vrot.lane.b32.xlu0 %v764, 122
          %v772 = vpop.permute.xlu0 %771
          %773 = vrot.lane.b32.xlu0 %v765, 122
          %v774 = vpop.permute.xlu0 %773
          %s778 = scalar_lea.vmem [#allocation5], 312
          %779 = vst.msk [vmem:[%s778] sm:$0xff] %vm542, %v770
          %780 = vst.msk [vmem:[%s778 + $0x8] sm:$0xff] %vm542, %v772
          %781 = vst.msk [vmem:[%s778 + $0x10] sm:$0x3f] %vm545, %v774
          %s782 = sld [smem:[#allocation6]]
          %v783 = vld [vmem:[#allocation5] sm:$0xff]
          %v784 = vld [vmem:[#allocation5 + $0x8] sm:$0xff]
          %v785 = vstv %s782
          %v786 = vmul.f32 %v785, %v783
          %v787 = vmul.f32 %v785, %v784
          %v788 = vadd.f32 %v786, 0.0
          %v789 = vadd.f32 %v787, 0.0
          %s790 = sld [smem:[#allocation6 + $0x7]]
          %v791 = vld [vmem:[#allocation5 + $0x1] sm:$0xff]
          %v792 = vld [vmem:[#allocation5 + $0x9] sm:$0xff]
          %v793 = vstv %s790
          %v794 = vmul.f32 %v793, %v791
          %v795 = vmul.f32 %v793, %v792
          %v796 = vadd.f32 %v794, 0.0
          %v797 = vadd.f32 %v795, 0.0
          %s798 = sld [smem:[#allocation6 + $0xe]]
          %v799 = vld [vmem:[#allocation5 + $0x2] sm:$0xff]
          %v800 = vld [vmem:[#allocation5 + $0xa] sm:$0xff]
          %v801 = vstv %s798
          %v802 = vmul.f32 %v801, %v799
          %v803 = vmul.f32 %v801, %v800
          %v804 = vadd.f32 %v802, 0.0
          %v805 = vadd.f32 %v803, 0.0
          %s806 = sld [smem:[#allocation6 + $0x15]]
          %v807 = vld [vmem:[#allocation5 + $0x3] sm:$0xff]
          %v808 = vld [vmem:[#allocation5 + $0xb] sm:$0xff]
          %v809 = vstv %s806
          %v810 = vmul.f32 %v809, %v807
          %v811 = vmul.f32 %v809, %v808
          %v812 = vadd.f32 %v810, 0.0
          %v813 = vadd.f32 %v811, 0.0
          %s814 = sld [smem:[#allocation6 + $0x1c]]
          %v815 = vld [vmem:[#allocation5 + $0x4] sm:$0xff]
          %v816 = vld [vmem:[#allocation5 + $0xc] sm:$0xff]
          %v817 = vstv %s814
          %v818 = vmul.f32 %v817, %v815
          %v819 = vmul.f32 %v817, %v816
          %v820 = vadd.f32 %v788, %v818
          %v821 = vadd.f32 %v789, %v819
          %s822 = sld [smem:[#allocation6 + $0x23]]
          %v823 = vld [vmem:[#allocation5 + $0x5] sm:$0xff]
          %v824 = vld [vmem:[#allocation5 + $0xd] sm:$0xff]
          %v825 = vstv %s822
          %v826 = vmul.f32 %v825, %v823
          %v827 = vmul.f32 %v825, %v824
          %v828 = vadd.f32 %v796, %v826
          %v829 = vadd.f32 %v797, %v827
          %s830 = sld [smem:[#allocation6 + $0x2a]]
          %v831 = vld [vmem:[#allocation5 + $0x6] sm:$0xff]
          %v832 = vld [vmem:[#allocation5 + $0xe] sm:$0xff]
          %v833 = vstv %s830
          %v834 = vmul.f32 %v833, %v831
          %v835 = vmul.f32 %v833, %v832
          %v836 = vadd.f32 %v804, %v834
          %v837 = vadd.f32 %v805, %v835
          %s838 = sld [smem:[#allocation6 + $0x1]]
          %v839 = vld [vmem:[%s562] sm:$0xff]
          %v840 = vld [vmem:[%s562 + $0x8] sm:$0xff]
          %v841 = vstv %s838
          %v842 = vmul.f32 %v841, %v839
          %v843 = vmul.f32 %v841, %v840
          %v844 = vadd.f32 %v812, %v842
          %v845 = vadd.f32 %v813, %v843
          %s846 = sld [smem:[#allocation6 + $0x8]]
          %v847 = vld [vmem:[%s562 + $0x1] sm:$0xff]
          %v848 = vld [vmem:[%s562 + $0x9] sm:$0xff]
          %v849 = vstv %s846
          %v850 = vmul.f32 %v849, %v847
          %v851 = vmul.f32 %v849, %v848
          %v852 = vadd.f32 %v820, %v850
          %v853 = vadd.f32 %v821, %v851
          %s854 = sld [smem:[#allocation6 + $0xf]]
          %v855 = vld [vmem:[%s562 + $0x2] sm:$0xff]
          %v856 = vld [vmem:[%s562 + $0xa] sm:$0xff]
          %v857 = vstv %s854
          %v858 = vmul.f32 %v857, %v855
          %v859 = vmul.f32 %v857, %v856
          %v860 = vadd.f32 %v828, %v858
          %v861 = vadd.f32 %v829, %v859
          %s862 = sld [smem:[#allocation6 + $0x16]]
          %v863 = vld [vmem:[%s562 + $0x3] sm:$0xff]
          %v864 = vld [vmem:[%s562 + $0xb] sm:$0xff]
          %v865 = vstv %s862
          %v866 = vmul.f32 %v865, %v863
          %v867 = vmul.f32 %v865, %v864
          %v868 = vadd.f32 %v836, %v866
          %v869 = vadd.f32 %v837, %v867
          %s870 = sld [smem:[#allocation6 + $0x1d]]
          %v871 = vld [vmem:[%s562 + $0x4] sm:$0xff]
          %v872 = vld [vmem:[%s562 + $0xc] sm:$0xff]
          %v873 = vstv %s870
          %v874 = vmul.f32 %v873, %v871
          %v875 = vmul.f32 %v873, %v872
          %v876 = vadd.f32 %v844, %v874
          %v877 = vadd.f32 %v845, %v875
          %s878 = sld [smem:[#allocation6 + $0x24]]
          %v879 = vld [vmem:[%s562 + $0x5] sm:$0xff]
          %v880 = vld [vmem:[%s562 + $0xd] sm:$0xff]
          %v881 = vstv %s878
          %v882 = vmul.f32 %v881, %v879
          %v883 = vmul.f32 %v881, %v880
          %v884 = vadd.f32 %v852, %v882
          %v885 = vadd.f32 %v853, %v883
          %s886 = sld [smem:[#allocation6 + $0x2b]]
          %v887 = vld [vmem:[%s562 + $0x6] sm:$0xff]
          %v888 = vld [vmem:[%s562 + $0xe] sm:$0xff]
          %v889 = vstv %s886
          %v890 = vmul.f32 %v889, %v887
          %v891 = vmul.f32 %v889, %v888
          %v892 = vadd.f32 %v860, %v890
          %v893 = vadd.f32 %v861, %v891
          %s894 = sld [smem:[#allocation6 + $0x2]]
          %v895 = vld [vmem:[%s581] sm:$0xff]
          %v896 = vld [vmem:[%s581 + $0x8] sm:$0xff]
          %v897 = vstv %s894
          %v898 = vmul.f32 %v897, %v895
          %v899 = vmul.f32 %v897, %v896
          %v900 = vadd.f32 %v868, %v898
          %v901 = vadd.f32 %v869, %v899
          %s902 = sld [smem:[#allocation6 + $0x9]]
          %v903 = vld [vmem:[%s581 + $0x1] sm:$0xff]
          %v904 = vld [vmem:[%s581 + $0x9] sm:$0xff]
          %v905 = vstv %s902
          %v906 = vmul.f32 %v905, %v903
          %v907 = vmul.f32 %v905, %v904
          %v908 = vadd.f32 %v876, %v906
          %v909 = vadd.f32 %v877, %v907
          %s910 = sld [smem:[#allocation6 + $0x10]]
          %v911 = vld [vmem:[%s581 + $0x2] sm:$0xff]
          %v912 = vld [vmem:[%s581 + $0xa] sm:$0xff]
          %v913 = vstv %s910
          %v914 = vmul.f32 %v913, %v911
          %v915 = vmul.f32 %v913, %v912
          %v916 = vadd.f32 %v884, %v914
          %v917 = vadd.f32 %v885, %v915
          %s918 = sld [smem:[#allocation6 + $0x17]]
          %v919 = vld [vmem:[%s581 + $0x3] sm:$0xff]
          %v920 = vld [vmem:[%s581 + $0xb] sm:$0xff]
          %v921 = vstv %s918
          %v922 = vmul.f32 %v921, %v919
          %v923 = vmul.f32 %v921, %v920
          %v924 = vadd.f32 %v892, %v922
          %v925 = vadd.f32 %v893, %v923
          %s926 = sld [smem:[#allocation6 + $0x1e]]
          %v927 = vld [vmem:[%s581 + $0x4] sm:$0xff]
          %v928 = vld [vmem:[%s581 + $0xc] sm:$0xff]
          %v929 = vstv %s926
          %v930 = vmul.f32 %v929, %v927
          %v931 = vmul.f32 %v929, %v928
          %v932 = vadd.f32 %v900, %v930
          %v933 = vadd.f32 %v901, %v931
          %s934 = sld [smem:[#allocation6 + $0x25]]
          %v935 = vld [vmem:[%s581 + $0x5] sm:$0xff]
          %v936 = vld [vmem:[%s581 + $0xd] sm:$0xff]
          %v937 = vstv %s934
          %v938 = vmul.f32 %v937, %v935
          %v939 = vmul.f32 %v937, %v936
          %v940 = vadd.f32 %v908, %v938
          %v941 = vadd.f32 %v909, %v939
          %s942 = sld [smem:[#allocation6 + $0x2c]]
          %v943 = vld [vmem:[%s581 + $0x6] sm:$0xff]
          %v944 = vld [vmem:[%s581 + $0xe] sm:$0xff]
          %v945 = vstv %s942
          %v946 = vmul.f32 %v945, %v943
          %v947 = vmul.f32 %v945, %v944
          %v948 = vadd.f32 %v916, %v946
          %v949 = vadd.f32 %v917, %v947
          %s950 = sld [smem:[#allocation6 + $0x3]]
          %v951 = vld [vmem:[%s600] sm:$0xff]
          %v952 = vld [vmem:[%s600 + $0x8] sm:$0xff]
          %v953 = vstv %s950
          %v954 = vmul.f32 %v953, %v951
          %v955 = vmul.f32 %v953, %v952
          %v956 = vadd.f32 %v924, %v954
          %v957 = vadd.f32 %v925, %v955
          %s958 = sld [smem:[#allocation6 + $0xa]]
          %v959 = vld [vmem:[%s600 + $0x1] sm:$0xff]
          %v960 = vld [vmem:[%s600 + $0x9] sm:$0xff]
          %v961 = vstv %s958
          %v962 = vmul.f32 %v961, %v959
          %v963 = vmul.f32 %v961, %v960
          %v964 = vadd.f32 %v932, %v962
          %v965 = vadd.f32 %v933, %v963
          %s966 = sld [smem:[#allocation6 + $0x11]]
          %v967 = vld [vmem:[%s600 + $0x2] sm:$0xff]
          %v968 = vld [vmem:[%s600 + $0xa] sm:$0xff]
          %v969 = vstv %s966
          %v970 = vmul.f32 %v969, %v967
          %v971 = vmul.f32 %v969, %v968
          %v972 = vadd.f32 %v940, %v970
          %v973 = vadd.f32 %v941, %v971
          %s974 = sld [smem:[#allocation6 + $0x18]]
          %v975 = vld [vmem:[%s600 + $0x3] sm:$0xff]
          %v976 = vld [vmem:[%s600 + $0xb] sm:$0xff]
          %v977 = vstv %s974
          %v978 = vmul.f32 %v977, %v975
          %v979 = vmul.f32 %v977, %v976
          %v980 = vadd.f32 %v948, %v978
          %v981 = vadd.f32 %v949, %v979
          %s982 = sld [smem:[#allocation6 + $0x1f]]
          %v983 = vld [vmem:[%s600 + $0x4] sm:$0xff]
          %v984 = vld [vmem:[%s600 + $0xc] sm:$0xff]
          %v985 = vstv %s982
          %v986 = vmul.f32 %v985, %v983
          %v987 = vmul.f32 %v985, %v984
          %v988 = vadd.f32 %v956, %v986
          %v989 = vadd.f32 %v957, %v987
          %s990 = sld [smem:[#allocation6 + $0x26]]
          %v991 = vld [vmem:[%s600 + $0x5] sm:$0xff]
          %v992 = vld [vmem:[%s600 + $0xd] sm:$0xff]
          %v993 = vstv %s990
          %v994 = vmul.f32 %v993, %v991
          %v995 = vmul.f32 %v993, %v992
          %v996 = vadd.f32 %v964, %v994
          %v997 = vadd.f32 %v965, %v995
          %s998 = sld [smem:[#allocation6 + $0x2d]]
          %v999 = vld [vmem:[%s600 + $0x6] sm:$0xff]
          %v1000 = vld [vmem:[%s600 + $0xe] sm:$0xff]
          %v1001 = vstv %s998
          %v1002 = vmul.f32 %v1001, %v999
          %v1003 = vmul.f32 %v1001, %v1000
          %v1004 = vadd.f32 %v972, %v1002
          %v1005 = vadd.f32 %v973, %v1003
          %s1006 = sld [smem:[#allocation6 + $0x4]]
          %v1007 = vld [vmem:[%s619] sm:$0xff]
          %v1008 = vld [vmem:[%s619 + $0x8] sm:$0xff]
          %v1009 = vstv %s1006
          %v1010 = vmul.f32 %v1009, %v1007
          %v1011 = vmul.f32 %v1009, %v1008
          %v1012 = vadd.f32 %v980, %v1010
          %v1013 = vadd.f32 %v981, %v1011
          %s1014 = sld [smem:[#allocation6 + $0xb]]
          %v1015 = vld [vmem:[%s619 + $0x1] sm:$0xff]
          %v1016 = vld [vmem:[%s619 + $0x9] sm:$0xff]
          %v1017 = vstv %s1014
          %v1018 = vmul.f32 %v1017, %v1015
          %v1019 = vmul.f32 %v1017, %v1016
          %v1020 = vadd.f32 %v988, %v1018
          %v1021 = vadd.f32 %v989, %v1019
          %s1022 = sld [smem:[#allocation6 + $0x12]]
          %v1023 = vld [vmem:[%s619 + $0x2] sm:$0xff]
          %v1024 = vld [vmem:[%s619 + $0xa] sm:$0xff]
          %v1025 = vstv %s1022
          %v1026 = vmul.f32 %v1025, %v1023
          %v1027 = vmul.f32 %v1025, %v1024
          %v1028 = vadd.f32 %v996, %v1026
          %v1029 = vadd.f32 %v997, %v1027
          %s1030 = sld [smem:[#allocation6 + $0x19]]
          %v1031 = vld [vmem:[%s619 + $0x3] sm:$0xff]
          %v1032 = vld [vmem:[%s619 + $0xb] sm:$0xff]
          %v1033 = vstv %s1030
          %v1034 = vmul.f32 %v1033, %v1031
          %v1035 = vmul.f32 %v1033, %v1032
          %v1036 = vadd.f32 %v1004, %v1034
          %v1037 = vadd.f32 %v1005, %v1035
          %s1038 = sld [smem:[#allocation6 + $0x20]]
          %v1039 = vld [vmem:[%s619 + $0x4] sm:$0xff]
          %v1040 = vld [vmem:[%s619 + $0xc] sm:$0xff]
          %v1041 = vstv %s1038
          %v1042 = vmul.f32 %v1041, %v1039
          %v1043 = vmul.f32 %v1041, %v1040
          %v1044 = vadd.f32 %v1012, %v1042
          %v1045 = vadd.f32 %v1013, %v1043
          %s1046 = sld [smem:[#allocation6 + $0x27]]
          %v1047 = vld [vmem:[%s619 + $0x5] sm:$0xff]
          %v1048 = vld [vmem:[%s619 + $0xd] sm:$0xff]
          %v1049 = vstv %s1046
          %v1050 = vmul.f32 %v1049, %v1047
          %v1051 = vmul.f32 %v1049, %v1048
          %v1052 = vadd.f32 %v1020, %v1050
          %v1053 = vadd.f32 %v1021, %v1051
          %s1054 = sld [smem:[#allocation6 + $0x2e]]
          %v1055 = vld [vmem:[%s619 + $0x6] sm:$0xff]
          %v1056 = vld [vmem:[%s619 + $0xe] sm:$0xff]
          %v1057 = vstv %s1054
          %v1058 = vmul.f32 %v1057, %v1055
          %v1059 = vmul.f32 %v1057, %v1056
          %v1060 = vadd.f32 %v1028, %v1058
          %v1061 = vadd.f32 %v1029, %v1059
          %s1062 = sld [smem:[#allocation6 + $0x5]]
          %v1063 = vld [vmem:[%s638] sm:$0xff]
          %v1064 = vld [vmem:[%s638 + $0x8] sm:$0xff]
          %v1065 = vstv %s1062
          %v1066 = vmul.f32 %v1065, %v1063
          %v1067 = vmul.f32 %v1065, %v1064
          %v1068 = vadd.f32 %v1036, %v1066
          %v1069 = vadd.f32 %v1037, %v1067
          %s1070 = sld [smem:[#allocation6 + $0xc]]
          %v1071 = vld [vmem:[%s638 + $0x1] sm:$0xff]
          %v1072 = vld [vmem:[%s638 + $0x9] sm:$0xff]
          %v1073 = vstv %s1070
          %v1074 = vmul.f32 %v1073, %v1071
          %v1075 = vmul.f32 %v1073, %v1072
          %v1076 = vadd.f32 %v1044, %v1074
          %v1077 = vadd.f32 %v1045, %v1075
          %s1078 = sld [smem:[#allocation6 + $0x13]]
          %v1079 = vld [vmem:[%s638 + $0x2] sm:$0xff]
          %v1080 = vld [vmem:[%s638 + $0xa] sm:$0xff]
          %v1081 = vstv %s1078
          %v1082 = vmul.f32 %v1081, %v1079
          %v1083 = vmul.f32 %v1081, %v1080
          %v1084 = vadd.f32 %v1052, %v1082
          %v1085 = vadd.f32 %v1053, %v1083
          %s1086 = sld [smem:[#allocation6 + $0x1a]]
          %v1087 = vld [vmem:[%s638 + $0x3] sm:$0xff]
          %v1088 = vld [vmem:[%s638 + $0xb] sm:$0xff]
          %v1089 = vstv %s1086
          %v1090 = vmul.f32 %v1089, %v1087
          %v1091 = vmul.f32 %v1089, %v1088
          %v1092 = vadd.f32 %v1060, %v1090
          %v1093 = vadd.f32 %v1061, %v1091
          %s1094 = sld [smem:[#allocation6 + $0x21]]
          %v1095 = vld [vmem:[%s638 + $0x4] sm:$0xff]
          %v1096 = vld [vmem:[%s638 + $0xc] sm:$0xff]
          %v1097 = vstv %s1094
          %v1098 = vmul.f32 %v1097, %v1095
          %v1099 = vmul.f32 %v1097, %v1096
          %v1100 = vadd.f32 %v1068, %v1098
          %v1101 = vadd.f32 %v1069, %v1099
          %s1102 = sld [smem:[#allocation6 + $0x28]]
          %v1103 = vld [vmem:[%s638 + $0x5] sm:$0xff]
          %v1104 = vld [vmem:[%s638 + $0xd] sm:$0xff]
          %v1105 = vstv %s1102
          %v1106 = vmul.f32 %v1105, %v1103
          %v1107 = vmul.f32 %v1105, %v1104
          %v1108 = vadd.f32 %v1076, %v1106
          %v1109 = vadd.f32 %v1077, %v1107
          %s1110 = sld [smem:[#allocation6 + $0x2f]]
          %v1111 = vld [vmem:[%s638 + $0x6] sm:$0xff]
          %v1112 = vld [vmem:[%s638 + $0xe] sm:$0xff]
          %v1113 = vstv %s1110
          %v1114 = vmul.f32 %v1113, %v1111
          %v1115 = vmul.f32 %v1113, %v1112
          %v1116 = vadd.f32 %v1084, %v1114
          %v1117 = vadd.f32 %v1085, %v1115
          %s1118 = sld [smem:[#allocation6 + $0x6]]
          %v1119 = vld [vmem:[%s657] sm:$0xff]
          %v1120 = vld [vmem:[%s657 + $0x8] sm:$0xff]
          %v1121 = vstv %s1118
          %v1122 = vmul.f32 %v1121, %v1119
          %v1123 = vmul.f32 %v1121, %v1120
          %v1124 = vadd.f32 %v1092, %v1122
          %v1125 = vadd.f32 %v1093, %v1123
          %s1126 = sld [smem:[#allocation6 + $0xd]]
          %v1127 = vld [vmem:[%s657 + $0x1] sm:$0xff]
          %v1128 = vld [vmem:[%s657 + $0x9] sm:$0xff]
          %v1129 = vstv %s1126
          %v1130 = vmul.f32 %v1129, %v1127
          %v1131 = vmul.f32 %v1129, %v1128
          %v1132 = vadd.f32 %v1100, %v1130
          %v1133 = vadd.f32 %v1101, %v1131
          %s1134 = sld [smem:[#allocation6 + $0x14]]
          %v1135 = vld [vmem:[%s657 + $0x2] sm:$0xff]
          %v1136 = vld [vmem:[%s657 + $0xa] sm:$0xff]
          %v1137 = vstv %s1134
          %v1138 = vmul.f32 %v1137, %v1135
          %v1139 = vmul.f32 %v1137, %v1136
          %v1140 = vadd.f32 %v1108, %v1138
          %v1141 = vadd.f32 %v1109, %v1139
          %s1142 = sld [smem:[#allocation6 + $0x1b]]
          %v1143 = vld [vmem:[%s657 + $0x3] sm:$0xff]
          %v1144 = vld [vmem:[%s657 + $0xb] sm:$0xff]
          %v1145 = vstv %s1142
          %v1146 = vmul.f32 %v1145, %v1143
          %v1147 = vmul.f32 %v1145, %v1144
          %v1148 = vadd.f32 %v1116, %v1146
          %v1149 = vadd.f32 %v1117, %v1147
          %s1150 = sld [smem:[#allocation6 + $0x22]]
          %v1151 = vld [vmem:[%s657 + $0x4] sm:$0xff]
          %v1152 = vld [vmem:[%s657 + $0xc] sm:$0xff]
          %v1153 = vstv %s1150
          %v1154 = vmul.f32 %v1153, %v1151
          %v1155 = vmul.f32 %v1153, %v1152
          %v1156 = vadd.f32 %v1124, %v1154
          %v1157 = vadd.f32 %v1125, %v1155
          %s1158 = sld [smem:[#allocation6 + $0x29]]
          %v1159 = vld [vmem:[%s657 + $0x5] sm:$0xff]
          %v1160 = vld [vmem:[%s657 + $0xd] sm:$0xff]
          %v1161 = vstv %s1158
          %v1162 = vmul.f32 %v1161, %v1159
          %v1163 = vmul.f32 %v1161, %v1160
          %v1164 = vadd.f32 %v1132, %v1162
          %v1165 = vadd.f32 %v1133, %v1163
          %s1166 = sld [smem:[#allocation6 + $0x30]]
          %v1167 = vld [vmem:[%s657 + $0x6] sm:$0xff]
          %v1168 = vld [vmem:[%s657 + $0xe] sm:$0xff]
          %v1169 = vstv %s1166
          %v1170 = vmul.f32 %v1169, %v1167
          %v1171 = vmul.f32 %v1169, %v1168
          %v1172 = vadd.f32 %v1140, %v1170
          %v1173 = vadd.f32 %v1141, %v1171
          %s1174 = sld [smem:[#allocation6 + $0x31]]
          %v1175 = vld [vmem:[%s664] sm:$0xff]
          %v1176 = vld [vmem:[%s664 + $0x8] sm:$0xff]
          %v1177 = vstv %s1174
          %v1178 = vmul.f32 %v1177, %v1175
          %v1179 = vmul.f32 %v1177, %v1176
          %v1180 = vadd.f32 %v1148, %v1178
          %v1181 = vadd.f32 %v1149, %v1179
          %s1182 = sld [smem:[#allocation6 + $0x38]]
          %v1183 = vld [vmem:[%s664 + $0x1] sm:$0xff]
          %v1184 = vld [vmem:[%s664 + $0x9] sm:$0xff]
          %v1185 = vstv %s1182
          %v1186 = vmul.f32 %v1185, %v1183
          %v1187 = vmul.f32 %v1185, %v1184
          %v1188 = vadd.f32 %v1156, %v1186
          %v1189 = vadd.f32 %v1157, %v1187
          %s1190 = sld [smem:[#allocation6 + $0x3f]]
          %v1191 = vld [vmem:[%s664 + $0x2] sm:$0xff]
          %v1192 = vld [vmem:[%s664 + $0xa] sm:$0xff]
          %v1193 = vstv %s1190
          %v1194 = vmul.f32 %v1193, %v1191
          %v1195 = vmul.f32 %v1193, %v1192
          %v1196 = vadd.f32 %v1164, %v1194
          %v1197 = vadd.f32 %v1165, %v1195
          %s1198 = sld [smem:[#allocation6 + $0x46]]
          %v1199 = vld [vmem:[%s664 + $0x3] sm:$0xff]
          %v1200 = vld [vmem:[%s664 + $0xb] sm:$0xff]
          %v1201 = vstv %s1198
          %v1202 = vmul.f32 %v1201, %v1199
          %v1203 = vmul.f32 %v1201, %v1200
          %v1204 = vadd.f32 %v1172, %v1202
          %v1205 = vadd.f32 %v1173, %v1203
          %s1206 = sld [smem:[#allocation6 + $0x4d]]
          %v1207 = vld [vmem:[%s664 + $0x4] sm:$0xff]
          %v1208 = vld [vmem:[%s664 + $0xc] sm:$0xff]
          %v1209 = vstv %s1206
          %v1210 = vmul.f32 %v1209, %v1207
          %v1211 = vmul.f32 %v1209, %v1208
          %v1212 = vadd.f32 %v1180, %v1210
          %v1213 = vadd.f32 %v1181, %v1211
          %s1214 = sld [smem:[#allocation6 + $0x54]]
          %v1215 = vld [vmem:[%s664 + $0x5] sm:$0xff]
          %v1216 = vld [vmem:[%s664 + $0xd] sm:$0xff]
          %v1217 = vstv %s1214
          %v1218 = vmul.f32 %v1217, %v1215
          %v1219 = vmul.f32 %v1217, %v1216
          %v1220 = vadd.f32 %v1188, %v1218
          %v1221 = vadd.f32 %v1189, %v1219
          %s1222 = sld [smem:[#allocation6 + $0x5b]]
          %v1223 = vld [vmem:[%s664 + $0x6] sm:$0xff]
          %v1224 = vld [vmem:[%s664 + $0xe] sm:$0xff]
          %v1225 = vstv %s1222
          %v1226 = vmul.f32 %v1225, %v1223
          %v1227 = vmul.f32 %v1225, %v1224
          %v1228 = vadd.f32 %v1196, %v1226
          %v1229 = vadd.f32 %v1197, %v1227
          %s1230 = sld [smem:[#allocation6 + $0x32]]
          %v1231 = vld [vmem:[%s683] sm:$0xff]
          %v1232 = vld [vmem:[%s683 + $0x8] sm:$0xff]
          %v1233 = vstv %s1230
          %v1234 = vmul.f32 %v1233, %v1231
          %v1235 = vmul.f32 %v1233, %v1232
          %v1236 = vadd.f32 %v1204, %v1234
          %v1237 = vadd.f32 %v1205, %v1235
          %s1238 = sld [smem:[#allocation6 + $0x39]]
          %v1239 = vld [vmem:[%s683 + $0x1] sm:$0xff]
          %v1240 = vld [vmem:[%s683 + $0x9] sm:$0xff]
          %v1241 = vstv %s1238
          %v1242 = vmul.f32 %v1241, %v1239
          %v1243 = vmul.f32 %v1241, %v1240
          %v1244 = vadd.f32 %v1212, %v1242
          %v1245 = vadd.f32 %v1213, %v1243
          %s1246 = sld [smem:[#allocation6 + $0x40]]
          %v1247 = vld [vmem:[%s683 + $0x2] sm:$0xff]
          %v1248 = vld [vmem:[%s683 + $0xa] sm:$0xff]
          %v1249 = vstv %s1246
          %v1250 = vmul.f32 %v1249, %v1247
          %v1251 = vmul.f32 %v1249, %v1248
          %v1252 = vadd.f32 %v1220, %v1250
          %v1253 = vadd.f32 %v1221, %v1251
          %s1254 = sld [smem:[#allocation6 + $0x47]]
          %v1255 = vld [vmem:[%s683 + $0x3] sm:$0xff]
          %v1256 = vld [vmem:[%s683 + $0xb] sm:$0xff]
          %v1257 = vstv %s1254
          %v1258 = vmul.f32 %v1257, %v1255
          %v1259 = vmul.f32 %v1257, %v1256
          %v1260 = vadd.f32 %v1228, %v1258
          %v1261 = vadd.f32 %v1229, %v1259
          %s1262 = sld [smem:[#allocation6 + $0x4e]]
          %v1263 = vld [vmem:[%s683 + $0x4] sm:$0xff]
          %v1264 = vld [vmem:[%s683 + $0xc] sm:$0xff]
          %v1265 = vstv %s1262
          %v1266 = vmul.f32 %v1265, %v1263
          %v1267 = vmul.f32 %v1265, %v1264
          %v1268 = vadd.f32 %v1236, %v1266
          %v1269 = vadd.f32 %v1237, %v1267
          %s1270 = sld [smem:[#allocation6 + $0x55]]
          %v1271 = vld [vmem:[%s683 + $0x5] sm:$0xff]
          %v1272 = vld [vmem:[%s683 + $0xd] sm:$0xff]
          %v1273 = vstv %s1270
          %v1274 = vmul.f32 %v1273, %v1271
          %v1275 = vmul.f32 %v1273, %v1272
          %v1276 = vadd.f32 %v1244, %v1274
          %v1277 = vadd.f32 %v1245, %v1275
          %s1278 = sld [smem:[#allocation6 + $0x5c]]
          %v1279 = vld [vmem:[%s683 + $0x6] sm:$0xff]
          %v1280 = vld [vmem:[%s683 + $0xe] sm:$0xff]
          %v1281 = vstv %s1278
          %v1282 = vmul.f32 %v1281, %v1279
          %v1283 = vmul.f32 %v1281, %v1280
          %v1284 = vadd.f32 %v1252, %v1282
          %v1285 = vadd.f32 %v1253, %v1283
          %s1286 = sld [smem:[#allocation6 + $0x33]]
          %v1287 = vld [vmem:[%s702] sm:$0xff]
          %v1288 = vld [vmem:[%s702 + $0x8] sm:$0xff]
          %v1289 = vstv %s1286
          %v1290 = vmul.f32 %v1289, %v1287
          %v1291 = vmul.f32 %v1289, %v1288
          %v1292 = vadd.f32 %v1260, %v1290
          %v1293 = vadd.f32 %v1261, %v1291
          %s1294 = sld [smem:[#allocation6 + $0x3a]]
          %v1295 = vld [vmem:[%s702 + $0x1] sm:$0xff]
          %v1296 = vld [vmem:[%s702 + $0x9] sm:$0xff]
          %v1297 = vstv %s1294
          %v1298 = vmul.f32 %v1297, %v1295
          %v1299 = vmul.f32 %v1297, %v1296
          %v1300 = vadd.f32 %v1268, %v1298
          %v1301 = vadd.f32 %v1269, %v1299
          %s1302 = sld [smem:[#allocation6 + $0x41]]
          %v1303 = vld [vmem:[%s702 + $0x2] sm:$0xff]
          %v1304 = vld [vmem:[%s702 + $0xa] sm:$0xff]
          %v1305 = vstv %s1302
          %v1306 = vmul.f32 %v1305, %v1303
          %v1307 = vmul.f32 %v1305, %v1304
          %v1308 = vadd.f32 %v1276, %v1306
          %v1309 = vadd.f32 %v1277, %v1307
          %s1310 = sld [smem:[#allocation6 + $0x48]]
          %v1311 = vld [vmem:[%s702 + $0x3] sm:$0xff]
          %v1312 = vld [vmem:[%s702 + $0xb] sm:$0xff]
          %v1313 = vstv %s1310
          %v1314 = vmul.f32 %v1313, %v1311
          %v1315 = vmul.f32 %v1313, %v1312
          %v1316 = vadd.f32 %v1284, %v1314
          %v1317 = vadd.f32 %v1285, %v1315
          %s1318 = sld [smem:[#allocation6 + $0x4f]]
          %v1319 = vld [vmem:[%s702 + $0x4] sm:$0xff]
          %v1320 = vld [vmem:[%s702 + $0xc] sm:$0xff]
          %v1321 = vstv %s1318
          %v1322 = vmul.f32 %v1321, %v1319
          %v1323 = vmul.f32 %v1321, %v1320
          %v1324 = vadd.f32 %v1292, %v1322
          %v1325 = vadd.f32 %v1293, %v1323
          %s1326 = sld [smem:[#allocation6 + $0x56]]
          %v1327 = vld [vmem:[%s702 + $0x5] sm:$0xff]
          %v1328 = vld [vmem:[%s702 + $0xd] sm:$0xff]
          %v1329 = vstv %s1326
          %v1330 = vmul.f32 %v1329, %v1327
          %v1331 = vmul.f32 %v1329, %v1328
          %v1332 = vadd.f32 %v1300, %v1330
          %v1333 = vadd.f32 %v1301, %v1331
          %s1334 = sld [smem:[#allocation6 + $0x5d]]
          %v1335 = vld [vmem:[%s702 + $0x6] sm:$0xff]
          %v1336 = vld [vmem:[%s702 + $0xe] sm:$0xff]
          %v1337 = vstv %s1334
          %v1338 = vmul.f32 %v1337, %v1335
          %v1339 = vmul.f32 %v1337, %v1336
          %v1340 = vadd.f32 %v1308, %v1338
          %v1341 = vadd.f32 %v1309, %v1339
          %s1342 = sld [smem:[#allocation6 + $0x34]]
          %v1343 = vld [vmem:[%s721] sm:$0xff]
          %v1344 = vld [vmem:[%s721 + $0x8] sm:$0xff]
          %v1345 = vstv %s1342
          %v1346 = vmul.f32 %v1345, %v1343
          %v1347 = vmul.f32 %v1345, %v1344
          %v1348 = vadd.f32 %v1316, %v1346
          %v1349 = vadd.f32 %v1317, %v1347
          %s1350 = sld [smem:[#allocation6 + $0x3b]]
          %v1351 = vld [vmem:[%s721 + $0x1] sm:$0xff]
          %v1352 = vld [vmem:[%s721 + $0x9] sm:$0xff]
          %v1353 = vstv %s1350
          %v1354 = vmul.f32 %v1353, %v1351
          %v1355 = vmul.f32 %v1353, %v1352
          %v1356 = vadd.f32 %v1324, %v1354
          %v1357 = vadd.f32 %v1325, %v1355
          %s1358 = sld [smem:[#allocation6 + $0x42]]
          %v1359 = vld [vmem:[%s721 + $0x2] sm:$0xff]
          %v1360 = vld [vmem:[%s721 + $0xa] sm:$0xff]
          %v1361 = vstv %s1358
          %v1362 = vmul.f32 %v1361, %v1359
          %v1363 = vmul.f32 %v1361, %v1360
          %v1364 = vadd.f32 %v1332, %v1362
          %v1365 = vadd.f32 %v1333, %v1363
          %s1366 = sld [smem:[#allocation6 + $0x49]]
          %v1367 = vld [vmem:[%s721 + $0x3] sm:$0xff]
          %v1368 = vld [vmem:[%s721 + $0xb] sm:$0xff]
          %v1369 = vstv %s1366
          %v1370 = vmul.f32 %v1369, %v1367
          %v1371 = vmul.f32 %v1369, %v1368
          %v1372 = vadd.f32 %v1340, %v1370
          %v1373 = vadd.f32 %v1341, %v1371
          %s1374 = sld [smem:[#allocation6 + $0x50]]
          %v1375 = vld [vmem:[%s721 + $0x4] sm:$0xff]
          %v1376 = vld [vmem:[%s721 + $0xc] sm:$0xff]
          %v1377 = vstv %s1374
          %v1378 = vmul.f32 %v1377, %v1375
          %v1379 = vmul.f32 %v1377, %v1376
          %v1380 = vadd.f32 %v1348, %v1378
          %v1381 = vadd.f32 %v1349, %v1379
          %s1382 = sld [smem:[#allocation6 + $0x57]]
          %v1383 = vld [vmem:[%s721 + $0x5] sm:$0xff]
          %v1384 = vld [vmem:[%s721 + $0xd] sm:$0xff]
          %v1385 = vstv %s1382
          %v1386 = vmul.f32 %v1385, %v1383
          %v1387 = vmul.f32 %v1385, %v1384
          %v1388 = vadd.f32 %v1356, %v1386
          %v1389 = vadd.f32 %v1357, %v1387
          %s1390 = sld [smem:[#allocation6 + $0x5e]]
          %v1391 = vld [vmem:[%s721 + $0x6] sm:$0xff]
          %v1392 = vld [vmem:[%s721 + $0xe] sm:$0xff]
          %v1393 = vstv %s1390
          %v1394 = vmul.f32 %v1393, %v1391
          %v1395 = vmul.f32 %v1393, %v1392
          %v1396 = vadd.f32 %v1364, %v1394
          %v1397 = vadd.f32 %v1365, %v1395
          %s1398 = sld [smem:[#allocation6 + $0x35]]
          %v1399 = vld [vmem:[%s740] sm:$0xff]
          %v1400 = vld [vmem:[%s740 + $0x8] sm:$0xff]
          %v1401 = vstv %s1398
          %v1402 = vmul.f32 %v1401, %v1399
          %v1403 = vmul.f32 %v1401, %v1400
          %v1404 = vadd.f32 %v1372, %v1402
          %v1405 = vadd.f32 %v1373, %v1403
          %s1406 = sld [smem:[#allocation6 + $0x3c]]
          %v1407 = vld [vmem:[%s740 + $0x1] sm:$0xff]
          %v1408 = vld [vmem:[%s740 + $0x9] sm:$0xff]
          %v1409 = vstv %s1406
          %v1410 = vmul.f32 %v1409, %v1407
          %v1411 = vmul.f32 %v1409, %v1408
          %v1412 = vadd.f32 %v1380, %v1410
          %v1413 = vadd.f32 %v1381, %v1411
          %s1414 = sld [smem:[#allocation6 + $0x43]]
          %v1415 = vld [vmem:[%s740 + $0x2] sm:$0xff]
          %v1416 = vld [vmem:[%s740 + $0xa] sm:$0xff]
          %v1417 = vstv %s1414
          %v1418 = vmul.f32 %v1417, %v1415
          %v1419 = vmul.f32 %v1417, %v1416
          %v1420 = vadd.f32 %v1388, %v1418
          %v1421 = vadd.f32 %v1389, %v1419
          %s1422 = sld [smem:[#allocation6 + $0x4a]]
          %v1423 = vld [vmem:[%s740 + $0x3] sm:$0xff]
          %v1424 = vld [vmem:[%s740 + $0xb] sm:$0xff]
          %v1425 = vstv %s1422
          %v1426 = vmul.f32 %v1425, %v1423
          %v1427 = vmul.f32 %v1425, %v1424
          %v1428 = vadd.f32 %v1396, %v1426
          %v1429 = vadd.f32 %v1397, %v1427
          %s1430 = sld [smem:[#allocation6 + $0x51]]
          %v1431 = vld [vmem:[%s740 + $0x4] sm:$0xff]
          %v1432 = vld [vmem:[%s740 + $0xc] sm:$0xff]
          %v1433 = vstv %s1430
          %v1434 = vmul.f32 %v1433, %v1431
          %v1435 = vmul.f32 %v1433, %v1432
          %v1436 = vadd.f32 %v1404, %v1434
          %v1437 = vadd.f32 %v1405, %v1435
          %s1438 = sld [smem:[#allocation6 + $0x58]]
          %v1439 = vld [vmem:[%s740 + $0x5] sm:$0xff]
          %v1440 = vld [vmem:[%s740 + $0xd] sm:$0xff]
          %v1441 = vstv %s1438
          %v1442 = vmul.f32 %v1441, %v1439
          %v1443 = vmul.f32 %v1441, %v1440
          %v1444 = vadd.f32 %v1412, %v1442
          %v1445 = vadd.f32 %v1413, %v1443
          %s1446 = sld [smem:[#allocation6 + $0x5f]]
          %v1447 = vld [vmem:[%s740 + $0x6] sm:$0xff]
          %v1448 = vld [vmem:[%s740 + $0xe] sm:$0xff]
          %v1449 = vstv %s1446
          %v1450 = vmul.f32 %v1449, %v1447
          %v1451 = vmul.f32 %v1449, %v1448
          %v1452 = vadd.f32 %v1420, %v1450
          %v1453 = vadd.f32 %v1421, %v1451
          %s1454 = sld [smem:[#allocation6 + $0x36]]
          %v1455 = vld [vmem:[%s759] sm:$0xff]
          %v1456 = vld [vmem:[%s759 + $0x8] sm:$0xff]
          %v1457 = vstv %s1454
          %v1458 = vmul.f32 %v1457, %v1455
          %v1459 = vmul.f32 %v1457, %v1456
          %v1460 = vadd.f32 %v1428, %v1458
          %v1461 = vadd.f32 %v1429, %v1459
          %s1462 = sld [smem:[#allocation6 + $0x3d]]
          %v1463 = vld [vmem:[%s759 + $0x1] sm:$0xff]
          %v1464 = vld [vmem:[%s759 + $0x9] sm:$0xff]
          %v1465 = vstv %s1462
          %v1466 = vmul.f32 %v1465, %v1463
          %v1467 = vmul.f32 %v1465, %v1464
          %v1468 = vadd.f32 %v1436, %v1466
          %v1469 = vadd.f32 %v1437, %v1467
          %s1470 = sld [smem:[#allocation6 + $0x44]]
          %v1471 = vld [vmem:[%s759 + $0x2] sm:$0xff]
          %v1472 = vld [vmem:[%s759 + $0xa] sm:$0xff]
          %v1473 = vstv %s1470
          %v1474 = vmul.f32 %v1473, %v1471
          %v1475 = vmul.f32 %v1473, %v1472
          %v1476 = vadd.f32 %v1444, %v1474
          %v1477 = vadd.f32 %v1445, %v1475
          %s1478 = sld [smem:[#allocation6 + $0x4b]]
          %v1479 = vld [vmem:[%s759 + $0x3] sm:$0xff]
          %v1480 = vld [vmem:[%s759 + $0xb] sm:$0xff]
          %v1481 = vstv %s1478
          %v1482 = vmul.f32 %v1481, %v1479
          %v1483 = vmul.f32 %v1481, %v1480
          %v1484 = vadd.f32 %v1452, %v1482
          %v1485 = vadd.f32 %v1453, %v1483
          %s1486 = sld [smem:[#allocation6 + $0x52]]
          %v1487 = vld [vmem:[%s759 + $0x4] sm:$0xff]
          %v1488 = vld [vmem:[%s759 + $0xc] sm:$0xff]
          %v1489 = vstv %s1486
          %v1490 = vmul.f32 %v1489, %v1487
          %v1491 = vmul.f32 %v1489, %v1488
          %v1492 = vadd.f32 %v1460, %v1490
          %v1493 = vadd.f32 %v1461, %v1491
          %s1494 = sld [smem:[#allocation6 + $0x59]]
          %v1495 = vld [vmem:[%s759 + $0x5] sm:$0xff]
          %v1496 = vld [vmem:[%s759 + $0xd] sm:$0xff]
          %v1497 = vstv %s1494
          %v1498 = vmul.f32 %v1497, %v1495
          %v1499 = vmul.f32 %v1497, %v1496
          %v1500 = vadd.f32 %v1468, %v1498
          %v1501 = vadd.f32 %v1469, %v1499
          %s1502 = sld [smem:[#allocation6 + $0x60]]
          %v1503 = vld [vmem:[%s759 + $0x6] sm:$0xff]
          %v1504 = vld [vmem:[%s759 + $0xe] sm:$0xff]
          %v1505 = vstv %s1502
          %v1506 = vmul.f32 %v1505, %v1503
          %v1507 = vmul.f32 %v1505, %v1504
          %v1508 = vadd.f32 %v1476, %v1506
          %v1509 = vadd.f32 %v1477, %v1507
          %s1510 = sld [smem:[#allocation6 + $0x37]]
          %v1511 = vld [vmem:[%s778] sm:$0xff]
          %v1512 = vld [vmem:[%s778 + $0x8] sm:$0xff]
          %v1513 = vstv %s1510
          %v1514 = vmul.f32 %v1513, %v1511
          %v1515 = vmul.f32 %v1513, %v1512
          %v1516 = vadd.f32 %v1484, %v1514
          %v1517 = vadd.f32 %v1485, %v1515
          %s1518 = sld [smem:[#allocation6 + $0x3e]]
          %v1519 = vld [vmem:[%s778 + $0x1] sm:$0xff]
          %v1520 = vld [vmem:[%s778 + $0x9] sm:$0xff]
          %v1521 = vstv %s1518
          %v1522 = vmul.f32 %v1521, %v1519
          %v1523 = vmul.f32 %v1521, %v1520
          %v1524 = vadd.f32 %v1492, %v1522
          %v1525 = vadd.f32 %v1493, %v1523
          %s1526 = sld [smem:[#allocation6 + $0x45]]
          %v1527 = vld [vmem:[%s778 + $0x2] sm:$0xff]
          %v1528 = vld [vmem:[%s778 + $0xa] sm:$0xff]
          %v1529 = vstv %s1526
          %v1530 = vmul.f32 %v1529, %v1527
          %v1531 = vmul.f32 %v1529, %v1528
          %v1532 = vadd.f32 %v1500, %v1530
          %v1533 = vadd.f32 %v1501, %v1531
          %s1534 = sld [smem:[#allocation6 + $0x4c]]
          %v1535 = vld [vmem:[%s778 + $0x3] sm:$0xff]
          %v1536 = vld [vmem:[%s778 + $0xb] sm:$0xff]
          %v1537 = vstv %s1534
          %v1538 = vmul.f32 %v1537, %v1535
          %v1539 = vmul.f32 %v1537, %v1536
          %v1540 = vadd.f32 %v1508, %v1538
          %v1541 = vadd.f32 %v1509, %v1539
          %s1542 = sld [smem:[#allocation6 + $0x53]]
          %v1543 = vld [vmem:[%s778 + $0x4] sm:$0xff]
          %v1544 = vld [vmem:[%s778 + $0xc] sm:$0xff]
          %v1545 = vstv %s1542
          %v1546 = vmul.f32 %v1545, %v1543
          %v1547 = vmul.f32 %v1545, %v1544
          %v1548 = vadd.f32 %v1516, %v1546
          %v1549 = vadd.f32 %v1517, %v1547
          %s1550 = sld [smem:[#allocation6 + $0x5a]]
          %v1551 = vld [vmem:[%s778 + $0x5] sm:$0xff]
          %v1552 = vld [vmem:[%s778 + $0xd] sm:$0xff]
          %v1553 = vstv %s1550
          %v1554 = vmul.f32 %v1553, %v1551
          %v1555 = vmul.f32 %v1553, %v1552
          %v1556 = vadd.f32 %v1524, %v1554
          %v1557 = vadd.f32 %v1525, %v1555
          %s1558 = sld [smem:[#allocation6 + $0x61]]
          %v1559 = vld [vmem:[%s778 + $0x6] sm:$0xff]
          %v1560 = vld [vmem:[%s778 + $0xe] sm:$0xff]
          %v1561 = vstv %s1558
          %v1562 = vmul.f32 %v1561, %v1559
          %v1563 = vmul.f32 %v1561, %v1560
          %v1564 = vadd.f32 %v1532, %v1562
          %v1565 = vadd.f32 %v1533, %v1563
          %v1566 = vadd.f32 %v1556, %v1564
          %v1567 = vadd.f32 %v1557, %v1565
          %v1568 = vadd.f32 %v1540, %v1548
          %v1569 = vadd.f32 %v1541, %v1549
          %v1570 = vadd.f32 %v1566, %v1568
          %v1571 = vadd.f32 %v1567, %v1569
          %v1572 = vxor.u32 %v1570, 2147483648
          %v1573 = vxor.u32 %v1571, 2147483648
          %v1574 = vmul.f32 %v1572, 1.442695
          %v1575 = vpow.pop %v1574
          %v1576 = vmul.f32 %v1573, 1.442695
          %v1577 = vpow.pop %v1576
          %v1578 = vadd.f32 %v1575, 1.0
          %v1579 = vadd.f32 %v1577, 1.0
          %v1580 = vrcp.pop %v1578
          %v1581 = vmul.f32 1.0, %v1580
          %v1582 = vrcp.pop %v1579
          %v1583 = vmul.f32 1.0, %v1582
          %1584 = vst.msk [vmem:[%s187] sm:$0xff] %vm542, %v1581
          %1585 = vst.msk [vmem:[%s187 + $0x8] sm:$0xff] %vm542, %v1583
        $region44: #{tpu_custom_call.1} parent=27 // pred_fallthru
          _
        %s1586 = sand.u32 %s89, 1
        %s1587 = scalar_lea.sflag [#allocation8], %s1586
        %s1588 = sand.u32 %s89, 1
        %s1589 = smul.addr %s1588, 16
        %s1590 = scalar_lea.vmem [#allocation11], %s1589
        // Predicated region
        $region45: #{tpu_custom_call.1} parent=27 // pred_check
          %p1591 = pneg %p99
        $region46: #{tpu_custom_call.1} parent=27 // pred_check_branch
          %1593 = sbr.rel (%p1591) target = $region48
        $region47: #{tpu_custom_call.1} parent=27 // pred_region
          %s1595 = ssub.s32 256, 256
          %1596 = vsyncadd %s1587, %s1595
          %s1597 = smul.addr %s24, 2
          %s1598 = smul.addr %s1597, 128
          %s1599 = scalar_lea.hbm %s2, %s1598
          %s1600 = sshll.u32 %s1590, 4
          %s1601 = int_to_ptr.vmem [resolvable:$true] %s1600
          %1606 = dma.vmem_to_hbm [thread:$0]  %s1601, 256, %s1599, %s1587, 128, 128, 8
        $region48: #{tpu_custom_call.1} parent=27 // pred_fallthru
          _
      $region28: #{tpu_custom_call.1} parent=5 // pred_fallthru
        _
      %p1607 = scmp.le.s32.totalorder 2, %s15
      // Predicated region
      $region49: #{tpu_custom_call.1} parent=5 // pred_check
        %p1608 = pneg %p1607
      $region50: #{tpu_custom_call.1} parent=5 // pred_check_branch
        %1610 = sbr.rel (%p1608) target = $region52
      $region51: #{tpu_custom_call.1} parent=5 // pred_region
        %s1611 = ssub.s32 %s15, 2
        // Predicated region
        $region53: #{tpu_custom_call.1} parent=51 // pred_check
          %p1612 = pneg %p105
        $region54: #{tpu_custom_call.1} parent=51 // pred_check_branch
          %1614 = sbr.rel (%p1612) target = $region56
        $region55: #{tpu_custom_call.1} parent=51 // pred_region
          %s1615 = sand.u32 %s90, 1
          %s1616 = scalar_lea.sflag [#allocation8], %s1615
          %s1617 = sand.u32 %s90, 1
          %s1618 = smul.addr %s1617, 16
          %s1619 = scalar_lea.vmem [#allocation11], %s1618
          %1620 = dma.done %s1616, 256
        $region56: #{tpu_custom_call.1} parent=51 // pred_fallthru
          _
      $region52: #{tpu_custom_call.1} parent=5 // pred_fallthru
        _
    $region6: #{tpu_custom_call.1} parent=1 // loop_footer
      %s19 = sadd.s32 1, %s15
    $region7: #{tpu_custom_call.1} parent=1 // loop_footer_branch
      %14 = sbr.rel target = $region3
    $region8: #{tpu_custom_call.1} parent=1 // loop_exit
      _
    %1621 = vsyncpa [#allocation7], 1
    %s1622 = scalar_lea.sflag [#allocation7], 1
    %1623 = vsyncpa %s1622, 1
    %1624 = vsyncpa [#allocation8], 1
    %s1625 = scalar_lea.sflag [#allocation8], 1
    %1626 = vsyncpa %s1625, 1
    %1627 = vsyncpa [#allocation9], 1
    %s1628 = scalar_lea.sflag [#allocation9], 1
    %1629 = vsyncpa %s1628, 1

</llo_original>
